<compile_context>
chip_gen: v6e
topology: v6e:2x2x1
jax: 0.10.0
libtpu: 0.0.40
codegen_flags: <defaults>
</compile_context>

<pallas_src>
import math
import functools

import jax
import jax.numpy as jnp
import numpy as np
from jax.experimental import pallas as pl
from jax.experimental.pallas import tpu as pltpu

N_CLASSES = 2
N_DIM = 3
N_STEPS = 200
EMB = 256
HID = 512
LN_EPS = 1e-5


# ----------------------------------------------------------------------------
# Pallas kernel: first LayerNorm + 2 ResidualBlocks + output head.
# (Embedding MLPs + t/y slice of the first Linear are folded into the gathered
#  tf/yf rows; the x slice (K=3) is done with VPU broadcast-FMAs.)
# ----------------------------------------------------------------------------
def _ddpm_kernel(x_ref, tf_ref, yf_ref,
                 w1x_ref, g1_ref, be1_ref,
                 wr1a_ref, br1a_ref, gr1_ref, ber1_ref, wr1b_ref, br1b_ref,
                 wr2a_ref, br2a_ref, gr2_ref, ber2_ref, wr2b_ref, br2b_ref,
                 wo_ref, bo_ref,
                 o_ref):
    f32 = jnp.float32
    bf16 = jnp.bfloat16

    def layer_norm(h, g_ref, b_ref):
        mu = jnp.mean(h, axis=-1, keepdims=True)
        var = jnp.mean((h - mu) * (h - mu), axis=-1, keepdims=True)
        return (h - mu) * jax.lax.rsqrt(var + LN_EPS) * g_ref[...] + b_ref[...]

    def silu(h):
        return h * jax.nn.sigmoid(h)

    def bf16_dot(h, w_ref, b_ref):
        # bf16 weights streamed from HBM, bf16 MXU inputs, f32 accumulation.
        return jnp.dot(h.astype(bf16), w_ref[...],
                       preferred_element_type=f32) + b_ref[...]

    # --- first Linear(n_dim + 512, 512) ---------------------------------------
    # tf/yf already contain (t_embed @ W1_t) and (y_embed @ W1_y + b1); the x
    # part (K = n_dim = 3) is three broadcast-FMAs on the VPU.
    xv = x_ref[...]          # [B, n_dim] f32
    w1x = w1x_ref[...]       # [n_dim, HID] f32
    h = tf_ref[...] + yf_ref[...]
    for i in range(N_DIM):
        h = h + xv[:, i:i + 1] * w1x[i:i + 1, :]
    h = layer_norm(h, g1_ref, be1_ref)

    # --- ResidualBlock 1: x + Linear -> LayerNorm -> SiLU -> Linear ----------
    r = bf16_dot(h, wr1a_ref, br1a_ref)
    r = silu(layer_norm(r, gr1_ref, ber1_ref))
    r = bf16_dot(r, wr1b_ref, br1b_ref)
    h = h + r

    # --- ResidualBlock 2 -------------------------------------------------------
    r = bf16_dot(h, wr2a_ref, br2a_ref)
    r = silu(layer_norm(r, gr2_ref, ber2_ref))
    r = bf16_dot(r, wr2b_ref, br2b_ref)
    h = h + r

    # --- output head Linear(512, n_dim) (tiny; keep f32) -----------------------
    o_ref[...] = (jnp.dot(h, wo_ref[...], preferred_element_type=f32)
                  + bo_ref[...]).astype(o_ref.dtype)


# ----------------------------------------------------------------------------
# Offline constant folding of the embedding MLPs (done once, f32, exact).
# ----------------------------------------------------------------------------
def prepare_kernel_params(p):
    bf16 = jnp.bfloat16
    # time_embed / class_embed MLPs applied to the full (tiny) tables,
    # then pre-multiplied by the corresponding slices of the first Linear.
    t_e = jnp.maximum(p["time_table"] @ p["wt1"] + p["bt1"], 0.0) @ p["wt2"] + p["bt2"]
    y_e = jnp.maximum(p["class_table"] @ p["wy1"] + p["by1"], 0.0) @ p["wy2"] + p["by2"]
    return {
        "time_fold": t_e @ p["w1t"],                 # [n_steps, HID]       f32
        "class_fold": y_e @ p["w1y"] + p["b1"],      # [n_classes+1, HID]   f32 (+b1)
        "w1x": p["w1x"],                             # [n_dim, HID]         f32 (tiny)
        "g1": p["g1"], "be1": p["be1"],
        "wr1a": p["wr1a"].astype(bf16), "br1a": p["br1a"],
        "gr1": p["gr1"], "ber1": p["ber1"],
        "wr1b": p["wr1b"].astype(bf16), "br1b": p["br1b"],
        "wr2a": p["wr2a"].astype(bf16), "br2a": p["br2a"],
        "gr2": p["gr2"], "ber2": p["ber2"],
        "wr2b": p["wr2b"].astype(bf16), "br2b": p["br2b"],
        "wo": p["wo"], "bo": p["bo"],
    }


# ----------------------------------------------------------------------------
# Forward wrapper
# ----------------------------------------------------------------------------
@jax.jit
def conditional_ddpm_forward(kp, x, t, y):
    """x: [B, n_dim] f32, t: [B] int32 in [0, n_steps), y: [B] int32 in [0, n_classes]."""
    # Glue: gathers on the folded embedding tables (nn.Embedding + folded MLPs).
    tf = kp["time_fold"][t]      # [B, HID]
    yf = kp["class_fold"][y]     # [B, HID]

    ordered = [
        x, tf, yf,
        kp["w1x"], kp["g1"], kp["be1"],
        kp["wr1a"], kp["br1a"], kp["gr1"], kp["ber1"], kp["wr1b"], kp["br1b"],
        kp["wr2a"], kp["br2a"], kp["gr2"], kp["ber2"], kp["wr2b"], kp["br2b"],
        kp["wo"], kp["bo"],
    ]

    B = x.shape[0]
    vmem_spec = pl.BlockSpec(memory_space=pltpu.MemorySpace.VMEM)
    return pl.pallas_call(
        _ddpm_kernel,
        in_specs=[vmem_spec] * len(ordered),
        out_specs=vmem_spec,
        out_shape=jax.ShapeDtypeStruct((B, N_DIM), jnp.float32),
        compiler_params=pltpu.CompilerParams(vmem_limit_bytes=16 << 20),
    )(*ordered)


# ----------------------------------------------------------------------------
# Deterministic parameter init (PyTorch-style shapes; synthetic values).
# The 512x512 residual weights are snapped to bf16-representable values so the
# f32 reference and the bf16-streaming kernel use identical weights.
# ----------------------------------------------------------------------------
def init_params(key):
    ks = iter(jax.random.split(key, 64))

    def linear(kin, kout, quantize=False):
        bound = 1.0 / math.sqrt(kin)
        w = jax.random.uniform(next(ks), (kin, kout), jnp.float32, -bound, bound)
        b = jax.random.uniform(next(ks), (1, kout), jnp.float32, -bound, bound)
        if quantize:
            w = w.astype(jnp.bfloat16).astype(jnp.float32)
        return w, b

    p = {}
    # nn.Embedding tables (default init: N(0, 1))
    p["time_table"] = jax.random.normal(next(ks), (N_STEPS, EMB), jnp.float32)
    p["class_table"] = jax.random.normal(next(ks), (N_CLASSES + 1, EMB), jnp.float32)

    # time_embed: Linear(256,256) -> ReLU -> Linear(256,256)
    p["wt1"], p["bt1"] = linear(EMB, EMB)
    p["wt2"], p["bt2"] = linear(EMB, EMB)
    # class_embed: Linear(256,256) -> ReLU -> Linear(256,256)
    p["wy1"], p["by1"] = linear(EMB, EMB)
    p["wy2"], p["by2"] = linear(EMB, EMB)

    # model[0]: Linear(n_dim + 512, 512) — split into x / t / y parts.
    w_full, p["b1"] = linear(N_DIM + 2 * EMB, HID)
    p["w1x"] = w_full[:N_DIM]
    p["w1t"] = w_full[N_DIM:N_DIM + EMB]
    p["w1y"] = w_full[N_DIM + EMB:]
    # model[1]: LayerNorm(512) — PyTorch default gamma=1, beta=0.
    p["g1"] = jnp.ones((1, HID), jnp.float32)
    p["be1"] = jnp.zeros((1, HID), jnp.float32)

    # ResidualBlock 1 & 2 (weights bf16-representable)
    p["wr1a"], p["br1a"] = linear(HID, HID, quantize=True)
    p["gr1"] = jnp.ones((1, HID), jnp.float32)
    p["ber1"] = jnp.zeros((1, HID), jnp.float32)
    p["wr1b"], p["br1b"] = linear(HID, HID, quantize=True)

    p["wr2a"], p["br2a"] = linear(HID, HID, quantize=True)
    p["gr2"] = jnp.ones((1, HID), jnp.float32)
    p["ber2"] = jnp.zeros((1, HID), jnp.float32)
    p["wr2b"], p["br2b"] = linear(HID, HID, quantize=True)

    # output Linear(512, n_dim)
    p["wo"], p["bo"] = linear(HID, N_DIM)
    return p


# ----------------------------------------------------------------------------
# Pure-JAX reference (mirrors the PyTorch forward exactly) for validation
# ----------------------------------------------------------------------------
def reference_forward(p, x, t, y):
    def ln(h, g, b):
        mu = jnp.mean(h, axis=-1, keepdims=True)
        var = jnp.mean((h - mu) ** 2, axis=-1, keepdims=True)
        return (h - mu) / jnp.sqrt(var + LN_EPS) * g + b

    te = p["time_table"][t]
    te = jnp.maximum(te @ p["wt1"] + p["bt1"], 0.0) @ p["wt2"] + p["bt2"]
    ye = p["class_table"][y]
    ye = jnp.maximum(ye @ p["wy1"] + p["by1"], 0.0) @ p["wy2"] + p["by2"]

    inp = jnp.concatenate([x, te, ye], axis=1)
    w1 = jnp.concatenate([p["w1x"], p["w1t"], p["w1y"]], axis=0)
    h = ln(inp @ w1 + p["b1"], p["g1"], p["be1"])

    r = ln(h @ p["wr1a"] + p["br1a"], p["gr1"], p["ber1"])
    r = r * jax.nn.sigmoid(r)
    h = h + (r @ p["wr1b"] + p["br1b"])

    r = ln(h @ p["wr2a"] + p["br2a"], p["gr2"], p["ber2"])
    r = r * jax.nn.sigmoid(r)
    h = h + (r @ p["wr2b"] + p["br2b"])

    return h @ p["wo"] + p["bo"]


if __name__ == "__main__":
    key = jax.random.PRNGKey(0)
    kparam, kx, kt, ky = jax.random.split(key, 4)

    B = 8
    params = init_params(kparam)
    kernel_params = prepare_kernel_params(params)   # one-time constant folding

    x = jax.random.normal(kx, (B, N_DIM), jnp.float32)
    t = jax.random.randint(kt, (B,), 0, N_STEPS, jnp.int32)
    y = jax.random.randint(ky, (B,), 0, N_CLASSES + 1, jnp.int32)

    out = conditional_ddpm_forward(kernel_params, x, t, y)
    out = jax.block_until_ready(out)

    ref = reference_forward(params, x, t, y)
    # bf16 MXU inputs (weights + activation casts) vs. f32 reference.
    np.testing.assert_allclose(np.asarray(out), np.asarray(ref), rtol=2e-2, atol=2e-2)

    assert out.shape == (B, N_DIM) and out.dtype == jnp.float32
    print("KERNEL_OK")
</pallas_src>

<mosaic_0001>
module attributes {stable_mosaic.version = 11 : i64} {
  func.func @_ddpm_kernel(%arg0: memref<8x3xf32, #tpu.memory_space<vmem>>, %arg1: memref<8x512xf32, #tpu.memory_space<vmem>>, %arg2: memref<8x512xf32, #tpu.memory_space<vmem>>, %arg3: memref<3x512xf32, #tpu.memory_space<vmem>>, %arg4: memref<1x512xf32, #tpu.memory_space<vmem>>, %arg5: memref<1x512xf32, #tpu.memory_space<vmem>>, %arg6: memref<512x512xbf16, #tpu.memory_space<vmem>>, %arg7: memref<1x512xf32, #tpu.memory_space<vmem>>, %arg8: memref<1x512xf32, #tpu.memory_space<vmem>>, %arg9: memref<1x512xf32, #tpu.memory_space<vmem>>, %arg10: memref<512x512xbf16, #tpu.memory_space<vmem>>, %arg11: memref<1x512xf32, #tpu.memory_space<vmem>>, %arg12: memref<512x512xbf16, #tpu.memory_space<vmem>>, %arg13: memref<1x512xf32, #tpu.memory_space<vmem>>, %arg14: memref<1x512xf32, #tpu.memory_space<vmem>>, %arg15: memref<1x512xf32, #tpu.memory_space<vmem>>, %arg16: memref<512x512xbf16, #tpu.memory_space<vmem>>, %arg17: memref<1x512xf32, #tpu.memory_space<vmem>>, %arg18: memref<512x3xf32, #tpu.memory_space<vmem>>, %arg19: memref<1x3xf32, #tpu.memory_space<vmem>>, %arg20: memref<8x3xf32, #tpu.memory_space<vmem>>) attributes {dimension_semantics = [], scalar_prefetch = 0 : i64, scratch_operands = 0 : i64, tpu.core_type = #tpu.core_type<tc>} {
    %c0 = arith.constant 0 : index
    %c0_0 = arith.constant 0 : index
    %0 = vector.load %arg0[%c0, %c0_0] : memref<8x3xf32, #tpu.memory_space<vmem>>, vector<8x3xf32>
    %c0_1 = arith.constant 0 : index
    %c0_2 = arith.constant 0 : index
    %1 = vector.load %arg3[%c0_1, %c0_2] : memref<3x512xf32, #tpu.memory_space<vmem>>, vector<3x512xf32>
    %c0_3 = arith.constant 0 : index
    %c0_4 = arith.constant 0 : index
    %2 = vector.load %arg1[%c0_3, %c0_4] : memref<8x512xf32, #tpu.memory_space<vmem>>, vector<8x512xf32>
    %c0_5 = arith.constant 0 : index
    %c0_6 = arith.constant 0 : index
    %3 = vector.load %arg2[%c0_5, %c0_6] : memref<8x512xf32, #tpu.memory_space<vmem>>, vector<8x512xf32>
    %4 = arith.addf %2, %3 : vector<8x512xf32>
    %5 = vector.extract_strided_slice %0 {offsets = [0, 0], sizes = [8, 1], strides = [1, 1]} : vector<8x3xf32> to vector<8x1xf32>
    %6 = vector.extract_strided_slice %1 {offsets = [0, 0], sizes = [1, 512], strides = [1, 1]} : vector<3x512xf32> to vector<1x512xf32>
    %7 = vector.broadcast %5 : vector<8x1xf32> to vector<8x512xf32>
    %8 = vector.broadcast %6 : vector<1x512xf32> to vector<8x512xf32>
    %9 = arith.mulf %7, %8 : vector<8x512xf32>
    %10 = arith.addf %4, %9 : vector<8x512xf32>
    %11 = vector.extract_strided_slice %0 {offsets = [0, 1], sizes = [8, 1], strides = [1, 1]} : vector<8x3xf32> to vector<8x1xf32>
    %12 = vector.extract_strided_slice %1 {offsets = [1, 0], sizes = [1, 512], strides = [1, 1]} : vector<3x512xf32> to vector<1x512xf32>
    %13 = vector.broadcast %11 : vector<8x1xf32> to vector<8x512xf32>
    %14 = vector.broadcast %12 : vector<1x512xf32> to vector<8x512xf32>
    %15 = arith.mulf %13, %14 : vector<8x512xf32>
    %16 = arith.addf %10, %15 : vector<8x512xf32>
    %17 = vector.extract_strided_slice %0 {offsets = [0, 2], sizes = [8, 1], strides = [1, 1]} : vector<8x3xf32> to vector<8x1xf32>
    %18 = vector.extract_strided_slice %1 {offsets = [2, 0], sizes = [1, 512], strides = [1, 1]} : vector<3x512xf32> to vector<1x512xf32>
    %19 = vector.broadcast %17 : vector<8x1xf32> to vector<8x512xf32>
    %20 = vector.broadcast %18 : vector<1x512xf32> to vector<8x512xf32>
    %21 = arith.mulf %19, %20 : vector<8x512xf32>
    %22 = arith.addf %16, %21 : vector<8x512xf32>
    %cst = arith.constant dense<0.000000e+00> : vector<8xf32>
    %23 = vector.multi_reduction <add>, %22, %cst [1] : vector<8x512xf32> to vector<8xf32>
    %24 = vector.shape_cast %23 : vector<8xf32> to vector<8x1xf32>
    %cst_7 = arith.constant 5.120000e+02 : f32
    %25 = vector.broadcast %cst_7 : f32 to vector<8x1xf32>
    %26 = arith.divf %24, %25 : vector<8x1xf32>
    %27 = vector.broadcast %26 : vector<8x1xf32> to vector<8x512xf32>
    %28 = arith.subf %22, %27 : vector<8x512xf32>
    %29 = vector.broadcast %26 : vector<8x1xf32> to vector<8x512xf32>
    %30 = arith.subf %22, %29 : vector<8x512xf32>
    %31 = arith.mulf %28, %30 : vector<8x512xf32>
    %cst_8 = arith.constant dense<0.000000e+00> : vector<8xf32>
    %32 = vector.multi_reduction <add>, %31, %cst_8 [1] : vector<8x512xf32> to vector<8xf32>
    %33 = vector.shape_cast %32 : vector<8xf32> to vector<8x1xf32>
    %cst_9 = arith.constant 5.120000e+02 : f32
    %34 = vector.broadcast %cst_9 : f32 to vector<8x1xf32>
    %35 = arith.divf %33, %34 : vector<8x1xf32>
    %36 = vector.broadcast %26 : vector<8x1xf32> to vector<8x512xf32>
    %37 = arith.subf %22, %36 : vector<8x512xf32>
    %cst_10 = arith.constant 9.99999974E-6 : f32
    %38 = vector.broadcast %cst_10 : f32 to vector<8x1xf32>
    %39 = arith.addf %35, %38 : vector<8x1xf32>
    %40 = math.rsqrt %39 : vector<8x1xf32>
    %41 = vector.broadcast %40 : vector<8x1xf32> to vector<8x512xf32>
    %42 = arith.mulf %37, %41 : vector<8x512xf32>
    %c0_11 = arith.constant 0 : index
    %c0_12 = arith.constant 0 : index
    %43 = vector.load %arg4[%c0_11, %c0_12] : memref<1x512xf32, #tpu.memory_space<vmem>>, vector<1x512xf32>
    %44 = vector.broadcast %43 : vector<1x512xf32> to vector<8x512xf32>
    %45 = arith.mulf %42, %44 : vector<8x512xf32>
    %c0_13 = arith.constant 0 : index
    %c0_14 = arith.constant 0 : index
    %46 = vector.load %arg5[%c0_13, %c0_14] : memref<1x512xf32, #tpu.memory_space<vmem>>, vector<1x512xf32>
    %47 = vector.broadcast %46 : vector<1x512xf32> to vector<8x512xf32>
    %48 = arith.addf %45, %47 : vector<8x512xf32>
    %49 = arith.truncf %48 : vector<8x512xf32> to vector<8x512xbf16>
    %c0_15 = arith.constant 0 : index
    %c0_16 = arith.constant 0 : index
    %50 = vector.load %arg6[%c0_15, %c0_16] : memref<512x512xbf16, #tpu.memory_space<vmem>>, vector<512x512xbf16>
    %cst_17 = arith.constant dense<0.000000e+00> : vector<8x512xf32>
    %51 = tpu.matmul %49, %50, %cst_17 {dimension_numbers = #tpu.dot_dimension_numbers<[1], [0], [0], [1], [0, 0, 1, 1], [], []>} : vector<8x512xbf16>, vector<512x512xbf16>, vector<8x512xf32> -> vector<8x512xf32>
    %c0_18 = arith.constant 0 : index
    %c0_19 = arith.constant 0 : index
    %52 = vector.load %arg7[%c0_18, %c0_19] : memref<1x512xf32, #tpu.memory_space<vmem>>, vector<1x512xf32>
    %53 = vector.broadcast %52 : vector<1x512xf32> to vector<8x512xf32>
    %54 = arith.addf %51, %53 : vector<8x512xf32>
    %cst_20 = arith.constant dense<0.000000e+00> : vector<8xf32>
    %55 = vector.multi_reduction <add>, %54, %cst_20 [1] : vector<8x512xf32> to vector<8xf32>
    %56 = vector.shape_cast %55 : vector<8xf32> to vector<8x1xf32>
    %cst_21 = arith.constant 5.120000e+02 : f32
    %57 = vector.broadcast %cst_21 : f32 to vector<8x1xf32>
    %58 = arith.divf %56, %57 : vector<8x1xf32>
    %59 = vector.broadcast %58 : vector<8x1xf32> to vector<8x512xf32>
    %60 = arith.subf %54, %59 : vector<8x512xf32>
    %61 = vector.broadcast %58 : vector<8x1xf32> to vector<8x512xf32>
    %62 = arith.subf %54, %61 : vector<8x512xf32>
    %63 = arith.mulf %60, %62 : vector<8x512xf32>
    %cst_22 = arith.constant dense<0.000000e+00> : vector<8xf32>
    %64 = vector.multi_reduction <add>, %63, %cst_22 [1] : vector<8x512xf32> to vector<8xf32>
    %65 = vector.shape_cast %64 : vector<8xf32> to vector<8x1xf32>
    %cst_23 = arith.constant 5.120000e+02 : f32
    %66 = vector.broadcast %cst_23 : f32 to vector<8x1xf32>
    %67 = arith.divf %65, %66 : vector<8x1xf32>
    %68 = vector.broadcast %58 : vector<8x1xf32> to vector<8x512xf32>
    %69 = arith.subf %54, %68 : vector<8x512xf32>
    %cst_24 = arith.constant 9.99999974E-6 : f32
    %70 = vector.broadcast %cst_24 : f32 to vector<8x1xf32>
    %71 = arith.addf %67, %70 : vector<8x1xf32>
    %72 = math.rsqrt %71 : vector<8x1xf32>
    %73 = vector.broadcast %72 : vector<8x1xf32> to vector<8x512xf32>
    %74 = arith.mulf %69, %73 : vector<8x512xf32>
    %c0_25 = arith.constant 0 : index
    %c0_26 = arith.constant 0 : index
    %75 = vector.load %arg8[%c0_25, %c0_26] : memref<1x512xf32, #tpu.memory_space<vmem>>, vector<1x512xf32>
    %76 = vector.broadcast %75 : vector<1x512xf32> to vector<8x512xf32>
    %77 = arith.mulf %74, %76 : vector<8x512xf32>
    %c0_27 = arith.constant 0 : index
    %c0_28 = arith.constant 0 : index
    %78 = vector.load %arg9[%c0_27, %c0_28] : memref<1x512xf32, #tpu.memory_space<vmem>>, vector<1x512xf32>
    %79 = vector.broadcast %78 : vector<1x512xf32> to vector<8x512xf32>
    %80 = arith.addf %77, %79 : vector<8x512xf32>
    %81 = arith.negf %80 : vector<8x512xf32>
    %82 = math.exp %81 : vector<8x512xf32>
    %cst_29 = arith.constant 1.000000e+00 : f32
    %83 = vector.broadcast %cst_29 : f32 to vector<8x512xf32>
    %84 = arith.addf %83, %82 : vector<8x512xf32>
    %85 = arith.divf %83, %84 : vector<8x512xf32>
    %86 = arith.mulf %80, %85 : vector<8x512xf32>
    %87 = arith.truncf %86 : vector<8x512xf32> to vector<8x512xbf16>
    %c0_30 = arith.constant 0 : index
    %c0_31 = arith.constant 0 : index
    %88 = vector.load %arg10[%c0_30, %c0_31] : memref<512x512xbf16, #tpu.memory_space<vmem>>, vector<512x512xbf16>
    %cst_32 = arith.constant dense<0.000000e+00> : vector<8x512xf32>
    %89 = tpu.matmul %87, %88, %cst_32 {dimension_numbers = #tpu.dot_dimension_numbers<[1], [0], [0], [1], [0, 0, 1, 1], [], []>} : vector<8x512xbf16>, vector<512x512xbf16>, vector<8x512xf32> -> vector<8x512xf32>
    %c0_33 = arith.constant 0 : index
    %c0_34 = arith.constant 0 : index
    %90 = vector.load %arg11[%c0_33, %c0_34] : memref<1x512xf32, #tpu.memory_space<vmem>>, vector<1x512xf32>
    %91 = vector.broadcast %90 : vector<1x512xf32> to vector<8x512xf32>
    %92 = arith.addf %89, %91 : vector<8x512xf32>
    %93 = arith.addf %48, %92 : vector<8x512xf32>
    %94 = arith.truncf %93 : vector<8x512xf32> to vector<8x512xbf16>
    %c0_35 = arith.constant 0 : index
    %c0_36 = arith.constant 0 : index
    %95 = vector.load %arg12[%c0_35, %c0_36] : memref<512x512xbf16, #tpu.memory_space<vmem>>, vector<512x512xbf16>
    %cst_37 = arith.constant dense<0.000000e+00> : vector<8x512xf32>
    %96 = tpu.matmul %94, %95, %cst_37 {dimension_numbers = #tpu.dot_dimension_numbers<[1], [0], [0], [1], [0, 0, 1, 1], [], []>} : vector<8x512xbf16>, vector<512x512xbf16>, vector<8x512xf32> -> vector<8x512xf32>
    %c0_38 = arith.constant 0 : index
    %c0_39 = arith.constant 0 : index
    %97 = vector.load %arg13[%c0_38, %c0_39] : memref<1x512xf32, #tpu.memory_space<vmem>>, vector<1x512xf32>
    %98 = vector.broadcast %97 : vector<1x512xf32> to vector<8x512xf32>
    %99 = arith.addf %96, %98 : vector<8x512xf32>
    %cst_40 = arith.constant dense<0.000000e+00> : vector<8xf32>
    %100 = vector.multi_reduction <add>, %99, %cst_40 [1] : vector<8x512xf32> to vector<8xf32>
    %101 = vector.shape_cast %100 : vector<8xf32> to vector<8x1xf32>
    %cst_41 = arith.constant 5.120000e+02 : f32
    %102 = vector.broadcast %cst_41 : f32 to vector<8x1xf32>
    %103 = arith.divf %101, %102 : vector<8x1xf32>
    %104 = vector.broadcast %103 : vector<8x1xf32> to vector<8x512xf32>
    %105 = arith.subf %99, %104 : vector<8x512xf32>
    %106 = vector.broadcast %103 : vector<8x1xf32> to vector<8x512xf32>
    %107 = arith.subf %99, %106 : vector<8x512xf32>
    %108 = arith.mulf %105, %107 : vector<8x512xf32>
    %cst_42 = arith.constant dense<0.000000e+00> : vector<8xf32>
    %109 = vector.multi_reduction <add>, %108, %cst_42 [1] : vector<8x512xf32> to vector<8xf32>
    %110 = vector.shape_cast %109 : vector<8xf32> to vector<8x1xf32>
    %cst_43 = arith.constant 5.120000e+02 : f32
    %111 = vector.broadcast %cst_43 : f32 to vector<8x1xf32>
    %112 = arith.divf %110, %111 : vector<8x1xf32>
    %113 = vector.broadcast %103 : vector<8x1xf32> to vector<8x512xf32>
    %114 = arith.subf %99, %113 : vector<8x512xf32>
    %cst_44 = arith.constant 9.99999974E-6 : f32
    %115 = vector.broadcast %cst_44 : f32 to vector<8x1xf32>
    %116 = arith.addf %112, %115 : vector<8x1xf32>
    %117 = math.rsqrt %116 : vector<8x1xf32>
    %118 = vector.broadcast %117 : vector<8x1xf32> to vector<8x512xf32>
    %119 = arith.mulf %114, %118 : vector<8x512xf32>
    %c0_45 = arith.constant 0 : index
    %c0_46 = arith.constant 0 : index
    %120 = vector.load %arg14[%c0_45, %c0_46] : memref<1x512xf32, #tpu.memory_space<vmem>>, vector<1x512xf32>
    %121 = vector.broadcast %120 : vector<1x512xf32> to vector<8x512xf32>
    %122 = arith.mulf %119, %121 : vector<8x512xf32>
    %c0_47 = arith.constant 0 : index
    %c0_48 = arith.constant 0 : index
    %123 = vector.load %arg15[%c0_47, %c0_48] : memref<1x512xf32, #tpu.memory_space<vmem>>, vector<1x512xf32>
    %124 = vector.broadcast %123 : vector<1x512xf32> to vector<8x512xf32>
    %125 = arith.addf %122, %124 : vector<8x512xf32>
    %126 = arith.negf %125 : vector<8x512xf32>
    %127 = math.exp %126 : vector<8x512xf32>
    %cst_49 = arith.constant 1.000000e+00 : f32
    %128 = vector.broadcast %cst_49 : f32 to vector<8x512xf32>
    %129 = arith.addf %128, %127 : vector<8x512xf32>
    %130 = arith.divf %128, %129 : vector<8x512xf32>
    %131 = arith.mulf %125, %130 : vector<8x512xf32>
    %132 = arith.truncf %131 : vector<8x512xf32> to vector<8x512xbf16>
    %c0_50 = arith.constant 0 : index
    %c0_51 = arith.constant 0 : index
    %133 = vector.load %arg16[%c0_50, %c0_51] : memref<512x512xbf16, #tpu.memory_space<vmem>>, vector<512x512xbf16>
    %cst_52 = arith.constant dense<0.000000e+00> : vector<8x512xf32>
    %134 = tpu.matmul %132, %133, %cst_52 {dimension_numbers = #tpu.dot_dimension_numbers<[1], [0], [0], [1], [0, 0, 1, 1], [], []>} : vector<8x512xbf16>, vector<512x512xbf16>, vector<8x512xf32> -> vector<8x512xf32>
    %c0_53 = arith.constant 0 : index
    %c0_54 = arith.constant 0 : index
    %135 = vector.load %arg17[%c0_53, %c0_54] : memref<1x512xf32, #tpu.memory_space<vmem>>, vector<1x512xf32>
    %136 = vector.broadcast %135 : vector<1x512xf32> to vector<8x512xf32>
    %137 = arith.addf %134, %136 : vector<8x512xf32>
    %138 = arith.addf %93, %137 : vector<8x512xf32>
    %c0_55 = arith.constant 0 : index
    %c0_56 = arith.constant 0 : index
    %139 = vector.load %arg18[%c0_55, %c0_56] : memref<512x3xf32, #tpu.memory_space<vmem>>, vector<512x3xf32>
    %cst_57 = arith.constant dense<0.000000e+00> : vector<8x3xf32>
    %140 = tpu.matmul %138, %139, %cst_57 {dimension_numbers = #tpu.dot_dimension_numbers<[1], [0], [0], [1], [0, 0, 1, 1], [], []>} : vector<8x512xf32>, vector<512x3xf32>, vector<8x3xf32> -> vector<8x3xf32>
    %c0_58 = arith.constant 0 : index
    %c0_59 = arith.constant 0 : index
    %141 = vector.load %arg19[%c0_58, %c0_59] : memref<1x3xf32, #tpu.memory_space<vmem>>, vector<1x3xf32>
    %142 = vector.broadcast %141 : vector<1x3xf32> to vector<8x3xf32>
    %143 = arith.addf %140, %142 : vector<8x3xf32>
    %c0_60 = arith.constant 0 : index
    %c0_61 = arith.constant 0 : index
    %144 = vector.load %arg20[%c0_60, %c0_61] : memref<8x3xf32, #tpu.memory_space<vmem>>, vector<8x3xf32>
    tpu.vector_store %arg20[%c0_60, %c0_61], %143 {strides = array<i32>} : memref<8x3xf32, #tpu.memory_space<vmem>>, vector<8x3xf32>,
    return
  }
}

</mosaic_0001>

<llo_original>
// kernel: conditional_ddpm_forward.1
$region0: #{conditional_ddpm_forward.1}
  #allocation0 [shape = 'u32[]', space=smem, size = 0x4, offset = 0x4, fixed_abs, tag = 'smem constant byte address 0x4 - core index']
  #allocation1 [shape = 'u32[144,128]{1,0:T(1,128)}', space=vmem, size = 0x12000, scoped, tag = 'internal scratch']
  %s0 = inlined_call_operand.vmem [shape: f32[8,3], index: 0, kind: input, shape index: {}]
  %s1 = inlined_call_operand.vmem [shape: f32[8,512], index: 1, kind: input, shape index: {}]
  %s2 = inlined_call_operand.vmem [shape: f32[8,512], index: 2, kind: input, shape index: {}]
  %s3 = inlined_call_operand.vmem [shape: f32[3,512], index: 3, kind: input, shape index: {}]
  %s4 = inlined_call_operand.vmem [shape: f32[1,512], index: 4, kind: input, shape index: {}]
  %s5 = inlined_call_operand.vmem [shape: f32[1,512], index: 5, kind: input, shape index: {}]
  %s6 = inlined_call_operand.vmem [shape: bf16[512,512], index: 6, kind: input, shape index: {}]
  %s7 = inlined_call_operand.vmem [shape: f32[1,512], index: 7, kind: input, shape index: {}]
  %s8 = inlined_call_operand.vmem [shape: f32[1,512], index: 8, kind: input, shape index: {}]
  %s9 = inlined_call_operand.vmem [shape: f32[1,512], index: 9, kind: input, shape index: {}]
  %s10 = inlined_call_operand.hbm [shape: bf16[512,512], index: 10, kind: input, shape index: {}]
  %s11 = inlined_call_operand.vmem [shape: f32[1,512], index: 11, kind: input, shape index: {}]
  %s12 = inlined_call_operand.hbm [shape: bf16[512,512], index: 12, kind: input, shape index: {}]
  %s13 = inlined_call_operand.vmem [shape: f32[1,512], index: 13, kind: input, shape index: {}]
  %s14 = inlined_call_operand.vmem [shape: f32[1,512], index: 14, kind: input, shape index: {}]
  %s15 = inlined_call_operand.vmem [shape: f32[1,512], index: 15, kind: input, shape index: {}]
  %s16 = inlined_call_operand.hbm [shape: bf16[512,512], index: 16, kind: input, shape index: {}]
  %s17 = inlined_call_operand.vmem [shape: f32[1,512], index: 17, kind: input, shape index: {}]
  %s18 = inlined_call_operand.vmem [shape: f32[512,3], index: 18, kind: input, shape index: {}]
  %s19 = inlined_call_operand.vmem [shape: f32[1,3], index: 19, kind: input, shape index: {}]
  %s20 = inlined_call_operand.vmem [shape: f32[8,3], index: 20, kind: output, shape index: {}]
  %s21 = sld [smem:[#allocation0]]
  $region102: #{conditional_ddpm_forward.1} parent=0
    _
  %s23 = ssub.s32 1, %s21
  %s24 = scalar_select 0, %s23, %s21
  $region1: #{conditional_ddpm_forward.1} parent=0
    #allocation2 [shape = 'u8[524288]{0}', space=vmem, size = 0x80000, scoped, tag = 'input window, operand 10, single buffered']
    #allocation3 [shape = 's32[1]{0}', space=sflag, size = 0x4, scoped, tag = 'scoped memory for conditional_ddpm_forward.1']
    #allocation4 [shape = 'u8[524288]{0}', space=vmem, size = 0x80000, scoped, tag = 'input window, operand 12, single buffered']
    #allocation5 [shape = 's32[1]{0}', space=sflag, size = 0x4, scoped, tag = 'scoped memory for conditional_ddpm_forward.1']
    #allocation6 [shape = 'u8[524288]{0}', space=vmem, size = 0x80000, scoped, tag = 'input window, operand 16, single buffered']
    %25 = vsyncpa [#allocation3], 0
    %26 = vsyncpa [#allocation5], 0
    // Predicated region
    $region2: #{conditional_ddpm_forward.1} parent=1 // pred_check
      _
    $region3: #{conditional_ddpm_forward.1} parent=1 // pred_check_branch
      %28 = sbr.rel (0) target = $region5
    $region4: #{conditional_ddpm_forward.1} parent=1 // pred_region
      _
    $region5: #{conditional_ddpm_forward.1} parent=1 // pred_fallthru
      _
    // Predicated region
    $region6: #{conditional_ddpm_forward.1} parent=1 // pred_check
      _
    $region7: #{conditional_ddpm_forward.1} parent=1 // pred_check_branch
      %30 = sbr.rel (0) target = $region9
    $region8: #{conditional_ddpm_forward.1} parent=1 // pred_region
      _
    $region9: #{conditional_ddpm_forward.1} parent=1 // pred_fallthru
      _
    // Predicated region
    $region10: #{conditional_ddpm_forward.1} parent=1 // pred_check
      _
    $region11: #{conditional_ddpm_forward.1} parent=1 // pred_check_branch
      %32 = sbr.rel (0) target = $region13
    $region12: #{conditional_ddpm_forward.1} parent=1 // pred_region
      _
    $region13: #{conditional_ddpm_forward.1} parent=1 // pred_fallthru
      _
    // Predicated region
    $region14: #{conditional_ddpm_forward.1} parent=1 // pred_check
      _
    $region15: #{conditional_ddpm_forward.1} parent=1 // pred_check_branch
      %34 = sbr.rel (0) target = $region17
    $region16: #{conditional_ddpm_forward.1} parent=1 // pred_region
      _
    $region17: #{conditional_ddpm_forward.1} parent=1 // pred_fallthru
      _
    // Predicated region
    $region18: #{conditional_ddpm_forward.1} parent=1 // pred_check
      _
    $region19: #{conditional_ddpm_forward.1} parent=1 // pred_check_branch
      %36 = sbr.rel (0) target = $region21
    $region20: #{conditional_ddpm_forward.1} parent=1 // pred_region
      _
    $region21: #{conditional_ddpm_forward.1} parent=1 // pred_fallthru
      _
    // Predicated region
    $region22: #{conditional_ddpm_forward.1} parent=1 // pred_check
      _
    $region23: #{conditional_ddpm_forward.1} parent=1 // pred_check_branch
      %38 = sbr.rel (0) target = $region25
    $region24: #{conditional_ddpm_forward.1} parent=1 // pred_region
      _
    $region25: #{conditional_ddpm_forward.1} parent=1 // pred_fallthru
      _
    // Predicated region
    $region26: #{conditional_ddpm_forward.1} parent=1 // pred_check
      _
    $region27: #{conditional_ddpm_forward.1} parent=1 // pred_check_branch
      %40 = sbr.rel (0) target = $region29
    $region28: #{conditional_ddpm_forward.1} parent=1 // pred_region
      _
    $region29: #{conditional_ddpm_forward.1} parent=1 // pred_fallthru
      _
    // Predicated region
    $region30: #{conditional_ddpm_forward.1} parent=1 // pred_check
      _
    $region31: #{conditional_ddpm_forward.1} parent=1 // pred_check_branch
      %42 = sbr.rel (0) target = $region33
    $region32: #{conditional_ddpm_forward.1} parent=1 // pred_region
      _
    $region33: #{conditional_ddpm_forward.1} parent=1 // pred_fallthru
      _
    // Predicated region
    $region34: #{conditional_ddpm_forward.1} parent=1 // pred_check
      _
    $region35: #{conditional_ddpm_forward.1} parent=1 // pred_check_branch
      %44 = sbr.rel (0) target = $region37
    $region36: #{conditional_ddpm_forward.1} parent=1 // pred_region
      _
    $region37: #{conditional_ddpm_forward.1} parent=1 // pred_fallthru
      _
    // Predicated region
    $region38: #{conditional_ddpm_forward.1} parent=1 // pred_check
      _
    $region39: #{conditional_ddpm_forward.1} parent=1 // pred_check_branch
      %46 = sbr.rel (0) target = $region41
    $region40: #{conditional_ddpm_forward.1} parent=1 // pred_region
      _
    $region41: #{conditional_ddpm_forward.1} parent=1 // pred_fallthru
      _
    // Predicated region
    $region42: #{conditional_ddpm_forward.1} parent=1 // pred_check
      _
    $region43: #{conditional_ddpm_forward.1} parent=1 // pred_check_branch
      %48 = sbr.rel (0) target = $region45
    $region44: #{conditional_ddpm_forward.1} parent=1 // pred_region
      %s50 = ssub.s32 16384, 16384
      %51 = vsyncadd [#allocation3], %s50
      %s52 = sshll.u32 [#allocation2], 4
      %s53 = int_to_ptr.vmem [resolvable:$true] %s52
      %58 = dma.hbm_to_vmem [thread:$0]  %s10, 16384, %s53, [#allocation3], 256, 256, 16
    $region45: #{conditional_ddpm_forward.1} parent=1 // pred_fallthru
      _
    // Predicated region
    $region46: #{conditional_ddpm_forward.1} parent=1 // pred_check
      _
    $region47: #{conditional_ddpm_forward.1} parent=1 // pred_check_branch
      %60 = sbr.rel (0) target = $region49
    $region48: #{conditional_ddpm_forward.1} parent=1 // pred_region
      _
    $region49: #{conditional_ddpm_forward.1} parent=1 // pred_fallthru
      _
    // Predicated region
    $region50: #{conditional_ddpm_forward.1} parent=1 // pred_check
      _
    $region51: #{conditional_ddpm_forward.1} parent=1 // pred_check_branch
      %62 = sbr.rel (0) target = $region53
    $region52: #{conditional_ddpm_forward.1} parent=1 // pred_region
      %s64 = ssub.s32 16384, 16384
      %65 = vsyncadd [#allocation5], %s64
      %s66 = sshll.u32 [#allocation4], 4
      %s67 = int_to_ptr.vmem [resolvable:$true] %s66
      %72 = dma.hbm_to_vmem [thread:$0]  %s12, 16384, %s67, [#allocation5], 256, 256, 16
    $region53: #{conditional_ddpm_forward.1} parent=1 // pred_fallthru
      _
    // Predicated region
    $region54: #{conditional_ddpm_forward.1} parent=1 // pred_check
      _
    $region55: #{conditional_ddpm_forward.1} parent=1 // pred_check_branch
      %74 = sbr.rel (0) target = $region57
    $region56: #{conditional_ddpm_forward.1} parent=1 // pred_region
      _
    $region57: #{conditional_ddpm_forward.1} parent=1 // pred_fallthru
      _
    // Predicated region
    $region58: #{conditional_ddpm_forward.1} parent=1 // pred_check
      _
    $region59: #{conditional_ddpm_forward.1} parent=1 // pred_check_branch
      %76 = sbr.rel (0) target = $region61
    $region60: #{conditional_ddpm_forward.1} parent=1 // pred_region
      _
    $region61: #{conditional_ddpm_forward.1} parent=1 // pred_fallthru
      _
    // Predicated region
    $region62: #{conditional_ddpm_forward.1} parent=1 // pred_check
      _
    $region63: #{conditional_ddpm_forward.1} parent=1 // pred_check_branch
      %78 = sbr.rel (0) target = $region65
    $region64: #{conditional_ddpm_forward.1} parent=1 // pred_region
      _
    $region65: #{conditional_ddpm_forward.1} parent=1 // pred_fallthru
      _
    // Predicated region
    $region66: #{conditional_ddpm_forward.1} parent=1 // pred_check
      _
    $region67: #{conditional_ddpm_forward.1} parent=1 // pred_check_branch
      %80 = sbr.rel (0) target = $region69
    $region68: #{conditional_ddpm_forward.1} parent=1 // pred_region
      %s82 = ssub.s32 16384, 16384
      %83 = vsyncadd [#allocation5], %s82
      %s84 = sshll.u32 [#allocation6], 4
      %s85 = int_to_ptr.vmem [resolvable:$true] %s84
      %90 = dma.hbm_to_vmem [thread:$0]  %s16, 16384, %s85, [#allocation5], 256, 256, 16
    $region69: #{conditional_ddpm_forward.1} parent=1 // pred_fallthru
      _
    // Predicated region
    $region70: #{conditional_ddpm_forward.1} parent=1 // pred_check
      _
    $region71: #{conditional_ddpm_forward.1} parent=1 // pred_check_branch
      %92 = sbr.rel (0) target = $region73
    $region72: #{conditional_ddpm_forward.1} parent=1 // pred_region
      _
    $region73: #{conditional_ddpm_forward.1} parent=1 // pred_fallthru
      _
    // Predicated region
    $region74: #{conditional_ddpm_forward.1} parent=1 // pred_check
      _
    $region75: #{conditional_ddpm_forward.1} parent=1 // pred_check_branch
      %94 = sbr.rel (0) target = $region77
    $region76: #{conditional_ddpm_forward.1} parent=1 // pred_region
      _
    $region77: #{conditional_ddpm_forward.1} parent=1 // pred_fallthru
      _
    // Predicated region
    $region78: #{conditional_ddpm_forward.1} parent=1 // pred_check
      _
    $region79: #{conditional_ddpm_forward.1} parent=1 // pred_check_branch
      %96 = sbr.rel (0) target = $region81
    $region80: #{conditional_ddpm_forward.1} parent=1 // pred_region
      _
    $region81: #{conditional_ddpm_forward.1} parent=1 // pred_fallthru
      _
    // Predicated region
    $region82: #{conditional_ddpm_forward.1} parent=1 // pred_check
      _
    $region83: #{conditional_ddpm_forward.1} parent=1 // pred_check_branch
      %98 = sbr.rel (0) target = $region85
    $region84: #{conditional_ddpm_forward.1} parent=1 // pred_region
      %99 = dma.done [#allocation3], 16384
    $region85: #{conditional_ddpm_forward.1} parent=1 // pred_fallthru
      _
    // Predicated region
    $region86: #{conditional_ddpm_forward.1} parent=1 // pred_check
      _
    $region87: #{conditional_ddpm_forward.1} parent=1 // pred_check_branch
      %101 = sbr.rel (0) target = $region89
    $region88: #{conditional_ddpm_forward.1} parent=1 // pred_region
      %102 = dma.done [#allocation5], 16384
    $region89: #{conditional_ddpm_forward.1} parent=1 // pred_fallthru
      _
    // Predicated region
    $region90: #{conditional_ddpm_forward.1} parent=1 // pred_check
      _
    $region91: #{conditional_ddpm_forward.1} parent=1 // pred_check_branch
      %104 = sbr.rel (0) target = $region93
    $region92: #{conditional_ddpm_forward.1} parent=1 // pred_region
      %105 = dma.done [#allocation5], 16384
    $region93: #{conditional_ddpm_forward.1} parent=1 // pred_fallthru
      _
    %v106 = vld [vmem:[%s0] sm:$0xff]
    %v107 = vld [vmem:[%s3] sm:$0x77]
    %v108 = vld [vmem:[%s3 + $0x8] sm:$0x77]
    %v109 = vld [vmem:[%s1] sm:$0xff]
    %v110 = vld [vmem:[%s1 + $0x8] sm:$0xff]
    %v111 = vld [vmem:[%s1 + $0x10] sm:$0xff]
    %v112 = vld [vmem:[%s1 + $0x18] sm:$0xff]
    %v113 = vld [vmem:[%s2] sm:$0xff]
    %v114 = vld [vmem:[%s2 + $0x8] sm:$0xff]
    %v115 = vld [vmem:[%s2 + $0x10] sm:$0xff]
    %v116 = vld [vmem:[%s2 + $0x18] sm:$0xff]
    %v117 = vadd.f32 %v109, %v113
    %v118 = vadd.f32 %v110, %v114
    %v119 = vadd.f32 %v111, %v115
    %v120 = vadd.f32 %v112, %v116
    %122 = vset.pattern.permute.xlu0 0
    %123 = vperm.xlu0 %122, %v106
    %v124 = vpop.permute.xlu0 %123
    %v128 = vlaneseq
    %v129 = vshrl.u32 %v128, 7
    %v130 = vsub.s32 0, %v129
    %v131 = vrot.slane %v107, %v130
    %v132 = vlaneseq
    %v133 = vshrl.u32 %v132, 7
    %v134 = vsub.s32 4, %v133
    %v135 = vrot.slane %v107, %v134
    %v136 = vlaneseq
    %v137 = vshrl.u32 %v136, 7
    %v138 = vsub.s32 0, %v137
    %v139 = vrot.slane %v108, %v138
    %v140 = vlaneseq
    %v141 = vshrl.u32 %v140, 7
    %v142 = vsub.s32 4, %v141
    %v143 = vrot.slane %v108, %v142
    %v148 = vlaneseq
    %v149 = vshrl.u32 %v148, 7
    %v150 = vsub.s32 0, %v149
    %v151 = vrot.slane %v131, %v150
    %v152 = vlaneseq
    %v153 = vshrl.u32 %v152, 7
    %v154 = vsub.s32 0, %v153
    %v155 = vrot.slane %v135, %v154
    %v156 = vlaneseq
    %v157 = vshrl.u32 %v156, 7
    %v158 = vsub.s32 0, %v157
    %v159 = vrot.slane %v139, %v158
    %v160 = vlaneseq
    %v161 = vshrl.u32 %v160, 7
    %v162 = vsub.s32 0, %v161
    %v163 = vrot.slane %v143, %v162
    %v164 = vmul.f32 %v124, %v151
    %v165 = vmul.f32 %v124, %v155
    %v166 = vmul.f32 %v124, %v159
    %v167 = vmul.f32 %v124, %v163
    %v168 = vadd.f32 %v117, %v164
    %v169 = vadd.f32 %v118, %v165
    %v170 = vadd.f32 %v119, %v166
    %v171 = vadd.f32 %v120, %v167
    %172 = vset.pattern.permute.xlu0 1
    %173 = vperm.xlu0 %172, %v106
    %v174 = vpop.permute.xlu0 %173
    %v176 = vlaneseq
    %v177 = vshrl.u32 %v176, 7
    %v178 = vsub.s32 1, %v177
    %v179 = vrot.slane %v107, %v178
    %v180 = vlaneseq
    %v181 = vshrl.u32 %v180, 7
    %v182 = vsub.s32 5, %v181
    %v183 = vrot.slane %v107, %v182
    %v184 = vlaneseq
    %v185 = vshrl.u32 %v184, 7
    %v186 = vsub.s32 1, %v185
    %v187 = vrot.slane %v108, %v186
    %v188 = vlaneseq
    %v189 = vshrl.u32 %v188, 7
    %v190 = vsub.s32 5, %v189
    %v191 = vrot.slane %v108, %v190
    %v196 = vlaneseq
    %v197 = vshrl.u32 %v196, 7
    %v198 = vsub.s32 1, %v197
    %v199 = vrot.slane %v179, %v198
    %v200 = vlaneseq
    %v201 = vshrl.u32 %v200, 7
    %v202 = vsub.s32 1, %v201
    %v203 = vrot.slane %v183, %v202
    %v204 = vlaneseq
    %v205 = vshrl.u32 %v204, 7
    %v206 = vsub.s32 1, %v205
    %v207 = vrot.slane %v187, %v206
    %v208 = vlaneseq
    %v209 = vshrl.u32 %v208, 7
    %v210 = vsub.s32 1, %v209
    %v211 = vrot.slane %v191, %v210
    %v212 = vmul.f32 %v174, %v199
    %v213 = vmul.f32 %v174, %v203
    %v214 = vmul.f32 %v174, %v207
    %v215 = vmul.f32 %v174, %v211
    %v216 = vadd.f32 %v168, %v212
    %v217 = vadd.f32 %v169, %v213
    %v218 = vadd.f32 %v170, %v214
    %v219 = vadd.f32 %v171, %v215
    %220 = vset.pattern.permute.xlu0 2
    %221 = vperm.xlu0 %220, %v106
    %v222 = vpop.permute.xlu0 %221
    %v224 = vlaneseq
    %v225 = vshrl.u32 %v224, 7
    %v226 = vsub.s32 2, %v225
    %v227 = vrot.slane %v107, %v226
    %v228 = vlaneseq
    %v229 = vshrl.u32 %v228, 7
    %v230 = vsub.s32 6, %v229
    %v231 = vrot.slane %v107, %v230
    %v232 = vlaneseq
    %v233 = vshrl.u32 %v232, 7
    %v234 = vsub.s32 2, %v233
    %v235 = vrot.slane %v108, %v234
    %v236 = vlaneseq
    %v237 = vshrl.u32 %v236, 7
    %v238 = vsub.s32 6, %v237
    %v239 = vrot.slane %v108, %v238
    %v244 = vlaneseq
    %v245 = vshrl.u32 %v244, 7
    %v246 = vsub.s32 2, %v245
    %v247 = vrot.slane %v227, %v246
    %v248 = vlaneseq
    %v249 = vshrl.u32 %v248, 7
    %v250 = vsub.s32 2, %v249
    %v251 = vrot.slane %v231, %v250
    %v252 = vlaneseq
    %v253 = vshrl.u32 %v252, 7
    %v254 = vsub.s32 2, %v253
    %v255 = vrot.slane %v235, %v254
    %v256 = vlaneseq
    %v257 = vshrl.u32 %v256, 7
    %v258 = vsub.s32 2, %v257
    %v259 = vrot.slane %v239, %v258
    %v260 = vmul.f32 %v222, %v247
    %v261 = vmul.f32 %v222, %v251
    %v262 = vmul.f32 %v222, %v255
    %v263 = vmul.f32 %v222, %v259
    %v264 = vadd.f32 %v216, %v260
    %v265 = vadd.f32 %v217, %v261
    %v266 = vadd.f32 %v218, %v262
    %v267 = vadd.f32 %v219, %v263
    %v268 = vadd.f32 %v264, %v265
    %v269 = vadd.f32 %v268, %v266
    %v270 = vadd.f32 %v269, %v267
    %271 = vadd.xlane.f32.xlu0 %v270
    %v272 = vpop.xlane.xlu0 %271
    %v273 = vrcp.pop 512.0
    %v274 = vmul.f32 %v272, %v273
    %v275 = vsub.f32 %v264, %v274
    %v276 = vsub.f32 %v265, %v274
    %v277 = vsub.f32 %v266, %v274
    %v278 = vsub.f32 %v267, %v274
    %v279 = vmul.f32 %v275, %v275
    %v280 = vmul.f32 %v276, %v276
    %v281 = vmul.f32 %v277, %v277
    %v282 = vmul.f32 %v278, %v278
    %v283 = vadd.f32 %v279, %v280
    %v284 = vadd.f32 %v283, %v281
    %v285 = vadd.f32 %v284, %v282
    %286 = vadd.xlane.f32.xlu0 %v285
    %v287 = vpop.xlane.xlu0 %286
    %v288 = vmul.f32 %v287, %v273
    %v289 = vadd.f32 %v288, 1e-05
    %v290 = vrsqrt.pop %v289
    %v291 = vmul.f32 %v275, %v290
    %v292 = vmul.f32 %v276, %v290
    %v293 = vmul.f32 %v277, %v290
    %v294 = vmul.f32 %v278, %v290
    %v295 = vld [vmem:[%s4] sm:$0xf]
    %v297 = vlaneseq
    %v298 = vshrl.u32 %v297, 7
    %v299 = vsub.s32 0, %v298
    %v300 = vrot.slane %v295, %v299
    %v301 = vlaneseq
    %v302 = vshrl.u32 %v301, 7
    %v303 = vsub.s32 1, %v302
    %v304 = vrot.slane %v295, %v303
    %v305 = vlaneseq
    %v306 = vshrl.u32 %v305, 7
    %v307 = vsub.s32 2, %v306
    %v308 = vrot.slane %v295, %v307
    %v309 = vlaneseq
    %v310 = vshrl.u32 %v309, 7
    %v311 = vsub.s32 3, %v310
    %v312 = vrot.slane %v295, %v311
    %v317 = vmul.f32 %v291, %v300
    %v318 = vmul.f32 %v292, %v304
    %v319 = vmul.f32 %v293, %v308
    %v320 = vmul.f32 %v294, %v312
    %v321 = vld [vmem:[%s5] sm:$0xf]
    %v323 = vlaneseq
    %v324 = vshrl.u32 %v323, 7
    %v325 = vsub.s32 0, %v324
    %v326 = vrot.slane %v321, %v325
    %v327 = vlaneseq
    %v328 = vshrl.u32 %v327, 7
    %v329 = vsub.s32 1, %v328
    %v330 = vrot.slane %v321, %v329
    %v331 = vlaneseq
    %v332 = vshrl.u32 %v331, 7
    %v333 = vsub.s32 2, %v332
    %v334 = vrot.slane %v321, %v333
    %v335 = vlaneseq
    %v336 = vshrl.u32 %v335, 7
    %v337 = vsub.s32 3, %v336
    %v338 = vrot.slane %v321, %v337
    %v343 = vadd.f32 %v317, %v326
    %v344 = vadd.f32 %v318, %v330
    %v345 = vadd.f32 %v319, %v334
    %v346 = vadd.f32 %v320, %v338
    %v347 = vpack.c.bf16 %v343, %v343
    %v348 = vpack.c.bf16 %v344, %v344
    %v349 = vpack.c.bf16 %v345, %v345
    %v350 = vpack.c.bf16 %v346, %v346
    %v351 = vld [vmem:[%s6] sm:$0xff]
    %v352 = vld [vmem:[%s6 + $0x8] sm:$0xff]
    %v353 = vld [vmem:[%s6 + $0x10] sm:$0xff]
    %v354 = vld [vmem:[%s6 + $0x18] sm:$0xff]
    %v355 = vld [vmem:[%s6 + $0x20] sm:$0xff]
    %v356 = vld [vmem:[%s6 + $0x28] sm:$0xff]
    %v357 = vld [vmem:[%s6 + $0x30] sm:$0xff]
    %v358 = vld [vmem:[%s6 + $0x38] sm:$0xff]
    %v359 = vld [vmem:[%s6 + $0x40] sm:$0xff]
    %v360 = vld [vmem:[%s6 + $0x48] sm:$0xff]
    %v361 = vld [vmem:[%s6 + $0x50] sm:$0xff]
    %v362 = vld [vmem:[%s6 + $0x58] sm:$0xff]
    %v363 = vld [vmem:[%s6 + $0x60] sm:$0xff]
    %v364 = vld [vmem:[%s6 + $0x68] sm:$0xff]
    %v365 = vld [vmem:[%s6 + $0x70] sm:$0xff]
    %v366 = vld [vmem:[%s6 + $0x78] sm:$0xff]
    %v367 = vld [vmem:[%s6 + $0x80] sm:$0xff]
    %v368 = vld [vmem:[%s6 + $0x88] sm:$0xff]
    %v369 = vld [vmem:[%s6 + $0x90] sm:$0xff]
    %v370 = vld [vmem:[%s6 + $0x98] sm:$0xff]
    %v371 = vld [vmem:[%s6 + $0xa0] sm:$0xff]
    %v372 = vld [vmem:[%s6 + $0xa8] sm:$0xff]
    %v373 = vld [vmem:[%s6 + $0xb0] sm:$0xff]
    %v374 = vld [vmem:[%s6 + $0xb8] sm:$0xff]
    %v375 = vld [vmem:[%s6 + $0xc0] sm:$0xff]
    %v376 = vld [vmem:[%s6 + $0xc8] sm:$0xff]
    %v377 = vld [vmem:[%s6 + $0xd0] sm:$0xff]
    %v378 = vld [vmem:[%s6 + $0xd8] sm:$0xff]
    %v379 = vld [vmem:[%s6 + $0xe0] sm:$0xff]
    %v380 = vld [vmem:[%s6 + $0xe8] sm:$0xff]
    %v381 = vld [vmem:[%s6 + $0xf0] sm:$0xff]
    %v382 = vld [vmem:[%s6 + $0xf8] sm:$0xff]
    %v383 = vld [vmem:[%s6 + $0x100] sm:$0xff]
    %v384 = vld [vmem:[%s6 + $0x108] sm:$0xff]
    %v385 = vld [vmem:[%s6 + $0x110] sm:$0xff]
    %v386 = vld [vmem:[%s6 + $0x118] sm:$0xff]
    %v387 = vld [vmem:[%s6 + $0x120] sm:$0xff]
    %v388 = vld [vmem:[%s6 + $0x128] sm:$0xff]
    %v389 = vld [vmem:[%s6 + $0x130] sm:$0xff]
    %v390 = vld [vmem:[%s6 + $0x138] sm:$0xff]
    %v391 = vld [vmem:[%s6 + $0x140] sm:$0xff]
    %v392 = vld [vmem:[%s6 + $0x148] sm:$0xff]
    %v393 = vld [vmem:[%s6 + $0x150] sm:$0xff]
    %v394 = vld [vmem:[%s6 + $0x158] sm:$0xff]
    %v395 = vld [vmem:[%s6 + $0x160] sm:$0xff]
    %v396 = vld [vmem:[%s6 + $0x168] sm:$0xff]
    %v397 = vld [vmem:[%s6 + $0x170] sm:$0xff]
    %v398 = vld [vmem:[%s6 + $0x178] sm:$0xff]
    %v399 = vld [vmem:[%s6 + $0x180] sm:$0xff]
    %v400 = vld [vmem:[%s6 + $0x188] sm:$0xff]
    %v401 = vld [vmem:[%s6 + $0x190] sm:$0xff]
    %v402 = vld [vmem:[%s6 + $0x198] sm:$0xff]
    %v403 = vld [vmem:[%s6 + $0x1a0] sm:$0xff]
    %v404 = vld [vmem:[%s6 + $0x1a8] sm:$0xff]
    %v405 = vld [vmem:[%s6 + $0x1b0] sm:$0xff]
    %v406 = vld [vmem:[%s6 + $0x1b8] sm:$0xff]
    %v407 = vld [vmem:[%s6 + $0x1c0] sm:$0xff]
    %v408 = vld [vmem:[%s6 + $0x1c8] sm:$0xff]
    %v409 = vld [vmem:[%s6 + $0x1d0] sm:$0xff]
    %v410 = vld [vmem:[%s6 + $0x1d8] sm:$0xff]
    %v411 = vld [vmem:[%s6 + $0x1e0] sm:$0xff]
    %v412 = vld [vmem:[%s6 + $0x1e8] sm:$0xff]
    %v413 = vld [vmem:[%s6 + $0x1f0] sm:$0xff]
    %v414 = vld [vmem:[%s6 + $0x1f8] sm:$0xff]
    %v415 = vld [vmem:[%s6 + $0x200] sm:$0xff]
    %v416 = vld [vmem:[%s6 + $0x208] sm:$0xff]
    %v417 = vld [vmem:[%s6 + $0x210] sm:$0xff]
    %v418 = vld [vmem:[%s6 + $0x218] sm:$0xff]
    %v419 = vld [vmem:[%s6 + $0x220] sm:$0xff]
    %v420 = vld [vmem:[%s6 + $0x228] sm:$0xff]
    %v421 = vld [vmem:[%s6 + $0x230] sm:$0xff]
    %v422 = vld [vmem:[%s6 + $0x238] sm:$0xff]
    %v423 = vld [vmem:[%s6 + $0x240] sm:$0xff]
    %v424 = vld [vmem:[%s6 + $0x248] sm:$0xff]
    %v425 = vld [vmem:[%s6 + $0x250] sm:$0xff]
    %v426 = vld [vmem:[%s6 + $0x258] sm:$0xff]
    %v427 = vld [vmem:[%s6 + $0x260] sm:$0xff]
    %v428 = vld [vmem:[%s6 + $0x268] sm:$0xff]
    %v429 = vld [vmem:[%s6 + $0x270] sm:$0xff]
    %v430 = vld [vmem:[%s6 + $0x278] sm:$0xff]
    %v431 = vld [vmem:[%s6 + $0x280] sm:$0xff]
    %v432 = vld [vmem:[%s6 + $0x288] sm:$0xff]
    %v433 = vld [vmem:[%s6 + $0x290] sm:$0xff]
    %v434 = vld [vmem:[%s6 + $0x298] sm:$0xff]
    %v435 = vld [vmem:[%s6 + $0x2a0] sm:$0xff]
    %v436 = vld [vmem:[%s6 + $0x2a8] sm:$0xff]
    %v437 = vld [vmem:[%s6 + $0x2b0] sm:$0xff]
    %v438 = vld [vmem:[%s6 + $0x2b8] sm:$0xff]
    %v439 = vld [vmem:[%s6 + $0x2c0] sm:$0xff]
    %v440 = vld [vmem:[%s6 + $0x2c8] sm:$0xff]
    %v441 = vld [vmem:[%s6 + $0x2d0] sm:$0xff]
    %v442 = vld [vmem:[%s6 + $0x2d8] sm:$0xff]
    %v443 = vld [vmem:[%s6 + $0x2e0] sm:$0xff]
    %v444 = vld [vmem:[%s6 + $0x2e8] sm:$0xff]
    %v445 = vld [vmem:[%s6 + $0x2f0] sm:$0xff]
    %v446 = vld [vmem:[%s6 + $0x2f8] sm:$0xff]
    %v447 = vld [vmem:[%s6 + $0x300] sm:$0xff]
    %v448 = vld [vmem:[%s6 + $0x308] sm:$0xff]
    %v449 = vld [vmem:[%s6 + $0x310] sm:$0xff]
    %v450 = vld [vmem:[%s6 + $0x318] sm:$0xff]
    %v451 = vld [vmem:[%s6 + $0x320] sm:$0xff]
    %v452 = vld [vmem:[%s6 + $0x328] sm:$0xff]
    %v453 = vld [vmem:[%s6 + $0x330] sm:$0xff]
    %v454 = vld [vmem:[%s6 + $0x338] sm:$0xff]
    %v455 = vld [vmem:[%s6 + $0x340] sm:$0xff]
    %v456 = vld [vmem:[%s6 + $0x348] sm:$0xff]
    %v457 = vld [vmem:[%s6 + $0x350] sm:$0xff]
    %v458 = vld [vmem:[%s6 + $0x358] sm:$0xff]
    %v459 = vld [vmem:[%s6 + $0x360] sm:$0xff]
    %v460 = vld [vmem:[%s6 + $0x368] sm:$0xff]
    %v461 = vld [vmem:[%s6 + $0x370] sm:$0xff]
    %v462 = vld [vmem:[%s6 + $0x378] sm:$0xff]
    %v463 = vld [vmem:[%s6 + $0x380] sm:$0xff]
    %v464 = vld [vmem:[%s6 + $0x388] sm:$0xff]
    %v465 = vld [vmem:[%s6 + $0x390] sm:$0xff]
    %v466 = vld [vmem:[%s6 + $0x398] sm:$0xff]
    %v467 = vld [vmem:[%s6 + $0x3a0] sm:$0xff]
    %v468 = vld [vmem:[%s6 + $0x3a8] sm:$0xff]
    %v469 = vld [vmem:[%s6 + $0x3b0] sm:$0xff]
    %v470 = vld [vmem:[%s6 + $0x3b8] sm:$0xff]
    %v471 = vld [vmem:[%s6 + $0x3c0] sm:$0xff]
    %v472 = vld [vmem:[%s6 + $0x3c8] sm:$0xff]
    %v473 = vld [vmem:[%s6 + $0x3d0] sm:$0xff]
    %v474 = vld [vmem:[%s6 + $0x3d8] sm:$0xff]
    %v475 = vld [vmem:[%s6 + $0x3e0] sm:$0xff]
    %v476 = vld [vmem:[%s6 + $0x3e8] sm:$0xff]
    %v477 = vld [vmem:[%s6 + $0x3f0] sm:$0xff]
    %v478 = vld [vmem:[%s6 + $0x3f8] sm:$0xff]
    %v479 = vld [vmem:[%s7] sm:$0xf]
    %v481 = vlaneseq
    %v482 = vshrl.u32 %v481, 7
    %v483 = vsub.s32 0, %v482
    %v484 = vrot.slane %v479, %v483
    %v485 = vlaneseq
    %v486 = vshrl.u32 %v485, 7
    %v487 = vsub.s32 1, %v486
    %v488 = vrot.slane %v479, %v487
    %v489 = vlaneseq
    %v490 = vshrl.u32 %v489, 7
    %v491 = vsub.s32 2, %v490
    %v492 = vrot.slane %v479, %v491
    %v493 = vlaneseq
    %v494 = vshrl.u32 %v493, 7
    %v495 = vsub.s32 3, %v494
    %v496 = vrot.slane %v479, %v495
    %v629 = vunpack.c.l.b16 %v351
    %v630 = vunpack.c.h.b16 %v351
    %v631 = vunpack.c.l.b16 %v352
    %v632 = vunpack.c.h.b16 %v352
    %v633 = vunpack.c.l.b16 %v353
    %v634 = vunpack.c.h.b16 %v353
    %v635 = vunpack.c.l.b16 %v354
    %v636 = vunpack.c.h.b16 %v354
    %v637 = vunpack.c.l.b16 %v355
    %v638 = vunpack.c.h.b16 %v355
    %v639 = vunpack.c.l.b16 %v356
    %v640 = vunpack.c.h.b16 %v356
    %v641 = vunpack.c.l.b16 %v357
    %v642 = vunpack.c.h.b16 %v357
    %v643 = vunpack.c.l.b16 %v358
    %v644 = vunpack.c.h.b16 %v358
    %v645 = vunpack.c.l.b16 %v359
    %v646 = vunpack.c.h.b16 %v359
    %v647 = vunpack.c.l.b16 %v360
    %v648 = vunpack.c.h.b16 %v360
    %v649 = vunpack.c.l.b16 %v361
    %v650 = vunpack.c.h.b16 %v361
    %v651 = vunpack.c.l.b16 %v362
    %v652 = vunpack.c.h.b16 %v362
    %v653 = vunpack.c.l.b16 %v363
    %v654 = vunpack.c.h.b16 %v363
    %v655 = vunpack.c.l.b16 %v364
    %v656 = vunpack.c.h.b16 %v364
    %v657 = vunpack.c.l.b16 %v365
    %v658 = vunpack.c.h.b16 %v365
    %v659 = vunpack.c.l.b16 %v366
    %v660 = vunpack.c.h.b16 %v366
    %v661 = vunpack.c.l.b16 %v367
    %v662 = vunpack.c.h.b16 %v367
    %v663 = vunpack.c.l.b16 %v368
    %v664 = vunpack.c.h.b16 %v368
    %v665 = vunpack.c.l.b16 %v369
    %v666 = vunpack.c.h.b16 %v369
    %v667 = vunpack.c.l.b16 %v370
    %v668 = vunpack.c.h.b16 %v370
    %v669 = vunpack.c.l.b16 %v371
    %v670 = vunpack.c.h.b16 %v371
    %v671 = vunpack.c.l.b16 %v372
    %v672 = vunpack.c.h.b16 %v372
    %v673 = vunpack.c.l.b16 %v373
    %v674 = vunpack.c.h.b16 %v373
    %v675 = vunpack.c.l.b16 %v374
    %v676 = vunpack.c.h.b16 %v374
    %v677 = vunpack.c.l.b16 %v375
    %v678 = vunpack.c.h.b16 %v375
    %v679 = vunpack.c.l.b16 %v376
    %v680 = vunpack.c.h.b16 %v376
    %v681 = vunpack.c.l.b16 %v377
    %v682 = vunpack.c.h.b16 %v377
    %v683 = vunpack.c.l.b16 %v378
    %v684 = vunpack.c.h.b16 %v378
    %v685 = vunpack.c.l.b16 %v379
    %v686 = vunpack.c.h.b16 %v379
    %v687 = vunpack.c.l.b16 %v380
    %v688 = vunpack.c.h.b16 %v380
    %v689 = vunpack.c.l.b16 %v381
    %v690 = vunpack.c.h.b16 %v381
    %v691 = vunpack.c.l.b16 %v382
    %v692 = vunpack.c.h.b16 %v382
    %v693 = vunpack.c.l.b16 %v383
    %v694 = vunpack.c.h.b16 %v383
    %v695 = vunpack.c.l.b16 %v384
    %v696 = vunpack.c.h.b16 %v384
    %v697 = vunpack.c.l.b16 %v385
    %v698 = vunpack.c.h.b16 %v385
    %v699 = vunpack.c.l.b16 %v386
    %v700 = vunpack.c.h.b16 %v386
    %v701 = vunpack.c.l.b16 %v387
    %v702 = vunpack.c.h.b16 %v387
    %v703 = vunpack.c.l.b16 %v388
    %v704 = vunpack.c.h.b16 %v388
    %v705 = vunpack.c.l.b16 %v389
    %v706 = vunpack.c.h.b16 %v389
    %v707 = vunpack.c.l.b16 %v390
    %v708 = vunpack.c.h.b16 %v390
    %v709 = vunpack.c.l.b16 %v391
    %v710 = vunpack.c.h.b16 %v391
    %v711 = vunpack.c.l.b16 %v392
    %v712 = vunpack.c.h.b16 %v392
    %v713 = vunpack.c.l.b16 %v393
    %v714 = vunpack.c.h.b16 %v393
    %v715 = vunpack.c.l.b16 %v394
    %v716 = vunpack.c.h.b16 %v394
    %v717 = vunpack.c.l.b16 %v395
    %v718 = vunpack.c.h.b16 %v395
    %v719 = vunpack.c.l.b16 %v396
    %v720 = vunpack.c.h.b16 %v396
    %v721 = vunpack.c.l.b16 %v397
    %v722 = vunpack.c.h.b16 %v397
    %v723 = vunpack.c.l.b16 %v398
    %v724 = vunpack.c.h.b16 %v398
    %v725 = vunpack.c.l.b16 %v399
    %v726 = vunpack.c.h.b16 %v399
    %v727 = vunpack.c.l.b16 %v400
    %v728 = vunpack.c.h.b16 %v400
    %v729 = vunpack.c.l.b16 %v401
    %v730 = vunpack.c.h.b16 %v401
    %v731 = vunpack.c.l.b16 %v402
    %v732 = vunpack.c.h.b16 %v402
    %v733 = vunpack.c.l.b16 %v403
    %v734 = vunpack.c.h.b16 %v403
    %v735 = vunpack.c.l.b16 %v404
    %v736 = vunpack.c.h.b16 %v404
    %v737 = vunpack.c.l.b16 %v405
    %v738 = vunpack.c.h.b16 %v405
    %v739 = vunpack.c.l.b16 %v406
    %v740 = vunpack.c.h.b16 %v406
    %v741 = vunpack.c.l.b16 %v407
    %v742 = vunpack.c.h.b16 %v407
    %v743 = vunpack.c.l.b16 %v408
    %v744 = vunpack.c.h.b16 %v408
    %v745 = vunpack.c.l.b16 %v409
    %v746 = vunpack.c.h.b16 %v409
    %v747 = vunpack.c.l.b16 %v410
    %v748 = vunpack.c.h.b16 %v410
    %v749 = vunpack.c.l.b16 %v411
    %v750 = vunpack.c.h.b16 %v411
    %v751 = vunpack.c.l.b16 %v412
    %v752 = vunpack.c.h.b16 %v412
    %v753 = vunpack.c.l.b16 %v413
    %v754 = vunpack.c.h.b16 %v413
    %v755 = vunpack.c.l.b16 %v414
    %v756 = vunpack.c.h.b16 %v414
    %v757 = vunpack.c.l.b16 %v415
    %v758 = vunpack.c.h.b16 %v415
    %v759 = vunpack.c.l.b16 %v416
    %v760 = vunpack.c.h.b16 %v416
    %v761 = vunpack.c.l.b16 %v417
    %v762 = vunpack.c.h.b16 %v417
    %v763 = vunpack.c.l.b16 %v418
    %v764 = vunpack.c.h.b16 %v418
    %v765 = vunpack.c.l.b16 %v419
    %v766 = vunpack.c.h.b16 %v419
    %v767 = vunpack.c.l.b16 %v420
    %v768 = vunpack.c.h.b16 %v420
    %v769 = vunpack.c.l.b16 %v421
    %v770 = vunpack.c.h.b16 %v421
    %v771 = vunpack.c.l.b16 %v422
    %v772 = vunpack.c.h.b16 %v422
    %v773 = vunpack.c.l.b16 %v423
    %v774 = vunpack.c.h.b16 %v423
    %v775 = vunpack.c.l.b16 %v424
    %v776 = vunpack.c.h.b16 %v424
    %v777 = vunpack.c.l.b16 %v425
    %v778 = vunpack.c.h.b16 %v425
    %v779 = vunpack.c.l.b16 %v426
    %v780 = vunpack.c.h.b16 %v426
    %v781 = vunpack.c.l.b16 %v427
    %v782 = vunpack.c.h.b16 %v427
    %v783 = vunpack.c.l.b16 %v428
    %v784 = vunpack.c.h.b16 %v428
    %v785 = vunpack.c.l.b16 %v429
    %v786 = vunpack.c.h.b16 %v429
    %v787 = vunpack.c.l.b16 %v430
    %v788 = vunpack.c.h.b16 %v430
    %v789 = vunpack.c.l.b16 %v431
    %v790 = vunpack.c.h.b16 %v431
    %v791 = vunpack.c.l.b16 %v432
    %v792 = vunpack.c.h.b16 %v432
    %v793 = vunpack.c.l.b16 %v433
    %v794 = vunpack.c.h.b16 %v433
    %v795 = vunpack.c.l.b16 %v434
    %v796 = vunpack.c.h.b16 %v434
    %v797 = vunpack.c.l.b16 %v435
    %v798 = vunpack.c.h.b16 %v435
    %v799 = vunpack.c.l.b16 %v436
    %v800 = vunpack.c.h.b16 %v436
    %v801 = vunpack.c.l.b16 %v437
    %v802 = vunpack.c.h.b16 %v437
    %v803 = vunpack.c.l.b16 %v438
    %v804 = vunpack.c.h.b16 %v438
    %v805 = vunpack.c.l.b16 %v439
    %v806 = vunpack.c.h.b16 %v439
    %v807 = vunpack.c.l.b16 %v440
    %v808 = vunpack.c.h.b16 %v440
    %v809 = vunpack.c.l.b16 %v441
    %v810 = vunpack.c.h.b16 %v441
    %v811 = vunpack.c.l.b16 %v442
    %v812 = vunpack.c.h.b16 %v442
    %v813 = vunpack.c.l.b16 %v443
    %v814 = vunpack.c.h.b16 %v443
    %v815 = vunpack.c.l.b16 %v444
    %v816 = vunpack.c.h.b16 %v444
    %v817 = vunpack.c.l.b16 %v445
    %v818 = vunpack.c.h.b16 %v445
    %v819 = vunpack.c.l.b16 %v446
    %v820 = vunpack.c.h.b16 %v446
    %v821 = vunpack.c.l.b16 %v447
    %v822 = vunpack.c.h.b16 %v447
    %v823 = vunpack.c.l.b16 %v448
    %v824 = vunpack.c.h.b16 %v448
    %v825 = vunpack.c.l.b16 %v449
    %v826 = vunpack.c.h.b16 %v449
    %v827 = vunpack.c.l.b16 %v450
    %v828 = vunpack.c.h.b16 %v450
    %v829 = vunpack.c.l.b16 %v451
    %v830 = vunpack.c.h.b16 %v451
    %v831 = vunpack.c.l.b16 %v452
    %v832 = vunpack.c.h.b16 %v452
    %v833 = vunpack.c.l.b16 %v453
    %v834 = vunpack.c.h.b16 %v453
    %v835 = vunpack.c.l.b16 %v454
    %v836 = vunpack.c.h.b16 %v454
    %v837 = vunpack.c.l.b16 %v455
    %v838 = vunpack.c.h.b16 %v455
    %v839 = vunpack.c.l.b16 %v456
    %v840 = vunpack.c.h.b16 %v456
    %v841 = vunpack.c.l.b16 %v457
    %v842 = vunpack.c.h.b16 %v457
    %v843 = vunpack.c.l.b16 %v458
    %v844 = vunpack.c.h.b16 %v458
    %v845 = vunpack.c.l.b16 %v459
    %v846 = vunpack.c.h.b16 %v459
    %v847 = vunpack.c.l.b16 %v460
    %v848 = vunpack.c.h.b16 %v460
    %v849 = vunpack.c.l.b16 %v461
    %v850 = vunpack.c.h.b16 %v461
    %v851 = vunpack.c.l.b16 %v462
    %v852 = vunpack.c.h.b16 %v462
    %v853 = vunpack.c.l.b16 %v463
    %v854 = vunpack.c.h.b16 %v463
    %v855 = vunpack.c.l.b16 %v464
    %v856 = vunpack.c.h.b16 %v464
    %v857 = vunpack.c.l.b16 %v465
    %v858 = vunpack.c.h.b16 %v465
    %v859 = vunpack.c.l.b16 %v466
    %v860 = vunpack.c.h.b16 %v466
    %v861 = vunpack.c.l.b16 %v467
    %v862 = vunpack.c.h.b16 %v467
    %v863 = vunpack.c.l.b16 %v468
    %v864 = vunpack.c.h.b16 %v468
    %v865 = vunpack.c.l.b16 %v469
    %v866 = vunpack.c.h.b16 %v469
    %v867 = vunpack.c.l.b16 %v470
    %v868 = vunpack.c.h.b16 %v470
    %v869 = vunpack.c.l.b16 %v471
    %v870 = vunpack.c.h.b16 %v471
    %v871 = vunpack.c.l.b16 %v472
    %v872 = vunpack.c.h.b16 %v472
    %v873 = vunpack.c.l.b16 %v473
    %v874 = vunpack.c.h.b16 %v473
    %v875 = vunpack.c.l.b16 %v474
    %v876 = vunpack.c.h.b16 %v474
    %v877 = vunpack.c.l.b16 %v475
    %v878 = vunpack.c.h.b16 %v475
    %v879 = vunpack.c.l.b16 %v476
    %v880 = vunpack.c.h.b16 %v476
    %v881 = vunpack.c.l.b16 %v477
    %v882 = vunpack.c.h.b16 %v477
    %v883 = vunpack.c.l.b16 %v478
    %v884 = vunpack.c.h.b16 %v478
    %v885 = vpack.c.b16 %v633, %v629
    %v886 = vpack.c.b16 %v634, %v630
    %v887 = vpack.c.b16 %v635, %v631
    %v888 = vpack.c.b16 %v636, %v632
    %v889 = vpack.c.b16 %v641, %v637
    %v890 = vpack.c.b16 %v642, %v638
    %v891 = vpack.c.b16 %v643, %v639
    %v892 = vpack.c.b16 %v644, %v640
    %v893 = vpack.c.b16 %v649, %v645
    %v894 = vpack.c.b16 %v650, %v646
    %v895 = vpack.c.b16 %v651, %v647
    %v896 = vpack.c.b16 %v652, %v648
    %v897 = vpack.c.b16 %v657, %v653
    %v898 = vpack.c.b16 %v658, %v654
    %v899 = vpack.c.b16 %v659, %v655
    %v900 = vpack.c.b16 %v660, %v656
    %v901 = vpack.c.b16 %v665, %v661
    %v902 = vpack.c.b16 %v666, %v662
    %v903 = vpack.c.b16 %v667, %v663
    %v904 = vpack.c.b16 %v668, %v664
    %v905 = vpack.c.b16 %v673, %v669
    %v906 = vpack.c.b16 %v674, %v670
    %v907 = vpack.c.b16 %v675, %v671
    %v908 = vpack.c.b16 %v676, %v672
    %v909 = vpack.c.b16 %v681, %v677
    %v910 = vpack.c.b16 %v682, %v678
    %v911 = vpack.c.b16 %v683, %v679
    %v912 = vpack.c.b16 %v684, %v680
    %v913 = vpack.c.b16 %v689, %v685
    %v914 = vpack.c.b16 %v690, %v686
    %v915 = vpack.c.b16 %v691, %v687
    %v916 = vpack.c.b16 %v692, %v688
    %v917 = vpack.c.b16 %v697, %v693
    %v918 = vpack.c.b16 %v698, %v694
    %v919 = vpack.c.b16 %v699, %v695
    %v920 = vpack.c.b16 %v700, %v696
    %v921 = vpack.c.b16 %v705, %v701
    %v922 = vpack.c.b16 %v706, %v702
    %v923 = vpack.c.b16 %v707, %v703
    %v924 = vpack.c.b16 %v708, %v704
    %v925 = vpack.c.b16 %v713, %v709
    %v926 = vpack.c.b16 %v714, %v710
    %v927 = vpack.c.b16 %v715, %v711
    %v928 = vpack.c.b16 %v716, %v712
    %v929 = vpack.c.b16 %v721, %v717
    %v930 = vpack.c.b16 %v722, %v718
    %v931 = vpack.c.b16 %v723, %v719
    %v932 = vpack.c.b16 %v724, %v720
    %v933 = vpack.c.b16 %v729, %v725
    %v934 = vpack.c.b16 %v730, %v726
    %v935 = vpack.c.b16 %v731, %v727
    %v936 = vpack.c.b16 %v732, %v728
    %v937 = vpack.c.b16 %v737, %v733
    %v938 = vpack.c.b16 %v738, %v734
    %v939 = vpack.c.b16 %v739, %v735
    %v940 = vpack.c.b16 %v740, %v736
    %v941 = vpack.c.b16 %v745, %v741
    %v942 = vpack.c.b16 %v746, %v742
    %v943 = vpack.c.b16 %v747, %v743
    %v944 = vpack.c.b16 %v748, %v744
    %v945 = vpack.c.b16 %v753, %v749
    %v946 = vpack.c.b16 %v754, %v750
    %v947 = vpack.c.b16 %v755, %v751
    %v948 = vpack.c.b16 %v756, %v752
    %v949 = vpack.c.b16 %v761, %v757
    %v950 = vpack.c.b16 %v762, %v758
    %v951 = vpack.c.b16 %v763, %v759
    %v952 = vpack.c.b16 %v764, %v760
    %v953 = vpack.c.b16 %v769, %v765
    %v954 = vpack.c.b16 %v770, %v766
    %v955 = vpack.c.b16 %v771, %v767
    %v956 = vpack.c.b16 %v772, %v768
    %v957 = vpack.c.b16 %v777, %v773
    %v958 = vpack.c.b16 %v778, %v774
    %v959 = vpack.c.b16 %v779, %v775
    %v960 = vpack.c.b16 %v780, %v776
    %v961 = vpack.c.b16 %v785, %v781
    %v962 = vpack.c.b16 %v786, %v782
    %v963 = vpack.c.b16 %v787, %v783
    %v964 = vpack.c.b16 %v788, %v784
    %v965 = vpack.c.b16 %v793, %v789
    %v966 = vpack.c.b16 %v794, %v790
    %v967 = vpack.c.b16 %v795, %v791
    %v968 = vpack.c.b16 %v796, %v792
    %v969 = vpack.c.b16 %v801, %v797
    %v970 = vpack.c.b16 %v802, %v798
    %v971 = vpack.c.b16 %v803, %v799
    %v972 = vpack.c.b16 %v804, %v800
    %v973 = vpack.c.b16 %v809, %v805
    %v974 = vpack.c.b16 %v810, %v806
    %v975 = vpack.c.b16 %v811, %v807
    %v976 = vpack.c.b16 %v812, %v808
    %v977 = vpack.c.b16 %v817, %v813
    %v978 = vpack.c.b16 %v818, %v814
    %v979 = vpack.c.b16 %v819, %v815
    %v980 = vpack.c.b16 %v820, %v816
    %v981 = vpack.c.b16 %v825, %v821
    %v982 = vpack.c.b16 %v826, %v822
    %v983 = vpack.c.b16 %v827, %v823
    %v984 = vpack.c.b16 %v828, %v824
    %v985 = vpack.c.b16 %v833, %v829
    %v986 = vpack.c.b16 %v834, %v830
    %v987 = vpack.c.b16 %v835, %v831
    %v988 = vpack.c.b16 %v836, %v832
    %v989 = vpack.c.b16 %v841, %v837
    %v990 = vpack.c.b16 %v842, %v838
    %v991 = vpack.c.b16 %v843, %v839
    %v992 = vpack.c.b16 %v844, %v840
    %v993 = vpack.c.b16 %v849, %v845
    %v994 = vpack.c.b16 %v850, %v846
    %v995 = vpack.c.b16 %v851, %v847
    %v996 = vpack.c.b16 %v852, %v848
    %v997 = vpack.c.b16 %v857, %v853
    %v998 = vpack.c.b16 %v858, %v854
    %v999 = vpack.c.b16 %v859, %v855
    %v1000 = vpack.c.b16 %v860, %v856
    %v1001 = vpack.c.b16 %v865, %v861
    %v1002 = vpack.c.b16 %v866, %v862
    %v1003 = vpack.c.b16 %v867, %v863
    %v1004 = vpack.c.b16 %v868, %v864
    %v1005 = vpack.c.b16 %v873, %v869
    %v1006 = vpack.c.b16 %v874, %v870
    %v1007 = vpack.c.b16 %v875, %v871
    %v1008 = vpack.c.b16 %v876, %v872
    %v1009 = vpack.c.b16 %v881, %v877
    %v1010 = vpack.c.b16 %v882, %v878
    %v1011 = vpack.c.b16 %v883, %v879
    %v1012 = vpack.c.b16 %v884, %v880
    %1141 = vmatprep.subr.bf16.mxu0 %v914
    %1142 = vmatpush1.bf16.msra.mxu0 %v913
    %1143 = vmatprep.subr.bf16.mxu0 %v910
    %1144 = vmatpush1.bf16.msra.mxu0 %v909
    %1145 = vmatprep.subr.bf16.mxu0 %v906
    %1146 = vmatpush1.bf16.msra.mxu0 %v905
    %1147 = vmatprep.subr.bf16.mxu0 %v902
    %1148 = vmatpush1.bf16.msra.mxu0 %v901
    %1149 = vmatprep.subr.bf16.mxu0 %v898
    %1150 = vmatpush1.bf16.msra.mxu0 %v897
    %1151 = vmatprep.subr.bf16.mxu0 %v894
    %1152 = vmatpush1.bf16.msra.mxu0 %v893
    %1153 = vmatprep.subr.bf16.mxu0 %v890
    %1154 = vmatpush1.bf16.msra.mxu0 %v889
    %1155 = vmatprep.subr.bf16.mxu0 %v886
    %1156 = vmatpush1.bf16.msra.mxu0 %v885
    %1157 = vmatprep.subr.bf16.mxu0 %v946
    %1158 = vmatpush2.bf16.msra.mxu0 %v945
    %1159 = vmatprep.subr.bf16.mxu0 %v942
    %1160 = vmatpush2.bf16.msra.mxu0 %v941
    %1161 = vmatprep.subr.bf16.mxu0 %v938
    %1162 = vmatpush2.bf16.msra.mxu0 %v937
    %1163 = vmatprep.subr.bf16.mxu0 %v934
    %1164 = vmatpush2.bf16.msra.mxu0 %v933
    %1165 = vmatprep.subr.bf16.mxu0 %v930
    %1166 = vmatpush2.bf16.msra.mxu0 %v929
    %1167 = vmatprep.subr.bf16.mxu0 %v926
    %1168 = vmatpush2.bf16.msra.mxu0 %v925
    %1169 = vmatprep.subr.bf16.mxu0 %v922
    %1170 = vmatpush2.bf16.msra.mxu0 %v921
    %1171 = vmatprep.subr.bf16.mxu0 %v918
    %1172 = vmatpush2.bf16.msra.mxu0 %v917
    %1173 = vmatprep.mubr.bf16.mxu0 %v348
    %1174 = vmatmul.mubr.bf16.gmra.mxu0 %v347
    %v1175 = vpop.f32.mrf.mxu0
    %v1176 = vadd.f32 %v484, %v1175
    %v1177 = vpop.f32.mrf.mxu0
    %v1178 = vadd.f32 %v488, %v1177
    %v1179 = vpop.f32.mrf.mxu0
    %v1180 = vpop.f32.mrf.mxu0
    %1181 = vdwg.mxu0
    %1182 = vmatprep.subr.bf16.mxu0 %v978
    %1183 = vmatpush1.bf16.msra.mxu0 %v977
    %1184 = vmatprep.subr.bf16.mxu0 %v974
    %1185 = vmatpush1.bf16.msra.mxu0 %v973
    %1186 = vmatprep.subr.bf16.mxu0 %v970
    %1187 = vmatpush1.bf16.msra.mxu0 %v969
    %1188 = vmatprep.subr.bf16.mxu0 %v966
    %1189 = vmatpush1.bf16.msra.mxu0 %v965
    %1190 = vmatprep.subr.bf16.mxu0 %v962
    %1191 = vmatpush1.bf16.msra.mxu0 %v961
    %1192 = vmatprep.subr.bf16.mxu0 %v958
    %1193 = vmatpush1.bf16.msra.mxu0 %v957
    %1194 = vmatprep.subr.bf16.mxu0 %v954
    %1195 = vmatpush1.bf16.msra.mxu0 %v953
    %1196 = vmatprep.subr.bf16.mxu0 %v950
    %1197 = vmatpush1.bf16.msra.mxu0 %v949
    %1198 = vmatprep.subr.bf16.mxu0 %v1010
    %1199 = vmatpush2.bf16.msra.mxu0 %v1009
    %1200 = vmatprep.subr.bf16.mxu0 %v1006
    %1201 = vmatpush2.bf16.msra.mxu0 %v1005
    %1202 = vmatprep.subr.bf16.mxu0 %v1002
    %1203 = vmatpush2.bf16.msra.mxu0 %v1001
    %1204 = vmatprep.subr.bf16.mxu0 %v998
    %1205 = vmatpush2.bf16.msra.mxu0 %v997
    %1206 = vmatprep.subr.bf16.mxu0 %v994
    %1207 = vmatpush2.bf16.msra.mxu0 %v993
    %1208 = vmatprep.subr.bf16.mxu0 %v990
    %1209 = vmatpush2.bf16.msra.mxu0 %v989
    %1210 = vmatprep.subr.bf16.mxu0 %v986
    %1211 = vmatpush2.bf16.msra.mxu0 %v985
    %1212 = vmatprep.subr.bf16.mxu0 %v982
    %1213 = vmatpush2.bf16.msra.mxu0 %v981
    %1214 = vmatprep.mubr.bf16.mxu0 %v350
    %1215 = vmatmul.mubr.bf16.gmra.mxu0 %v349
    %v1216 = vpop.f32.mrf.mxu0
    %v1217 = vadd.f32 %v1176, %v1216
    %v1218 = vpop.f32.mrf.mxu0
    %v1219 = vadd.f32 %v1178, %v1218
    %v1220 = vpop.f32.mrf.mxu0
    %v1221 = vpop.f32.mrf.mxu0
    %1222 = vdwg.mxu0
    %1223 = vmatprep.subr.bf16.mxu0 %v916
    %1224 = vmatpush1.bf16.msra.mxu0 %v915
    %1225 = vmatprep.subr.bf16.mxu0 %v912
    %1226 = vmatpush1.bf16.msra.mxu0 %v911
    %1227 = vmatprep.subr.bf16.mxu0 %v908
    %1228 = vmatpush1.bf16.msra.mxu0 %v907
    %1229 = vmatprep.subr.bf16.mxu0 %v904
    %1230 = vmatpush1.bf16.msra.mxu0 %v903
    %1231 = vmatprep.subr.bf16.mxu0 %v900
    %1232 = vmatpush1.bf16.msra.mxu0 %v899
    %1233 = vmatprep.subr.bf16.mxu0 %v896
    %1234 = vmatpush1.bf16.msra.mxu0 %v895
    %1235 = vmatprep.subr.bf16.mxu0 %v892
    %1236 = vmatpush1.bf16.msra.mxu0 %v891
    %1237 = vmatprep.subr.bf16.mxu0 %v888
    %1238 = vmatpush1.bf16.msra.mxu0 %v887
    %1239 = vmatprep.subr.bf16.mxu0 %v948
    %1240 = vmatpush2.bf16.msra.mxu0 %v947
    %1241 = vmatprep.subr.bf16.mxu0 %v944
    %1242 = vmatpush2.bf16.msra.mxu0 %v943
    %1243 = vmatprep.subr.bf16.mxu0 %v940
    %1244 = vmatpush2.bf16.msra.mxu0 %v939
    %1245 = vmatprep.subr.bf16.mxu0 %v936
    %1246 = vmatpush2.bf16.msra.mxu0 %v935
    %1247 = vmatprep.subr.bf16.mxu0 %v932
    %1248 = vmatpush2.bf16.msra.mxu0 %v931
    %1249 = vmatprep.subr.bf16.mxu0 %v928
    %1250 = vmatpush2.bf16.msra.mxu0 %v927
    %1251 = vmatprep.subr.bf16.mxu0 %v924
    %1252 = vmatpush2.bf16.msra.mxu0 %v923
    %1253 = vmatprep.subr.bf16.mxu0 %v920
    %1254 = vmatpush2.bf16.msra.mxu0 %v919
    %1255 = vmatprep.mubr.bf16.mxu0 %v348
    %1256 = vmatmul.mubr.bf16.gmra.mxu0 %v347
    %v1257 = vpop.f32.mrf.mxu0
    %v1258 = vadd.f32 %v492, %v1257
    %v1259 = vpop.f32.mrf.mxu0
    %v1260 = vadd.f32 %v496, %v1259
    %v1261 = vpop.f32.mrf.mxu0
    %v1262 = vpop.f32.mrf.mxu0
    %1263 = vdwg.mxu0
    %1264 = vmatprep.subr.bf16.mxu0 %v980
    %1265 = vmatpush1.bf16.msra.mxu0 %v979
    %1266 = vmatprep.subr.bf16.mxu0 %v976
    %1267 = vmatpush1.bf16.msra.mxu0 %v975
    %1268 = vmatprep.subr.bf16.mxu0 %v972
    %1269 = vmatpush1.bf16.msra.mxu0 %v971
    %1270 = vmatprep.subr.bf16.mxu0 %v968
    %1271 = vmatpush1.bf16.msra.mxu0 %v967
    %1272 = vmatprep.subr.bf16.mxu0 %v964
    %1273 = vmatpush1.bf16.msra.mxu0 %v963
    %1274 = vmatprep.subr.bf16.mxu0 %v960
    %1275 = vmatpush1.bf16.msra.mxu0 %v959
    %1276 = vmatprep.subr.bf16.mxu0 %v956
    %1277 = vmatpush1.bf16.msra.mxu0 %v955
    %1278 = vmatprep.subr.bf16.mxu0 %v952
    %1279 = vmatpush1.bf16.msra.mxu0 %v951
    %1280 = vmatprep.subr.bf16.mxu0 %v1012
    %1281 = vmatpush2.bf16.msra.mxu0 %v1011
    %1282 = vmatprep.subr.bf16.mxu0 %v1008
    %1283 = vmatpush2.bf16.msra.mxu0 %v1007
    %1284 = vmatprep.subr.bf16.mxu0 %v1004
    %1285 = vmatpush2.bf16.msra.mxu0 %v1003
    %1286 = vmatprep.subr.bf16.mxu0 %v1000
    %1287 = vmatpush2.bf16.msra.mxu0 %v999
    %1288 = vmatprep.subr.bf16.mxu0 %v996
    %1289 = vmatpush2.bf16.msra.mxu0 %v995
    %1290 = vmatprep.subr.bf16.mxu0 %v992
    %1291 = vmatpush2.bf16.msra.mxu0 %v991
    %1292 = vmatprep.subr.bf16.mxu0 %v988
    %1293 = vmatpush2.bf16.msra.mxu0 %v987
    %1294 = vmatprep.subr.bf16.mxu0 %v984
    %1295 = vmatpush2.bf16.msra.mxu0 %v983
    %1296 = vmatprep.mubr.bf16.mxu0 %v350
    %1297 = vmatmul.mubr.bf16.gmra.mxu0 %v349
    %v1298 = vpop.f32.mrf.mxu0
    %v1299 = vadd.f32 %v1258, %v1298
    %v1300 = vpop.f32.mrf.mxu0
    %v1301 = vadd.f32 %v1260, %v1300
    %v1302 = vpop.f32.mrf.mxu0
    %v1303 = vpop.f32.mrf.mxu0
    %1304 = vdwg.mxu0
    %v1305 = vadd.f32 %v1217, %v1219
    %v1306 = vadd.f32 %v1305, %v1299
    %v1307 = vadd.f32 %v1306, %v1301
    %1308 = vadd.xlane.f32.xlu0 %v1307
    %v1309 = vpop.xlane.xlu0 %1308
    %v1310 = vmul.f32 %v1309, %v273
    %v1311 = vsub.f32 %v1217, %v1310
    %v1312 = vsub.f32 %v1219, %v1310
    %v1313 = vsub.f32 %v1299, %v1310
    %v1314 = vsub.f32 %v1301, %v1310
    %v1315 = vmul.f32 %v1311, %v1311
    %v1316 = vmul.f32 %v1312, %v1312
    %v1317 = vmul.f32 %v1313, %v1313
    %v1318 = vmul.f32 %v1314, %v1314
    %v1319 = vadd.f32 %v1315, %v1316
    %v1320 = vadd.f32 %v1319, %v1317
    %v1321 = vadd.f32 %v1320, %v1318
    %1322 = vadd.xlane.f32.xlu0 %v1321
    %v1323 = vpop.xlane.xlu0 %1322
    %v1324 = vmul.f32 %v1323, %v273
    %v1325 = vadd.f32 %v1324, 1e-05
    %v1326 = vrsqrt.pop %v1325
    %v1327 = vmul.f32 %v1311, %v1326
    %v1328 = vmul.f32 %v1312, %v1326
    %v1329 = vmul.f32 %v1313, %v1326
    %v1330 = vmul.f32 %v1314, %v1326
    %v1331 = vld [vmem:[%s8] sm:$0xf]
    %v1333 = vlaneseq
    %v1334 = vshrl.u32 %v1333, 7
    %v1335 = vsub.s32 0, %v1334
    %v1336 = vrot.slane %v1331, %v1335
    %v1337 = vlaneseq
    %v1338 = vshrl.u32 %v1337, 7
    %v1339 = vsub.s32 1, %v1338
    %v1340 = vrot.slane %v1331, %v1339
    %v1341 = vlaneseq
    %v1342 = vshrl.u32 %v1341, 7
    %v1343 = vsub.s32 2, %v1342
    %v1344 = vrot.slane %v1331, %v1343
    %v1345 = vlaneseq
    %v1346 = vshrl.u32 %v1345, 7
    %v1347 = vsub.s32 3, %v1346
    %v1348 = vrot.slane %v1331, %v1347
    %v1353 = vmul.f32 %v1327, %v1336
    %v1354 = vmul.f32 %v1328, %v1340
    %v1355 = vmul.f32 %v1329, %v1344
    %v1356 = vmul.f32 %v1330, %v1348
    %v1357 = vld [vmem:[%s9] sm:$0xf]
    %v1359 = vlaneseq
    %v1360 = vshrl.u32 %v1359, 7
    %v1361 = vsub.s32 0, %v1360
    %v1362 = vrot.slane %v1357, %v1361
    %v1363 = vlaneseq
    %v1364 = vshrl.u32 %v1363, 7
    %v1365 = vsub.s32 1, %v1364
    %v1366 = vrot.slane %v1357, %v1365
    %v1367 = vlaneseq
    %v1368 = vshrl.u32 %v1367, 7
    %v1369 = vsub.s32 2, %v1368
    %v1370 = vrot.slane %v1357, %v1369
    %v1371 = vlaneseq
    %v1372 = vshrl.u32 %v1371, 7
    %v1373 = vsub.s32 3, %v1372
    %v1374 = vrot.slane %v1357, %v1373
    %v1379 = vadd.f32 %v1353, %v1362
    %v1380 = vadd.f32 %v1354, %v1366
    %v1381 = vadd.f32 %v1355, %v1370
    %v1382 = vadd.f32 %v1356, %v1374
    %v1383 = vxor.u32 %v1379, 2147483648
    %v1384 = vxor.u32 %v1380, 2147483648
    %v1385 = vxor.u32 %v1381, 2147483648
    %v1386 = vxor.u32 %v1382, 2147483648
    %v1387 = vmul.f32 %v1383, 1.442695
    %v1388 = vpow.pop %v1387
    %v1389 = vmul.f32 %v1384, 1.442695
    %v1390 = vpow.pop %v1389
    %v1391 = vmul.f32 %v1385, 1.442695
    %v1392 = vpow.pop %v1391
    %v1393 = vmul.f32 %v1386, 1.442695
    %v1394 = vpow.pop %v1393
    %v1395 = vadd.f32 %v1388, 1.0
    %v1396 = vadd.f32 %v1390, 1.0
    %v1397 = vadd.f32 %v1392, 1.0
    %v1398 = vadd.f32 %v1394, 1.0
    %v1399 = vrcp.pop %v1395
    %v1400 = vmul.f32 1.0, %v1399
    %v1401 = vrcp.pop %v1396
    %v1402 = vmul.f32 1.0, %v1401
    %v1403 = vrcp.pop %v1397
    %v1404 = vmul.f32 1.0, %v1403
    %v1405 = vrcp.pop %v1398
    %v1406 = vmul.f32 1.0, %v1405
    %v1407 = vmul.f32 %v1379, %v1400
    %v1408 = vmul.f32 %v1380, %v1402
    %v1409 = vmul.f32 %v1381, %v1404
    %v1410 = vmul.f32 %v1382, %v1406
    %v1411 = vpack.c.bf16 %v1407, %v1407
    %v1412 = vpack.c.bf16 %v1408, %v1408
    %v1413 = vpack.c.bf16 %v1409, %v1409
    %v1414 = vpack.c.bf16 %v1410, %v1410
    %v1415 = vld [vmem:[#allocation2] sm:$0xff]
    %v1416 = vld [vmem:[#allocation2 + $0x8] sm:$0xff]
    %v1417 = vld [vmem:[#allocation2 + $0x10] sm:$0xff]
    %v1418 = vld [vmem:[#allocation2 + $0x18] sm:$0xff]
    %v1419 = vld [vmem:[#allocation2 + $0x20] sm:$0xff]
    %v1420 = vld [vmem:[#allocation2 + $0x28] sm:$0xff]
    %v1421 = vld [vmem:[#allocation2 + $0x30] sm:$0xff]
    %v1422 = vld [vmem:[#allocation2 + $0x38] sm:$0xff]
    %v1423 = vld [vmem:[#allocation2 + $0x40] sm:$0xff]
    %v1424 = vld [vmem:[#allocation2 + $0x48] sm:$0xff]
    %v1425 = vld [vmem:[#allocation2 + $0x50] sm:$0xff]
    %v1426 = vld [vmem:[#allocation2 + $0x58] sm:$0xff]
    %v1427 = vld [vmem:[#allocation2 + $0x60] sm:$0xff]
    %v1428 = vld [vmem:[#allocation2 + $0x68] sm:$0xff]
    %v1429 = vld [vmem:[#allocation2 + $0x70] sm:$0xff]
    %v1430 = vld [vmem:[#allocation2 + $0x78] sm:$0xff]
    %v1431 = vld [vmem:[#allocation2 + $0x80] sm:$0xff]
    %v1432 = vld [vmem:[#allocation2 + $0x88] sm:$0xff]
    %v1433 = vld [vmem:[#allocation2 + $0x90] sm:$0xff]
    %v1434 = vld [vmem:[#allocation2 + $0x98] sm:$0xff]
    %v1435 = vld [vmem:[#allocation2 + $0xa0] sm:$0xff]
    %v1436 = vld [vmem:[#allocation2 + $0xa8] sm:$0xff]
    %v1437 = vld [vmem:[#allocation2 + $0xb0] sm:$0xff]
    %v1438 = vld [vmem:[#allocation2 + $0xb8] sm:$0xff]
    %v1439 = vld [vmem:[#allocation2 + $0xc0] sm:$0xff]
    %v1440 = vld [vmem:[#allocation2 + $0xc8] sm:$0xff]
    %v1441 = vld [vmem:[#allocation2 + $0xd0] sm:$0xff]
    %v1442 = vld [vmem:[#allocation2 + $0xd8] sm:$0xff]
    %v1443 = vld [vmem:[#allocation2 + $0xe0] sm:$0xff]
    %v1444 = vld [vmem:[#allocation2 + $0xe8] sm:$0xff]
    %v1445 = vld [vmem:[#allocation2 + $0xf0] sm:$0xff]
    %v1446 = vld [vmem:[#allocation2 + $0xf8] sm:$0xff]
    %v1447 = vld [vmem:[#allocation2 + $0x100] sm:$0xff]
    %v1448 = vld [vmem:[#allocation2 + $0x108] sm:$0xff]
    %v1449 = vld [vmem:[#allocation2 + $0x110] sm:$0xff]
    %v1450 = vld [vmem:[#allocation2 + $0x118] sm:$0xff]
    %v1451 = vld [vmem:[#allocation2 + $0x120] sm:$0xff]
    %v1452 = vld [vmem:[#allocation2 + $0x128] sm:$0xff]
    %v1453 = vld [vmem:[#allocation2 + $0x130] sm:$0xff]
    %v1454 = vld [vmem:[#allocation2 + $0x138] sm:$0xff]
    %v1455 = vld [vmem:[#allocation2 + $0x140] sm:$0xff]
    %v1456 = vld [vmem:[#allocation2 + $0x148] sm:$0xff]
    %v1457 = vld [vmem:[#allocation2 + $0x150] sm:$0xff]
    %v1458 = vld [vmem:[#allocation2 + $0x158] sm:$0xff]
    %v1459 = vld [vmem:[#allocation2 + $0x160] sm:$0xff]
    %v1460 = vld [vmem:[#allocation2 + $0x168] sm:$0xff]
    %v1461 = vld [vmem:[#allocation2 + $0x170] sm:$0xff]
    %v1462 = vld [vmem:[#allocation2 + $0x178] sm:$0xff]
    %v1463 = vld [vmem:[#allocation2 + $0x180] sm:$0xff]
    %v1464 = vld [vmem:[#allocation2 + $0x188] sm:$0xff]
    %v1465 = vld [vmem:[#allocation2 + $0x190] sm:$0xff]
    %v1466 = vld [vmem:[#allocation2 + $0x198] sm:$0xff]
    %v1467 = vld [vmem:[#allocation2 + $0x1a0] sm:$0xff]
    %v1468 = vld [vmem:[#allocation2 + $0x1a8] sm:$0xff]
    %v1469 = vld [vmem:[#allocation2 + $0x1b0] sm:$0xff]
    %v1470 = vld [vmem:[#allocation2 + $0x1b8] sm:$0xff]
    %v1471 = vld [vmem:[#allocation2 + $0x1c0] sm:$0xff]
    %v1472 = vld [vmem:[#allocation2 + $0x1c8] sm:$0xff]
    %v1473 = vld [vmem:[#allocation2 + $0x1d0] sm:$0xff]
    %v1474 = vld [vmem:[#allocation2 + $0x1d8] sm:$0xff]
    %v1475 = vld [vmem:[#allocation2 + $0x1e0] sm:$0xff]
    %v1476 = vld [vmem:[#allocation2 + $0x1e8] sm:$0xff]
    %v1477 = vld [vmem:[#allocation2 + $0x1f0] sm:$0xff]
    %v1478 = vld [vmem:[#allocation2 + $0x1f8] sm:$0xff]
    %v1479 = vld [vmem:[#allocation2 + $0x200] sm:$0xff]
    %v1480 = vld [vmem:[#allocation2 + $0x208] sm:$0xff]
    %v1481 = vld [vmem:[#allocation2 + $0x210] sm:$0xff]
    %v1482 = vld [vmem:[#allocation2 + $0x218] sm:$0xff]
    %v1483 = vld [vmem:[#allocation2 + $0x220] sm:$0xff]
    %v1484 = vld [vmem:[#allocation2 + $0x228] sm:$0xff]
    %v1485 = vld [vmem:[#allocation2 + $0x230] sm:$0xff]
    %v1486 = vld [vmem:[#allocation2 + $0x238] sm:$0xff]
    %v1487 = vld [vmem:[#allocation2 + $0x240] sm:$0xff]
    %v1488 = vld [vmem:[#allocation2 + $0x248] sm:$0xff]
    %v1489 = vld [vmem:[#allocation2 + $0x250] sm:$0xff]
    %v1490 = vld [vmem:[#allocation2 + $0x258] sm:$0xff]
    %v1491 = vld [vmem:[#allocation2 + $0x260] sm:$0xff]
    %v1492 = vld [vmem:[#allocation2 + $0x268] sm:$0xff]
    %v1493 = vld [vmem:[#allocation2 + $0x270] sm:$0xff]
    %v1494 = vld [vmem:[#allocation2 + $0x278] sm:$0xff]
    %v1495 = vld [vmem:[#allocation2 + $0x280] sm:$0xff]
    %v1496 = vld [vmem:[#allocation2 + $0x288] sm:$0xff]
    %v1497 = vld [vmem:[#allocation2 + $0x290] sm:$0xff]
    %v1498 = vld [vmem:[#allocation2 + $0x298] sm:$0xff]
    %v1499 = vld [vmem:[#allocation2 + $0x2a0] sm:$0xff]
    %v1500 = vld [vmem:[#allocation2 + $0x2a8] sm:$0xff]
    %v1501 = vld [vmem:[#allocation2 + $0x2b0] sm:$0xff]
    %v1502 = vld [vmem:[#allocation2 + $0x2b8] sm:$0xff]
    %v1503 = vld [vmem:[#allocation2 + $0x2c0] sm:$0xff]
    %v1504 = vld [vmem:[#allocation2 + $0x2c8] sm:$0xff]
    %v1505 = vld [vmem:[#allocation2 + $0x2d0] sm:$0xff]
    %v1506 = vld [vmem:[#allocation2 + $0x2d8] sm:$0xff]
    %v1507 = vld [vmem:[#allocation2 + $0x2e0] sm:$0xff]
    %v1508 = vld [vmem:[#allocation2 + $0x2e8] sm:$0xff]
    %v1509 = vld [vmem:[#allocation2 + $0x2f0] sm:$0xff]
    %v1510 = vld [vmem:[#allocation2 + $0x2f8] sm:$0xff]
    %v1511 = vld [vmem:[#allocation2 + $0x300] sm:$0xff]
    %v1512 = vld [vmem:[#allocation2 + $0x308] sm:$0xff]
    %v1513 = vld [vmem:[#allocation2 + $0x310] sm:$0xff]
    %v1514 = vld [vmem:[#allocation2 + $0x318] sm:$0xff]
    %v1515 = vld [vmem:[#allocation2 + $0x320] sm:$0xff]
    %v1516 = vld [vmem:[#allocation2 + $0x328] sm:$0xff]
    %v1517 = vld [vmem:[#allocation2 + $0x330] sm:$0xff]
    %v1518 = vld [vmem:[#allocation2 + $0x338] sm:$0xff]
    %v1519 = vld [vmem:[#allocation2 + $0x340] sm:$0xff]
    %v1520 = vld [vmem:[#allocation2 + $0x348] sm:$0xff]
    %v1521 = vld [vmem:[#allocation2 + $0x350] sm:$0xff]
    %v1522 = vld [vmem:[#allocation2 + $0x358] sm:$0xff]
    %v1523 = vld [vmem:[#allocation2 + $0x360] sm:$0xff]
    %v1524 = vld [vmem:[#allocation2 + $0x368] sm:$0xff]
    %v1525 = vld [vmem:[#allocation2 + $0x370] sm:$0xff]
    %v1526 = vld [vmem:[#allocation2 + $0x378] sm:$0xff]
    %v1527 = vld [vmem:[#allocation2 + $0x380] sm:$0xff]
    %v1528 = vld [vmem:[#allocation2 + $0x388] sm:$0xff]
    %v1529 = vld [vmem:[#allocation2 + $0x390] sm:$0xff]
    %v1530 = vld [vmem:[#allocation2 + $0x398] sm:$0xff]
    %v1531 = vld [vmem:[#allocation2 + $0x3a0] sm:$0xff]
    %v1532 = vld [vmem:[#allocation2 + $0x3a8] sm:$0xff]
    %v1533 = vld [vmem:[#allocation2 + $0x3b0] sm:$0xff]
    %v1534 = vld [vmem:[#allocation2 + $0x3b8] sm:$0xff]
    %v1535 = vld [vmem:[#allocation2 + $0x3c0] sm:$0xff]
    %v1536 = vld [vmem:[#allocation2 + $0x3c8] sm:$0xff]
    %v1537 = vld [vmem:[#allocation2 + $0x3d0] sm:$0xff]
    %v1538 = vld [vmem:[#allocation2 + $0x3d8] sm:$0xff]
    %v1539 = vld [vmem:[#allocation2 + $0x3e0] sm:$0xff]
    %v1540 = vld [vmem:[#allocation2 + $0x3e8] sm:$0xff]
    %v1541 = vld [vmem:[#allocation2 + $0x3f0] sm:$0xff]
    %v1542 = vld [vmem:[#allocation2 + $0x3f8] sm:$0xff]
    %v1543 = vld [vmem:[%s11] sm:$0xf]
    %v1545 = vlaneseq
    %v1546 = vshrl.u32 %v1545, 7
    %v1547 = vsub.s32 0, %v1546
    %v1548 = vrot.slane %v1543, %v1547
    %v1549 = vlaneseq
    %v1550 = vshrl.u32 %v1549, 7
    %v1551 = vsub.s32 1, %v1550
    %v1552 = vrot.slane %v1543, %v1551
    %v1553 = vlaneseq
    %v1554 = vshrl.u32 %v1553, 7
    %v1555 = vsub.s32 2, %v1554
    %v1556 = vrot.slane %v1543, %v1555
    %v1557 = vlaneseq
    %v1558 = vshrl.u32 %v1557, 7
    %v1559 = vsub.s32 3, %v1558
    %v1560 = vrot.slane %v1543, %v1559
    %v1693 = vunpack.c.l.b16 %v1415
    %v1694 = vunpack.c.h.b16 %v1415
    %v1695 = vunpack.c.l.b16 %v1416
    %v1696 = vunpack.c.h.b16 %v1416
    %v1697 = vunpack.c.l.b16 %v1417
    %v1698 = vunpack.c.h.b16 %v1417
    %v1699 = vunpack.c.l.b16 %v1418
    %v1700 = vunpack.c.h.b16 %v1418
    %v1701 = vunpack.c.l.b16 %v1419
    %v1702 = vunpack.c.h.b16 %v1419
    %v1703 = vunpack.c.l.b16 %v1420
    %v1704 = vunpack.c.h.b16 %v1420
    %v1705 = vunpack.c.l.b16 %v1421
    %v1706 = vunpack.c.h.b16 %v1421
    %v1707 = vunpack.c.l.b16 %v1422
    %v1708 = vunpack.c.h.b16 %v1422
    %v1709 = vunpack.c.l.b16 %v1423
    %v1710 = vunpack.c.h.b16 %v1423
    %v1711 = vunpack.c.l.b16 %v1424
    %v1712 = vunpack.c.h.b16 %v1424
    %v1713 = vunpack.c.l.b16 %v1425
    %v1714 = vunpack.c.h.b16 %v1425
    %v1715 = vunpack.c.l.b16 %v1426
    %v1716 = vunpack.c.h.b16 %v1426
    %v1717 = vunpack.c.l.b16 %v1427
    %v1718 = vunpack.c.h.b16 %v1427
    %v1719 = vunpack.c.l.b16 %v1428
    %v1720 = vunpack.c.h.b16 %v1428
    %v1721 = vunpack.c.l.b16 %v1429
    %v1722 = vunpack.c.h.b16 %v1429
    %v1723 = vunpack.c.l.b16 %v1430
    %v1724 = vunpack.c.h.b16 %v1430
    %v1725 = vunpack.c.l.b16 %v1431
    %v1726 = vunpack.c.h.b16 %v1431
    %v1727 = vunpack.c.l.b16 %v1432
    %v1728 = vunpack.c.h.b16 %v1432
    %v1729 = vunpack.c.l.b16 %v1433
    %v1730 = vunpack.c.h.b16 %v1433
    %v1731 = vunpack.c.l.b16 %v1434
    %v1732 = vunpack.c.h.b16 %v1434
    %v1733 = vunpack.c.l.b16 %v1435
    %v1734 = vunpack.c.h.b16 %v1435
    %v1735 = vunpack.c.l.b16 %v1436
    %v1736 = vunpack.c.h.b16 %v1436
    %v1737 = vunpack.c.l.b16 %v1437
    %v1738 = vunpack.c.h.b16 %v1437
    %v1739 = vunpack.c.l.b16 %v1438
    %v1740 = vunpack.c.h.b16 %v1438
    %v1741 = vunpack.c.l.b16 %v1439
    %v1742 = vunpack.c.h.b16 %v1439
    %v1743 = vunpack.c.l.b16 %v1440
    %v1744 = vunpack.c.h.b16 %v1440
    %v1745 = vunpack.c.l.b16 %v1441
    %v1746 = vunpack.c.h.b16 %v1441
    %v1747 = vunpack.c.l.b16 %v1442
    %v1748 = vunpack.c.h.b16 %v1442
    %v1749 = vunpack.c.l.b16 %v1443
    %v1750 = vunpack.c.h.b16 %v1443
    %v1751 = vunpack.c.l.b16 %v1444
    %v1752 = vunpack.c.h.b16 %v1444
    %v1753 = vunpack.c.l.b16 %v1445
    %v1754 = vunpack.c.h.b16 %v1445
    %v1755 = vunpack.c.l.b16 %v1446
    %v1756 = vunpack.c.h.b16 %v1446
    %v1757 = vunpack.c.l.b16 %v1447
    %v1758 = vunpack.c.h.b16 %v1447
    %v1759 = vunpack.c.l.b16 %v1448
    %v1760 = vunpack.c.h.b16 %v1448
    %v1761 = vunpack.c.l.b16 %v1449
    %v1762 = vunpack.c.h.b16 %v1449
    %v1763 = vunpack.c.l.b16 %v1450
    %v1764 = vunpack.c.h.b16 %v1450
    %v1765 = vunpack.c.l.b16 %v1451
    %v1766 = vunpack.c.h.b16 %v1451
    %v1767 = vunpack.c.l.b16 %v1452
    %v1768 = vunpack.c.h.b16 %v1452
    %v1769 = vunpack.c.l.b16 %v1453
    %v1770 = vunpack.c.h.b16 %v1453
    %v1771 = vunpack.c.l.b16 %v1454
    %v1772 = vunpack.c.h.b16 %v1454
    %v1773 = vunpack.c.l.b16 %v1455
    %v1774 = vunpack.c.h.b16 %v1455
    %v1775 = vunpack.c.l.b16 %v1456
    %v1776 = vunpack.c.h.b16 %v1456
    %v1777 = vunpack.c.l.b16 %v1457
    %v1778 = vunpack.c.h.b16 %v1457
    %v1779 = vunpack.c.l.b16 %v1458
    %v1780 = vunpack.c.h.b16 %v1458
    %v1781 = vunpack.c.l.b16 %v1459
    %v1782 = vunpack.c.h.b16 %v1459
    %v1783 = vunpack.c.l.b16 %v1460
    %v1784 = vunpack.c.h.b16 %v1460
    %v1785 = vunpack.c.l.b16 %v1461
    %v1786 = vunpack.c.h.b16 %v1461
    %v1787 = vunpack.c.l.b16 %v1462
    %v1788 = vunpack.c.h.b16 %v1462
    %v1789 = vunpack.c.l.b16 %v1463
    %v1790 = vunpack.c.h.b16 %v1463
    %v1791 = vunpack.c.l.b16 %v1464
    %v1792 = vunpack.c.h.b16 %v1464
    %v1793 = vunpack.c.l.b16 %v1465
    %v1794 = vunpack.c.h.b16 %v1465
    %v1795 = vunpack.c.l.b16 %v1466
    %v1796 = vunpack.c.h.b16 %v1466
    %v1797 = vunpack.c.l.b16 %v1467
    %v1798 = vunpack.c.h.b16 %v1467
    %v1799 = vunpack.c.l.b16 %v1468
    %v1800 = vunpack.c.h.b16 %v1468
    %v1801 = vunpack.c.l.b16 %v1469
    %v1802 = vunpack.c.h.b16 %v1469
    %v1803 = vunpack.c.l.b16 %v1470
    %v1804 = vunpack.c.h.b16 %v1470
    %v1805 = vunpack.c.l.b16 %v1471
    %v1806 = vunpack.c.h.b16 %v1471
    %v1807 = vunpack.c.l.b16 %v1472
    %v1808 = vunpack.c.h.b16 %v1472
    %v1809 = vunpack.c.l.b16 %v1473
    %v1810 = vunpack.c.h.b16 %v1473
    %v1811 = vunpack.c.l.b16 %v1474
    %v1812 = vunpack.c.h.b16 %v1474
    %v1813 = vunpack.c.l.b16 %v1475
    %v1814 = vunpack.c.h.b16 %v1475
    %v1815 = vunpack.c.l.b16 %v1476
    %v1816 = vunpack.c.h.b16 %v1476
    %v1817 = vunpack.c.l.b16 %v1477
    %v1818 = vunpack.c.h.b16 %v1477
    %v1819 = vunpack.c.l.b16 %v1478
    %v1820 = vunpack.c.h.b16 %v1478
    %v1821 = vunpack.c.l.b16 %v1479
    %v1822 = vunpack.c.h.b16 %v1479
    %v1823 = vunpack.c.l.b16 %v1480
    %v1824 = vunpack.c.h.b16 %v1480
    %v1825 = vunpack.c.l.b16 %v1481
    %v1826 = vunpack.c.h.b16 %v1481
    %v1827 = vunpack.c.l.b16 %v1482
    %v1828 = vunpack.c.h.b16 %v1482
    %v1829 = vunpack.c.l.b16 %v1483
    %v1830 = vunpack.c.h.b16 %v1483
    %v1831 = vunpack.c.l.b16 %v1484
    %v1832 = vunpack.c.h.b16 %v1484
    %v1833 = vunpack.c.l.b16 %v1485
    %v1834 = vunpack.c.h.b16 %v1485
    %v1835 = vunpack.c.l.b16 %v1486
    %v1836 = vunpack.c.h.b16 %v1486
    %v1837 = vunpack.c.l.b16 %v1487
    %v1838 = vunpack.c.h.b16 %v1487
    %v1839 = vunpack.c.l.b16 %v1488
    %v1840 = vunpack.c.h.b16 %v1488
    %v1841 = vunpack.c.l.b16 %v1489
    %v1842 = vunpack.c.h.b16 %v1489
    %v1843 = vunpack.c.l.b16 %v1490
    %v1844 = vunpack.c.h.b16 %v1490
    %v1845 = vunpack.c.l.b16 %v1491
    %v1846 = vunpack.c.h.b16 %v1491
    %v1847 = vunpack.c.l.b16 %v1492
    %v1848 = vunpack.c.h.b16 %v1492
    %v1849 = vunpack.c.l.b16 %v1493
    %v1850 = vunpack.c.h.b16 %v1493
    %v1851 = vunpack.c.l.b16 %v1494
    %v1852 = vunpack.c.h.b16 %v1494
    %v1853 = vunpack.c.l.b16 %v1495
    %v1854 = vunpack.c.h.b16 %v1495
    %v1855 = vunpack.c.l.b16 %v1496
    %v1856 = vunpack.c.h.b16 %v1496
    %v1857 = vunpack.c.l.b16 %v1497
    %v1858 = vunpack.c.h.b16 %v1497
    %v1859 = vunpack.c.l.b16 %v1498
    %v1860 = vunpack.c.h.b16 %v1498
    %v1861 = vunpack.c.l.b16 %v1499
    %v1862 = vunpack.c.h.b16 %v1499
    %v1863 = vunpack.c.l.b16 %v1500
    %v1864 = vunpack.c.h.b16 %v1500
    %v1865 = vunpack.c.l.b16 %v1501
    %v1866 = vunpack.c.h.b16 %v1501
    %v1867 = vunpack.c.l.b16 %v1502
    %v1868 = vunpack.c.h.b16 %v1502
    %v1869 = vunpack.c.l.b16 %v1503
    %v1870 = vunpack.c.h.b16 %v1503
    %v1871 = vunpack.c.l.b16 %v1504
    %v1872 = vunpack.c.h.b16 %v1504
    %v1873 = vunpack.c.l.b16 %v1505
    %v1874 = vunpack.c.h.b16 %v1505
    %v1875 = vunpack.c.l.b16 %v1506
    %v1876 = vunpack.c.h.b16 %v1506
    %v1877 = vunpack.c.l.b16 %v1507
    %v1878 = vunpack.c.h.b16 %v1507
    %v1879 = vunpack.c.l.b16 %v1508
    %v1880 = vunpack.c.h.b16 %v1508
    %v1881 = vunpack.c.l.b16 %v1509
    %v1882 = vunpack.c.h.b16 %v1509
    %v1883 = vunpack.c.l.b16 %v1510
    %v1884 = vunpack.c.h.b16 %v1510
    %v1885 = vunpack.c.l.b16 %v1511
    %v1886 = vunpack.c.h.b16 %v1511
    %v1887 = vunpack.c.l.b16 %v1512
    %v1888 = vunpack.c.h.b16 %v1512
    %v1889 = vunpack.c.l.b16 %v1513
    %v1890 = vunpack.c.h.b16 %v1513
    %v1891 = vunpack.c.l.b16 %v1514
    %v1892 = vunpack.c.h.b16 %v1514
    %v1893 = vunpack.c.l.b16 %v1515
    %v1894 = vunpack.c.h.b16 %v1515
    %v1895 = vunpack.c.l.b16 %v1516
    %v1896 = vunpack.c.h.b16 %v1516
    %v1897 = vunpack.c.l.b16 %v1517
    %v1898 = vunpack.c.h.b16 %v1517
    %v1899 = vunpack.c.l.b16 %v1518
    %v1900 = vunpack.c.h.b16 %v1518
    %v1901 = vunpack.c.l.b16 %v1519
    %v1902 = vunpack.c.h.b16 %v1519
    %v1903 = vunpack.c.l.b16 %v1520
    %v1904 = vunpack.c.h.b16 %v1520
    %v1905 = vunpack.c.l.b16 %v1521
    %v1906 = vunpack.c.h.b16 %v1521
    %v1907 = vunpack.c.l.b16 %v1522
    %v1908 = vunpack.c.h.b16 %v1522
    %v1909 = vunpack.c.l.b16 %v1523
    %v1910 = vunpack.c.h.b16 %v1523
    %v1911 = vunpack.c.l.b16 %v1524
    %v1912 = vunpack.c.h.b16 %v1524
    %v1913 = vunpack.c.l.b16 %v1525
    %v1914 = vunpack.c.h.b16 %v1525
    %v1915 = vunpack.c.l.b16 %v1526
    %v1916 = vunpack.c.h.b16 %v1526
    %v1917 = vunpack.c.l.b16 %v1527
    %v1918 = vunpack.c.h.b16 %v1527
    %v1919 = vunpack.c.l.b16 %v1528
    %v1920 = vunpack.c.h.b16 %v1528
    %v1921 = vunpack.c.l.b16 %v1529
    %v1922 = vunpack.c.h.b16 %v1529
    %v1923 = vunpack.c.l.b16 %v1530
    %v1924 = vunpack.c.h.b16 %v1530
    %v1925 = vunpack.c.l.b16 %v1531
    %v1926 = vunpack.c.h.b16 %v1531
    %v1927 = vunpack.c.l.b16 %v1532
    %v1928 = vunpack.c.h.b16 %v1532
    %v1929 = vunpack.c.l.b16 %v1533
    %v1930 = vunpack.c.h.b16 %v1533
    %v1931 = vunpack.c.l.b16 %v1534
    %v1932 = vunpack.c.h.b16 %v1534
    %v1933 = vunpack.c.l.b16 %v1535
    %v1934 = vunpack.c.h.b16 %v1535
    %v1935 = vunpack.c.l.b16 %v1536
    %v1936 = vunpack.c.h.b16 %v1536
    %v1937 = vunpack.c.l.b16 %v1537
    %v1938 = vunpack.c.h.b16 %v1537
    %v1939 = vunpack.c.l.b16 %v1538
    %v1940 = vunpack.c.h.b16 %v1538
    %v1941 = vunpack.c.l.b16 %v1539
    %v1942 = vunpack.c.h.b16 %v1539
    %v1943 = vunpack.c.l.b16 %v1540
    %v1944 = vunpack.c.h.b16 %v1540
    %v1945 = vunpack.c.l.b16 %v1541
    %v1946 = vunpack.c.h.b16 %v1541
    %v1947 = vunpack.c.l.b16 %v1542
    %v1948 = vunpack.c.h.b16 %v1542
    %v1949 = vpack.c.b16 %v1697, %v1693
    %v1950 = vpack.c.b16 %v1698, %v1694
    %v1951 = vpack.c.b16 %v1699, %v1695
    %v1952 = vpack.c.b16 %v1700, %v1696
    %v1953 = vpack.c.b16 %v1705, %v1701
    %v1954 = vpack.c.b16 %v1706, %v1702
    %v1955 = vpack.c.b16 %v1707, %v1703
    %v1956 = vpack.c.b16 %v1708, %v1704
    %v1957 = vpack.c.b16 %v1713, %v1709
    %v1958 = vpack.c.b16 %v1714, %v1710
    %v1959 = vpack.c.b16 %v1715, %v1711
    %v1960 = vpack.c.b16 %v1716, %v1712
    %v1961 = vpack.c.b16 %v1721, %v1717
    %v1962 = vpack.c.b16 %v1722, %v1718
    %v1963 = vpack.c.b16 %v1723, %v1719
    %v1964 = vpack.c.b16 %v1724, %v1720
    %v1965 = vpack.c.b16 %v1729, %v1725
    %v1966 = vpack.c.b16 %v1730, %v1726
    %v1967 = vpack.c.b16 %v1731, %v1727
    %v1968 = vpack.c.b16 %v1732, %v1728
    %v1969 = vpack.c.b16 %v1737, %v1733
    %v1970 = vpack.c.b16 %v1738, %v1734
    %v1971 = vpack.c.b16 %v1739, %v1735
    %v1972 = vpack.c.b16 %v1740, %v1736
    %v1973 = vpack.c.b16 %v1745, %v1741
    %v1974 = vpack.c.b16 %v1746, %v1742
    %v1975 = vpack.c.b16 %v1747, %v1743
    %v1976 = vpack.c.b16 %v1748, %v1744
    %v1977 = vpack.c.b16 %v1753, %v1749
    %v1978 = vpack.c.b16 %v1754, %v1750
    %v1979 = vpack.c.b16 %v1755, %v1751
    %v1980 = vpack.c.b16 %v1756, %v1752
    %v1981 = vpack.c.b16 %v1761, %v1757
    %v1982 = vpack.c.b16 %v1762, %v1758
    %v1983 = vpack.c.b16 %v1763, %v1759
    %v1984 = vpack.c.b16 %v1764, %v1760
    %v1985 = vpack.c.b16 %v1769, %v1765
    %v1986 = vpack.c.b16 %v1770, %v1766
    %v1987 = vpack.c.b16 %v1771, %v1767
    %v1988 = vpack.c.b16 %v1772, %v1768
    %v1989 = vpack.c.b16 %v1777, %v1773
    %v1990 = vpack.c.b16 %v1778, %v1774
    %v1991 = vpack.c.b16 %v1779, %v1775
    %v1992 = vpack.c.b16 %v1780, %v1776
    %v1993 = vpack.c.b16 %v1785, %v1781
    %v1994 = vpack.c.b16 %v1786, %v1782
    %v1995 = vpack.c.b16 %v1787, %v1783
    %v1996 = vpack.c.b16 %v1788, %v1784
    %v1997 = vpack.c.b16 %v1793, %v1789
    %v1998 = vpack.c.b16 %v1794, %v1790
    %v1999 = vpack.c.b16 %v1795, %v1791
    %v2000 = vpack.c.b16 %v1796, %v1792
    %v2001 = vpack.c.b16 %v1801, %v1797
    %v2002 = vpack.c.b16 %v1802, %v1798
    %v2003 = vpack.c.b16 %v1803, %v1799
    %v2004 = vpack.c.b16 %v1804, %v1800
    %v2005 = vpack.c.b16 %v1809, %v1805
    %v2006 = vpack.c.b16 %v1810, %v1806
    %v2007 = vpack.c.b16 %v1811, %v1807
    %v2008 = vpack.c.b16 %v1812, %v1808
    %v2009 = vpack.c.b16 %v1817, %v1813
    %v2010 = vpack.c.b16 %v1818, %v1814
    %v2011 = vpack.c.b16 %v1819, %v1815
    %v2012 = vpack.c.b16 %v1820, %v1816
    %v2013 = vpack.c.b16 %v1825, %v1821
    %v2014 = vpack.c.b16 %v1826, %v1822
    %v2015 = vpack.c.b16 %v1827, %v1823
    %v2016 = vpack.c.b16 %v1828, %v1824
    %v2017 = vpack.c.b16 %v1833, %v1829
    %v2018 = vpack.c.b16 %v1834, %v1830
    %v2019 = vpack.c.b16 %v1835, %v1831
    %v2020 = vpack.c.b16 %v1836, %v1832
    %v2021 = vpack.c.b16 %v1841, %v1837
    %v2022 = vpack.c.b16 %v1842, %v1838
    %v2023 = vpack.c.b16 %v1843, %v1839
    %v2024 = vpack.c.b16 %v1844, %v1840
    %v2025 = vpack.c.b16 %v1849, %v1845
    %v2026 = vpack.c.b16 %v1850, %v1846
    %v2027 = vpack.c.b16 %v1851, %v1847
    %v2028 = vpack.c.b16 %v1852, %v1848
    %v2029 = vpack.c.b16 %v1857, %v1853
    %v2030 = vpack.c.b16 %v1858, %v1854
    %v2031 = vpack.c.b16 %v1859, %v1855
    %v2032 = vpack.c.b16 %v1860, %v1856
    %v2033 = vpack.c.b16 %v1865, %v1861
    %v2034 = vpack.c.b16 %v1866, %v1862
    %v2035 = vpack.c.b16 %v1867, %v1863
    %v2036 = vpack.c.b16 %v1868, %v1864
    %v2037 = vpack.c.b16 %v1873, %v1869
    %v2038 = vpack.c.b16 %v1874, %v1870
    %v2039 = vpack.c.b16 %v1875, %v1871
    %v2040 = vpack.c.b16 %v1876, %v1872
    %v2041 = vpack.c.b16 %v1881, %v1877
    %v2042 = vpack.c.b16 %v1882, %v1878
    %v2043 = vpack.c.b16 %v1883, %v1879
    %v2044 = vpack.c.b16 %v1884, %v1880
    %v2045 = vpack.c.b16 %v1889, %v1885
    %v2046 = vpack.c.b16 %v1890, %v1886
    %v2047 = vpack.c.b16 %v1891, %v1887
    %v2048 = vpack.c.b16 %v1892, %v1888
    %v2049 = vpack.c.b16 %v1897, %v1893
    %v2050 = vpack.c.b16 %v1898, %v1894
    %v2051 = vpack.c.b16 %v1899, %v1895
    %v2052 = vpack.c.b16 %v1900, %v1896
    %v2053 = vpack.c.b16 %v1905, %v1901
    %v2054 = vpack.c.b16 %v1906, %v1902
    %v2055 = vpack.c.b16 %v1907, %v1903
    %v2056 = vpack.c.b16 %v1908, %v1904
    %v2057 = vpack.c.b16 %v1913, %v1909
    %v2058 = vpack.c.b16 %v1914, %v1910
    %v2059 = vpack.c.b16 %v1915, %v1911
    %v2060 = vpack.c.b16 %v1916, %v1912
    %v2061 = vpack.c.b16 %v1921, %v1917
    %v2062 = vpack.c.b16 %v1922, %v1918
    %v2063 = vpack.c.b16 %v1923, %v1919
    %v2064 = vpack.c.b16 %v1924, %v1920
    %v2065 = vpack.c.b16 %v1929, %v1925
    %v2066 = vpack.c.b16 %v1930, %v1926
    %v2067 = vpack.c.b16 %v1931, %v1927
    %v2068 = vpack.c.b16 %v1932, %v1928
    %v2069 = vpack.c.b16 %v1937, %v1933
    %v2070 = vpack.c.b16 %v1938, %v1934
    %v2071 = vpack.c.b16 %v1939, %v1935
    %v2072 = vpack.c.b16 %v1940, %v1936
    %v2073 = vpack.c.b16 %v1945, %v1941
    %v2074 = vpack.c.b16 %v1946, %v1942
    %v2075 = vpack.c.b16 %v1947, %v1943
    %v2076 = vpack.c.b16 %v1948, %v1944
    %2205 = vmatprep.subr.bf16.mxu0 %v1978
    %2206 = vmatpush1.bf16.msra.mxu0 %v1977
    %2207 = vmatprep.subr.bf16.mxu0 %v1974
    %2208 = vmatpush1.bf16.msra.mxu0 %v1973
    %2209 = vmatprep.subr.bf16.mxu0 %v1970
    %2210 = vmatpush1.bf16.msra.mxu0 %v1969
    %2211 = vmatprep.subr.bf16.mxu0 %v1966
    %2212 = vmatpush1.bf16.msra.mxu0 %v1965
    %2213 = vmatprep.subr.bf16.mxu0 %v1962
    %2214 = vmatpush1.bf16.msra.mxu0 %v1961
    %2215 = vmatprep.subr.bf16.mxu0 %v1958
    %2216 = vmatpush1.bf16.msra.mxu0 %v1957
    %2217 = vmatprep.subr.bf16.mxu0 %v1954
    %2218 = vmatpush1.bf16.msra.mxu0 %v1953
    %2219 = vmatprep.subr.bf16.mxu0 %v1950
    %2220 = vmatpush1.bf16.msra.mxu0 %v1949
    %2221 = vmatprep.subr.bf16.mxu0 %v2010
    %2222 = vmatpush2.bf16.msra.mxu0 %v2009
    %2223 = vmatprep.subr.bf16.mxu0 %v2006
    %2224 = vmatpush2.bf16.msra.mxu0 %v2005
    %2225 = vmatprep.subr.bf16.mxu0 %v2002
    %2226 = vmatpush2.bf16.msra.mxu0 %v2001
    %2227 = vmatprep.subr.bf16.mxu0 %v1998
    %2228 = vmatpush2.bf16.msra.mxu0 %v1997
    %2229 = vmatprep.subr.bf16.mxu0 %v1994
    %2230 = vmatpush2.bf16.msra.mxu0 %v1993
    %2231 = vmatprep.subr.bf16.mxu0 %v1990
    %2232 = vmatpush2.bf16.msra.mxu0 %v1989
    %2233 = vmatprep.subr.bf16.mxu0 %v1986
    %2234 = vmatpush2.bf16.msra.mxu0 %v1985
    %2235 = vmatprep.subr.bf16.mxu0 %v1982
    %2236 = vmatpush2.bf16.msra.mxu0 %v1981
    %2237 = vmatprep.mubr.bf16.mxu0 %v1412
    %2238 = vmatmul.mubr.bf16.gmra.mxu0 %v1411
    %v2239 = vpop.f32.mrf.mxu0
    %v2240 = vadd.f32 %v1548, %v2239
    %v2241 = vpop.f32.mrf.mxu0
    %v2242 = vadd.f32 %v1552, %v2241
    %v2243 = vpop.f32.mrf.mxu0
    %v2244 = vpop.f32.mrf.mxu0
    %2245 = vdwg.mxu0
    %2246 = vmatprep.subr.bf16.mxu0 %v2042
    %2247 = vmatpush1.bf16.msra.mxu0 %v2041
    %2248 = vmatprep.subr.bf16.mxu0 %v2038
    %2249 = vmatpush1.bf16.msra.mxu0 %v2037
    %2250 = vmatprep.subr.bf16.mxu0 %v2034
    %2251 = vmatpush1.bf16.msra.mxu0 %v2033
    %2252 = vmatprep.subr.bf16.mxu0 %v2030
    %2253 = vmatpush1.bf16.msra.mxu0 %v2029
    %2254 = vmatprep.subr.bf16.mxu0 %v2026
    %2255 = vmatpush1.bf16.msra.mxu0 %v2025
    %2256 = vmatprep.subr.bf16.mxu0 %v2022
    %2257 = vmatpush1.bf16.msra.mxu0 %v2021
    %2258 = vmatprep.subr.bf16.mxu0 %v2018
    %2259 = vmatpush1.bf16.msra.mxu0 %v2017
    %2260 = vmatprep.subr.bf16.mxu0 %v2014
    %2261 = vmatpush1.bf16.msra.mxu0 %v2013
    %2262 = vmatprep.subr.bf16.mxu0 %v2074
    %2263 = vmatpush2.bf16.msra.mxu0 %v2073
    %2264 = vmatprep.subr.bf16.mxu0 %v2070
    %2265 = vmatpush2.bf16.msra.mxu0 %v2069
    %2266 = vmatprep.subr.bf16.mxu0 %v2066
    %2267 = vmatpush2.bf16.msra.mxu0 %v2065
    %2268 = vmatprep.subr.bf16.mxu0 %v2062
    %2269 = vmatpush2.bf16.msra.mxu0 %v2061
    %2270 = vmatprep.subr.bf16.mxu0 %v2058
    %2271 = vmatpush2.bf16.msra.mxu0 %v2057
    %2272 = vmatprep.subr.bf16.mxu0 %v2054
    %2273 = vmatpush2.bf16.msra.mxu0 %v2053
    %2274 = vmatprep.subr.bf16.mxu0 %v2050
    %2275 = vmatpush2.bf16.msra.mxu0 %v2049
    %2276 = vmatprep.subr.bf16.mxu0 %v2046
    %2277 = vmatpush2.bf16.msra.mxu0 %v2045
    %2278 = vmatprep.mubr.bf16.mxu0 %v1414
    %2279 = vmatmul.mubr.bf16.gmra.mxu0 %v1413
    %v2280 = vpop.f32.mrf.mxu0
    %v2281 = vadd.f32 %v2240, %v2280
    %v2282 = vpop.f32.mrf.mxu0
    %v2283 = vadd.f32 %v2242, %v2282
    %v2284 = vpop.f32.mrf.mxu0
    %v2285 = vpop.f32.mrf.mxu0
    %2286 = vdwg.mxu0
    %2287 = vmatprep.subr.bf16.mxu0 %v1980
    %2288 = vmatpush1.bf16.msra.mxu0 %v1979
    %2289 = vmatprep.subr.bf16.mxu0 %v1976
    %2290 = vmatpush1.bf16.msra.mxu0 %v1975
    %2291 = vmatprep.subr.bf16.mxu0 %v1972
    %2292 = vmatpush1.bf16.msra.mxu0 %v1971
    %2293 = vmatprep.subr.bf16.mxu0 %v1968
    %2294 = vmatpush1.bf16.msra.mxu0 %v1967
    %2295 = vmatprep.subr.bf16.mxu0 %v1964
    %2296 = vmatpush1.bf16.msra.mxu0 %v1963
    %2297 = vmatprep.subr.bf16.mxu0 %v1960
    %2298 = vmatpush1.bf16.msra.mxu0 %v1959
    %2299 = vmatprep.subr.bf16.mxu0 %v1956
    %2300 = vmatpush1.bf16.msra.mxu0 %v1955
    %2301 = vmatprep.subr.bf16.mxu0 %v1952
    %2302 = vmatpush1.bf16.msra.mxu0 %v1951
    %2303 = vmatprep.subr.bf16.mxu0 %v2012
    %2304 = vmatpush2.bf16.msra.mxu0 %v2011
    %2305 = vmatprep.subr.bf16.mxu0 %v2008
    %2306 = vmatpush2.bf16.msra.mxu0 %v2007
    %2307 = vmatprep.subr.bf16.mxu0 %v2004
    %2308 = vmatpush2.bf16.msra.mxu0 %v2003
    %2309 = vmatprep.subr.bf16.mxu0 %v2000
    %2310 = vmatpush2.bf16.msra.mxu0 %v1999
    %2311 = vmatprep.subr.bf16.mxu0 %v1996
    %2312 = vmatpush2.bf16.msra.mxu0 %v1995
    %2313 = vmatprep.subr.bf16.mxu0 %v1992
    %2314 = vmatpush2.bf16.msra.mxu0 %v1991
    %2315 = vmatprep.subr.bf16.mxu0 %v1988
    %2316 = vmatpush2.bf16.msra.mxu0 %v1987
    %2317 = vmatprep.subr.bf16.mxu0 %v1984
    %2318 = vmatpush2.bf16.msra.mxu0 %v1983
    %2319 = vmatprep.mubr.bf16.mxu0 %v1412
    %2320 = vmatmul.mubr.bf16.gmra.mxu0 %v1411
    %v2321 = vpop.f32.mrf.mxu0
    %v2322 = vadd.f32 %v1556, %v2321
    %v2323 = vpop.f32.mrf.mxu0
    %v2324 = vadd.f32 %v1560, %v2323
    %v2325 = vpop.f32.mrf.mxu0
    %v2326 = vpop.f32.mrf.mxu0
    %2327 = vdwg.mxu0
    %2328 = vmatprep.subr.bf16.mxu0 %v2044
    %2329 = vmatpush1.bf16.msra.mxu0 %v2043
    %2330 = vmatprep.subr.bf16.mxu0 %v2040
    %2331 = vmatpush1.bf16.msra.mxu0 %v2039
    %2332 = vmatprep.subr.bf16.mxu0 %v2036
    %2333 = vmatpush1.bf16.msra.mxu0 %v2035
    %2334 = vmatprep.subr.bf16.mxu0 %v2032
    %2335 = vmatpush1.bf16.msra.mxu0 %v2031
    %2336 = vmatprep.subr.bf16.mxu0 %v2028
    %2337 = vmatpush1.bf16.msra.mxu0 %v2027
    %2338 = vmatprep.subr.bf16.mxu0 %v2024
    %2339 = vmatpush1.bf16.msra.mxu0 %v2023
    %2340 = vmatprep.subr.bf16.mxu0 %v2020
    %2341 = vmatpush1.bf16.msra.mxu0 %v2019
    %2342 = vmatprep.subr.bf16.mxu0 %v2016
    %2343 = vmatpush1.bf16.msra.mxu0 %v2015
    %2344 = vmatprep.subr.bf16.mxu0 %v2076
    %2345 = vmatpush2.bf16.msra.mxu0 %v2075
    %2346 = vmatprep.subr.bf16.mxu0 %v2072
    %2347 = vmatpush2.bf16.msra.mxu0 %v2071
    %2348 = vmatprep.subr.bf16.mxu0 %v2068
    %2349 = vmatpush2.bf16.msra.mxu0 %v2067
    %2350 = vmatprep.subr.bf16.mxu0 %v2064
    %2351 = vmatpush2.bf16.msra.mxu0 %v2063
    %2352 = vmatprep.subr.bf16.mxu0 %v2060
    %2353 = vmatpush2.bf16.msra.mxu0 %v2059
    %2354 = vmatprep.subr.bf16.mxu0 %v2056
    %2355 = vmatpush2.bf16.msra.mxu0 %v2055
    %2356 = vmatprep.subr.bf16.mxu0 %v2052
    %2357 = vmatpush2.bf16.msra.mxu0 %v2051
    %2358 = vmatprep.subr.bf16.mxu0 %v2048
    %2359 = vmatpush2.bf16.msra.mxu0 %v2047
    %2360 = vmatprep.mubr.bf16.mxu0 %v1414
    %2361 = vmatmul.mubr.bf16.gmra.mxu0 %v1413
    %v2362 = vpop.f32.mrf.mxu0
    %v2363 = vadd.f32 %v2322, %v2362
    %v2364 = vpop.f32.mrf.mxu0
    %v2365 = vadd.f32 %v2324, %v2364
    %v2366 = vpop.f32.mrf.mxu0
    %v2367 = vpop.f32.mrf.mxu0
    %2368 = vdwg.mxu0
    %v2369 = vadd.f32 %v343, %v2281
    %v2370 = vadd.f32 %v344, %v2283
    %v2371 = vadd.f32 %v345, %v2363
    %v2372 = vadd.f32 %v346, %v2365
    %v2373 = vpack.c.bf16 %v2369, %v2369
    %v2374 = vpack.c.bf16 %v2370, %v2370
    %v2375 = vpack.c.bf16 %v2371, %v2371
    %v2376 = vpack.c.bf16 %v2372, %v2372
    %v2377 = vld [vmem:[#allocation4] sm:$0xff]
    %v2378 = vld [vmem:[#allocation4 + $0x8] sm:$0xff]
    %v2379 = vld [vmem:[#allocation4 + $0x10] sm:$0xff]
    %v2380 = vld [vmem:[#allocation4 + $0x18] sm:$0xff]
    %v2381 = vld [vmem:[#allocation4 + $0x20] sm:$0xff]
    %v2382 = vld [vmem:[#allocation4 + $0x28] sm:$0xff]
    %v2383 = vld [vmem:[#allocation4 + $0x30] sm:$0xff]
    %v2384 = vld [vmem:[#allocation4 + $0x38] sm:$0xff]
    %v2385 = vld [vmem:[#allocation4 + $0x40] sm:$0xff]
    %v2386 = vld [vmem:[#allocation4 + $0x48] sm:$0xff]
    %v2387 = vld [vmem:[#allocation4 + $0x50] sm:$0xff]
    %v2388 = vld [vmem:[#allocation4 + $0x58] sm:$0xff]
    %v2389 = vld [vmem:[#allocation4 + $0x60] sm:$0xff]
    %v2390 = vld [vmem:[#allocation4 + $0x68] sm:$0xff]
    %v2391 = vld [vmem:[#allocation4 + $0x70] sm:$0xff]
    %v2392 = vld [vmem:[#allocation4 + $0x78] sm:$0xff]
    %v2393 = vld [vmem:[#allocation4 + $0x80] sm:$0xff]
    %v2394 = vld [vmem:[#allocation4 + $0x88] sm:$0xff]
    %v2395 = vld [vmem:[#allocation4 + $0x90] sm:$0xff]
    %v2396 = vld [vmem:[#allocation4 + $0x98] sm:$0xff]
    %v2397 = vld [vmem:[#allocation4 + $0xa0] sm:$0xff]
    %v2398 = vld [vmem:[#allocation4 + $0xa8] sm:$0xff]
    %v2399 = vld [vmem:[#allocation4 + $0xb0] sm:$0xff]
    %v2400 = vld [vmem:[#allocation4 + $0xb8] sm:$0xff]
    %v2401 = vld [vmem:[#allocation4 + $0xc0] sm:$0xff]
    %v2402 = vld [vmem:[#allocation4 + $0xc8] sm:$0xff]
    %v2403 = vld [vmem:[#allocation4 + $0xd0] sm:$0xff]
    %v2404 = vld [vmem:[#allocation4 + $0xd8] sm:$0xff]
    %v2405 = vld [vmem:[#allocation4 + $0xe0] sm:$0xff]
    %v2406 = vld [vmem:[#allocation4 + $0xe8] sm:$0xff]
    %v2407 = vld [vmem:[#allocation4 + $0xf0] sm:$0xff]
    %v2408 = vld [vmem:[#allocation4 + $0xf8] sm:$0xff]
    %v2409 = vld [vmem:[#allocation4 + $0x100] sm:$0xff]
    %v2410 = vld [vmem:[#allocation4 + $0x108] sm:$0xff]
    %v2411 = vld [vmem:[#allocation4 + $0x110] sm:$0xff]
    %v2412 = vld [vmem:[#allocation4 + $0x118] sm:$0xff]
    %v2413 = vld [vmem:[#allocation4 + $0x120] sm:$0xff]
    %v2414 = vld [vmem:[#allocation4 + $0x128] sm:$0xff]
    %v2415 = vld [vmem:[#allocation4 + $0x130] sm:$0xff]
    %v2416 = vld [vmem:[#allocation4 + $0x138] sm:$0xff]
    %v2417 = vld [vmem:[#allocation4 + $0x140] sm:$0xff]
    %v2418 = vld [vmem:[#allocation4 + $0x148] sm:$0xff]
    %v2419 = vld [vmem:[#allocation4 + $0x150] sm:$0xff]
    %v2420 = vld [vmem:[#allocation4 + $0x158] sm:$0xff]
    %v2421 = vld [vmem:[#allocation4 + $0x160] sm:$0xff]
    %v2422 = vld [vmem:[#allocation4 + $0x168] sm:$0xff]
    %v2423 = vld [vmem:[#allocation4 + $0x170] sm:$0xff]
    %v2424 = vld [vmem:[#allocation4 + $0x178] sm:$0xff]
    %v2425 = vld [vmem:[#allocation4 + $0x180] sm:$0xff]
    %v2426 = vld [vmem:[#allocation4 + $0x188] sm:$0xff]
    %v2427 = vld [vmem:[#allocation4 + $0x190] sm:$0xff]
    %v2428 = vld [vmem:[#allocation4 + $0x198] sm:$0xff]
    %v2429 = vld [vmem:[#allocation4 + $0x1a0] sm:$0xff]
    %v2430 = vld [vmem:[#allocation4 + $0x1a8] sm:$0xff]
    %v2431 = vld [vmem:[#allocation4 + $0x1b0] sm:$0xff]
    %v2432 = vld [vmem:[#allocation4 + $0x1b8] sm:$0xff]
    %v2433 = vld [vmem:[#allocation4 + $0x1c0] sm:$0xff]
    %v2434 = vld [vmem:[#allocation4 + $0x1c8] sm:$0xff]
    %v2435 = vld [vmem:[#allocation4 + $0x1d0] sm:$0xff]
    %v2436 = vld [vmem:[#allocation4 + $0x1d8] sm:$0xff]
    %v2437 = vld [vmem:[#allocation4 + $0x1e0] sm:$0xff]
    %v2438 = vld [vmem:[#allocation4 + $0x1e8] sm:$0xff]
    %v2439 = vld [vmem:[#allocation4 + $0x1f0] sm:$0xff]
    %v2440 = vld [vmem:[#allocation4 + $0x1f8] sm:$0xff]
    %v2441 = vld [vmem:[#allocation4 + $0x200] sm:$0xff]
    %v2442 = vld [vmem:[#allocation4 + $0x208] sm:$0xff]
    %v2443 = vld [vmem:[#allocation4 + $0x210] sm:$0xff]
    %v2444 = vld [vmem:[#allocation4 + $0x218] sm:$0xff]
    %v2445 = vld [vmem:[#allocation4 + $0x220] sm:$0xff]
    %v2446 = vld [vmem:[#allocation4 + $0x228] sm:$0xff]
    %v2447 = vld [vmem:[#allocation4 + $0x230] sm:$0xff]
    %v2448 = vld [vmem:[#allocation4 + $0x238] sm:$0xff]
    %v2449 = vld [vmem:[#allocation4 + $0x240] sm:$0xff]
    %v2450 = vld [vmem:[#allocation4 + $0x248] sm:$0xff]
    %v2451 = vld [vmem:[#allocation4 + $0x250] sm:$0xff]
    %v2452 = vld [vmem:[#allocation4 + $0x258] sm:$0xff]
    %v2453 = vld [vmem:[#allocation4 + $0x260] sm:$0xff]
    %v2454 = vld [vmem:[#allocation4 + $0x268] sm:$0xff]
    %v2455 = vld [vmem:[#allocation4 + $0x270] sm:$0xff]
    %v2456 = vld [vmem:[#allocation4 + $0x278] sm:$0xff]
    %v2457 = vld [vmem:[#allocation4 + $0x280] sm:$0xff]
    %v2458 = vld [vmem:[#allocation4 + $0x288] sm:$0xff]
    %v2459 = vld [vmem:[#allocation4 + $0x290] sm:$0xff]
    %v2460 = vld [vmem:[#allocation4 + $0x298] sm:$0xff]
    %v2461 = vld [vmem:[#allocation4 + $0x2a0] sm:$0xff]
    %v2462 = vld [vmem:[#allocation4 + $0x2a8] sm:$0xff]
    %v2463 = vld [vmem:[#allocation4 + $0x2b0] sm:$0xff]
    %v2464 = vld [vmem:[#allocation4 + $0x2b8] sm:$0xff]
    %v2465 = vld [vmem:[#allocation4 + $0x2c0] sm:$0xff]
    %v2466 = vld [vmem:[#allocation4 + $0x2c8] sm:$0xff]
    %v2467 = vld [vmem:[#allocation4 + $0x2d0] sm:$0xff]
    %v2468 = vld [vmem:[#allocation4 + $0x2d8] sm:$0xff]
    %v2469 = vld [vmem:[#allocation4 + $0x2e0] sm:$0xff]
    %v2470 = vld [vmem:[#allocation4 + $0x2e8] sm:$0xff]
    %v2471 = vld [vmem:[#allocation4 + $0x2f0] sm:$0xff]
    %v2472 = vld [vmem:[#allocation4 + $0x2f8] sm:$0xff]
    %v2473 = vld [vmem:[#allocation4 + $0x300] sm:$0xff]
    %v2474 = vld [vmem:[#allocation4 + $0x308] sm:$0xff]
    %v2475 = vld [vmem:[#allocation4 + $0x310] sm:$0xff]
    %v2476 = vld [vmem:[#allocation4 + $0x318] sm:$0xff]
    %v2477 = vld [vmem:[#allocation4 + $0x320] sm:$0xff]
    %v2478 = vld [vmem:[#allocation4 + $0x328] sm:$0xff]
    %v2479 = vld [vmem:[#allocation4 + $0x330] sm:$0xff]
    %v2480 = vld [vmem:[#allocation4 + $0x338] sm:$0xff]
    %v2481 = vld [vmem:[#allocation4 + $0x340] sm:$0xff]
    %v2482 = vld [vmem:[#allocation4 + $0x348] sm:$0xff]
    %v2483 = vld [vmem:[#allocation4 + $0x350] sm:$0xff]
    %v2484 = vld [vmem:[#allocation4 + $0x358] sm:$0xff]
    %v2485 = vld [vmem:[#allocation4 + $0x360] sm:$0xff]
    %v2486 = vld [vmem:[#allocation4 + $0x368] sm:$0xff]
    %v2487 = vld [vmem:[#allocation4 + $0x370] sm:$0xff]
    %v2488 = vld [vmem:[#allocation4 + $0x378] sm:$0xff]
    %v2489 = vld [vmem:[#allocation4 + $0x380] sm:$0xff]
    %v2490 = vld [vmem:[#allocation4 + $0x388] sm:$0xff]
    %v2491 = vld [vmem:[#allocation4 + $0x390] sm:$0xff]
    %v2492 = vld [vmem:[#allocation4 + $0x398] sm:$0xff]
    %v2493 = vld [vmem:[#allocation4 + $0x3a0] sm:$0xff]
    %v2494 = vld [vmem:[#allocation4 + $0x3a8] sm:$0xff]
    %v2495 = vld [vmem:[#allocation4 + $0x3b0] sm:$0xff]
    %v2496 = vld [vmem:[#allocation4 + $0x3b8] sm:$0xff]
    %v2497 = vld [vmem:[#allocation4 + $0x3c0] sm:$0xff]
    %v2498 = vld [vmem:[#allocation4 + $0x3c8] sm:$0xff]
    %v2499 = vld [vmem:[#allocation4 + $0x3d0] sm:$0xff]
    %v2500 = vld [vmem:[#allocation4 + $0x3d8] sm:$0xff]
    %v2501 = vld [vmem:[#allocation4 + $0x3e0] sm:$0xff]
    %v2502 = vld [vmem:[#allocation4 + $0x3e8] sm:$0xff]
    %v2503 = vld [vmem:[#allocation4 + $0x3f0] sm:$0xff]
    %v2504 = vld [vmem:[#allocation4 + $0x3f8] sm:$0xff]
    %v2505 = vld [vmem:[%s13] sm:$0xf]
    %v2507 = vlaneseq
    %v2508 = vshrl.u32 %v2507, 7
    %v2509 = vsub.s32 0, %v2508
    %v2510 = vrot.slane %v2505, %v2509
    %v2511 = vlaneseq
    %v2512 = vshrl.u32 %v2511, 7
    %v2513 = vsub.s32 1, %v2512
    %v2514 = vrot.slane %v2505, %v2513
    %v2515 = vlaneseq
    %v2516 = vshrl.u32 %v2515, 7
    %v2517 = vsub.s32 2, %v2516
    %v2518 = vrot.slane %v2505, %v2517
    %v2519 = vlaneseq
    %v2520 = vshrl.u32 %v2519, 7
    %v2521 = vsub.s32 3, %v2520
    %v2522 = vrot.slane %v2505, %v2521
    %v2655 = vunpack.c.l.b16 %v2377
    %v2656 = vunpack.c.h.b16 %v2377
    %v2657 = vunpack.c.l.b16 %v2378
    %v2658 = vunpack.c.h.b16 %v2378
    %v2659 = vunpack.c.l.b16 %v2379
    %v2660 = vunpack.c.h.b16 %v2379
    %v2661 = vunpack.c.l.b16 %v2380
    %v2662 = vunpack.c.h.b16 %v2380
    %v2663 = vunpack.c.l.b16 %v2381
    %v2664 = vunpack.c.h.b16 %v2381
    %v2665 = vunpack.c.l.b16 %v2382
    %v2666 = vunpack.c.h.b16 %v2382
    %v2667 = vunpack.c.l.b16 %v2383
    %v2668 = vunpack.c.h.b16 %v2383
    %v2669 = vunpack.c.l.b16 %v2384
    %v2670 = vunpack.c.h.b16 %v2384
    %v2671 = vunpack.c.l.b16 %v2385
    %v2672 = vunpack.c.h.b16 %v2385
    %v2673 = vunpack.c.l.b16 %v2386
    %v2674 = vunpack.c.h.b16 %v2386
    %v2675 = vunpack.c.l.b16 %v2387
    %v2676 = vunpack.c.h.b16 %v2387
    %v2677 = vunpack.c.l.b16 %v2388
    %v2678 = vunpack.c.h.b16 %v2388
    %v2679 = vunpack.c.l.b16 %v2389
    %v2680 = vunpack.c.h.b16 %v2389
    %v2681 = vunpack.c.l.b16 %v2390
    %v2682 = vunpack.c.h.b16 %v2390
    %v2683 = vunpack.c.l.b16 %v2391
    %v2684 = vunpack.c.h.b16 %v2391
    %v2685 = vunpack.c.l.b16 %v2392
    %v2686 = vunpack.c.h.b16 %v2392
    %v2687 = vunpack.c.l.b16 %v2393
    %v2688 = vunpack.c.h.b16 %v2393
    %v2689 = vunpack.c.l.b16 %v2394
    %v2690 = vunpack.c.h.b16 %v2394
    %v2691 = vunpack.c.l.b16 %v2395
    %v2692 = vunpack.c.h.b16 %v2395
    %v2693 = vunpack.c.l.b16 %v2396
    %v2694 = vunpack.c.h.b16 %v2396
    %v2695 = vunpack.c.l.b16 %v2397
    %v2696 = vunpack.c.h.b16 %v2397
    %v2697 = vunpack.c.l.b16 %v2398
    %v2698 = vunpack.c.h.b16 %v2398
    %v2699 = vunpack.c.l.b16 %v2399
    %v2700 = vunpack.c.h.b16 %v2399
    %v2701 = vunpack.c.l.b16 %v2400
    %v2702 = vunpack.c.h.b16 %v2400
    %v2703 = vunpack.c.l.b16 %v2401
    %v2704 = vunpack.c.h.b16 %v2401
    %v2705 = vunpack.c.l.b16 %v2402
    %v2706 = vunpack.c.h.b16 %v2402
    %v2707 = vunpack.c.l.b16 %v2403
    %v2708 = vunpack.c.h.b16 %v2403
    %v2709 = vunpack.c.l.b16 %v2404
    %v2710 = vunpack.c.h.b16 %v2404
    %v2711 = vunpack.c.l.b16 %v2405
    %v2712 = vunpack.c.h.b16 %v2405
    %v2713 = vunpack.c.l.b16 %v2406
    %v2714 = vunpack.c.h.b16 %v2406
    %v2715 = vunpack.c.l.b16 %v2407
    %v2716 = vunpack.c.h.b16 %v2407
    %v2717 = vunpack.c.l.b16 %v2408
    %v2718 = vunpack.c.h.b16 %v2408
    %v2719 = vunpack.c.l.b16 %v2409
    %v2720 = vunpack.c.h.b16 %v2409
    %v2721 = vunpack.c.l.b16 %v2410
    %v2722 = vunpack.c.h.b16 %v2410
    %v2723 = vunpack.c.l.b16 %v2411
    %v2724 = vunpack.c.h.b16 %v2411
    %v2725 = vunpack.c.l.b16 %v2412
    %v2726 = vunpack.c.h.b16 %v2412
    %v2727 = vunpack.c.l.b16 %v2413
    %v2728 = vunpack.c.h.b16 %v2413
    %v2729 = vunpack.c.l.b16 %v2414
    %v2730 = vunpack.c.h.b16 %v2414
    %v2731 = vunpack.c.l.b16 %v2415
    %v2732 = vunpack.c.h.b16 %v2415
    %v2733 = vunpack.c.l.b16 %v2416
    %v2734 = vunpack.c.h.b16 %v2416
    %v2735 = vunpack.c.l.b16 %v2417
    %v2736 = vunpack.c.h.b16 %v2417
    %v2737 = vunpack.c.l.b16 %v2418
    %v2738 = vunpack.c.h.b16 %v2418
    %v2739 = vunpack.c.l.b16 %v2419
    %v2740 = vunpack.c.h.b16 %v2419
    %v2741 = vunpack.c.l.b16 %v2420
    %v2742 = vunpack.c.h.b16 %v2420
    %v2743 = vunpack.c.l.b16 %v2421
    %v2744 = vunpack.c.h.b16 %v2421
    %v2745 = vunpack.c.l.b16 %v2422
    %v2746 = vunpack.c.h.b16 %v2422
    %v2747 = vunpack.c.l.b16 %v2423
    %v2748 = vunpack.c.h.b16 %v2423
    %v2749 = vunpack.c.l.b16 %v2424
    %v2750 = vunpack.c.h.b16 %v2424
    %v2751 = vunpack.c.l.b16 %v2425
    %v2752 = vunpack.c.h.b16 %v2425
    %v2753 = vunpack.c.l.b16 %v2426
    %v2754 = vunpack.c.h.b16 %v2426
    %v2755 = vunpack.c.l.b16 %v2427
    %v2756 = vunpack.c.h.b16 %v2427
    %v2757 = vunpack.c.l.b16 %v2428
    %v2758 = vunpack.c.h.b16 %v2428
    %v2759 = vunpack.c.l.b16 %v2429
    %v2760 = vunpack.c.h.b16 %v2429
    %v2761 = vunpack.c.l.b16 %v2430
    %v2762 = vunpack.c.h.b16 %v2430
    %v2763 = vunpack.c.l.b16 %v2431
    %v2764 = vunpack.c.h.b16 %v2431
    %v2765 = vunpack.c.l.b16 %v2432
    %v2766 = vunpack.c.h.b16 %v2432
    %v2767 = vunpack.c.l.b16 %v2433
    %v2768 = vunpack.c.h.b16 %v2433
    %v2769 = vunpack.c.l.b16 %v2434
    %v2770 = vunpack.c.h.b16 %v2434
    %v2771 = vunpack.c.l.b16 %v2435
    %v2772 = vunpack.c.h.b16 %v2435
    %v2773 = vunpack.c.l.b16 %v2436
    %v2774 = vunpack.c.h.b16 %v2436
    %v2775 = vunpack.c.l.b16 %v2437
    %v2776 = vunpack.c.h.b16 %v2437
    %v2777 = vunpack.c.l.b16 %v2438
    %v2778 = vunpack.c.h.b16 %v2438
    %v2779 = vunpack.c.l.b16 %v2439
    %v2780 = vunpack.c.h.b16 %v2439
    %v2781 = vunpack.c.l.b16 %v2440
    %v2782 = vunpack.c.h.b16 %v2440
    %v2783 = vunpack.c.l.b16 %v2441
    %v2784 = vunpack.c.h.b16 %v2441
    %v2785 = vunpack.c.l.b16 %v2442
    %v2786 = vunpack.c.h.b16 %v2442
    %v2787 = vunpack.c.l.b16 %v2443
    %v2788 = vunpack.c.h.b16 %v2443
    %v2789 = vunpack.c.l.b16 %v2444
    %v2790 = vunpack.c.h.b16 %v2444
    %v2791 = vunpack.c.l.b16 %v2445
    %v2792 = vunpack.c.h.b16 %v2445
    %v2793 = vunpack.c.l.b16 %v2446
    %v2794 = vunpack.c.h.b16 %v2446
    %v2795 = vunpack.c.l.b16 %v2447
    %v2796 = vunpack.c.h.b16 %v2447
    %v2797 = vunpack.c.l.b16 %v2448
    %v2798 = vunpack.c.h.b16 %v2448
    %v2799 = vunpack.c.l.b16 %v2449
    %v2800 = vunpack.c.h.b16 %v2449
    %v2801 = vunpack.c.l.b16 %v2450
    %v2802 = vunpack.c.h.b16 %v2450
    %v2803 = vunpack.c.l.b16 %v2451
    %v2804 = vunpack.c.h.b16 %v2451
    %v2805 = vunpack.c.l.b16 %v2452
    %v2806 = vunpack.c.h.b16 %v2452
    %v2807 = vunpack.c.l.b16 %v2453
    %v2808 = vunpack.c.h.b16 %v2453
    %v2809 = vunpack.c.l.b16 %v2454
    %v2810 = vunpack.c.h.b16 %v2454
    %v2811 = vunpack.c.l.b16 %v2455
    %v2812 = vunpack.c.h.b16 %v2455
    %v2813 = vunpack.c.l.b16 %v2456
    %v2814 = vunpack.c.h.b16 %v2456
    %v2815 = vunpack.c.l.b16 %v2457
    %v2816 = vunpack.c.h.b16 %v2457
    %v2817 = vunpack.c.l.b16 %v2458
    %v2818 = vunpack.c.h.b16 %v2458
    %v2819 = vunpack.c.l.b16 %v2459
    %v2820 = vunpack.c.h.b16 %v2459
    %v2821 = vunpack.c.l.b16 %v2460
    %v2822 = vunpack.c.h.b16 %v2460
    %v2823 = vunpack.c.l.b16 %v2461
    %v2824 = vunpack.c.h.b16 %v2461
    %v2825 = vunpack.c.l.b16 %v2462
    %v2826 = vunpack.c.h.b16 %v2462
    %v2827 = vunpack.c.l.b16 %v2463
    %v2828 = vunpack.c.h.b16 %v2463
    %v2829 = vunpack.c.l.b16 %v2464
    %v2830 = vunpack.c.h.b16 %v2464
    %v2831 = vunpack.c.l.b16 %v2465
    %v2832 = vunpack.c.h.b16 %v2465
    %v2833 = vunpack.c.l.b16 %v2466
    %v2834 = vunpack.c.h.b16 %v2466
    %v2835 = vunpack.c.l.b16 %v2467
    %v2836 = vunpack.c.h.b16 %v2467
    %v2837 = vunpack.c.l.b16 %v2468
    %v2838 = vunpack.c.h.b16 %v2468
    %v2839 = vunpack.c.l.b16 %v2469
    %v2840 = vunpack.c.h.b16 %v2469
    %v2841 = vunpack.c.l.b16 %v2470
    %v2842 = vunpack.c.h.b16 %v2470
    %v2843 = vunpack.c.l.b16 %v2471
    %v2844 = vunpack.c.h.b16 %v2471
    %v2845 = vunpack.c.l.b16 %v2472
    %v2846 = vunpack.c.h.b16 %v2472
    %v2847 = vunpack.c.l.b16 %v2473
    %v2848 = vunpack.c.h.b16 %v2473
    %v2849 = vunpack.c.l.b16 %v2474
    %v2850 = vunpack.c.h.b16 %v2474
    %v2851 = vunpack.c.l.b16 %v2475
    %v2852 = vunpack.c.h.b16 %v2475
    %v2853 = vunpack.c.l.b16 %v2476
    %v2854 = vunpack.c.h.b16 %v2476
    %v2855 = vunpack.c.l.b16 %v2477
    %v2856 = vunpack.c.h.b16 %v2477
    %v2857 = vunpack.c.l.b16 %v2478
    %v2858 = vunpack.c.h.b16 %v2478
    %v2859 = vunpack.c.l.b16 %v2479
    %v2860 = vunpack.c.h.b16 %v2479
    %v2861 = vunpack.c.l.b16 %v2480
    %v2862 = vunpack.c.h.b16 %v2480
    %v2863 = vunpack.c.l.b16 %v2481
    %v2864 = vunpack.c.h.b16 %v2481
    %v2865 = vunpack.c.l.b16 %v2482
    %v2866 = vunpack.c.h.b16 %v2482
    %v2867 = vunpack.c.l.b16 %v2483
    %v2868 = vunpack.c.h.b16 %v2483
    %v2869 = vunpack.c.l.b16 %v2484
    %v2870 = vunpack.c.h.b16 %v2484
    %v2871 = vunpack.c.l.b16 %v2485
    %v2872 = vunpack.c.h.b16 %v2485
    %v2873 = vunpack.c.l.b16 %v2486
    %v2874 = vunpack.c.h.b16 %v2486
    %v2875 = vunpack.c.l.b16 %v2487
    %v2876 = vunpack.c.h.b16 %v2487
    %v2877 = vunpack.c.l.b16 %v2488
    %v2878 = vunpack.c.h.b16 %v2488
    %v2879 = vunpack.c.l.b16 %v2489
    %v2880 = vunpack.c.h.b16 %v2489
    %v2881 = vunpack.c.l.b16 %v2490
    %v2882 = vunpack.c.h.b16 %v2490
    %v2883 = vunpack.c.l.b16 %v2491
    %v2884 = vunpack.c.h.b16 %v2491
    %v2885 = vunpack.c.l.b16 %v2492
    %v2886 = vunpack.c.h.b16 %v2492
    %v2887 = vunpack.c.l.b16 %v2493
    %v2888 = vunpack.c.h.b16 %v2493
    %v2889 = vunpack.c.l.b16 %v2494
    %v2890 = vunpack.c.h.b16 %v2494
    %v2891 = vunpack.c.l.b16 %v2495
    %v2892 = vunpack.c.h.b16 %v2495
    %v2893 = vunpack.c.l.b16 %v2496
    %v2894 = vunpack.c.h.b16 %v2496
    %v2895 = vunpack.c.l.b16 %v2497
    %v2896 = vunpack.c.h.b16 %v2497
    %v2897 = vunpack.c.l.b16 %v2498
    %v2898 = vunpack.c.h.b16 %v2498
    %v2899 = vunpack.c.l.b16 %v2499
    %v2900 = vunpack.c.h.b16 %v2499
    %v2901 = vunpack.c.l.b16 %v2500
    %v2902 = vunpack.c.h.b16 %v2500
    %v2903 = vunpack.c.l.b16 %v2501
    %v2904 = vunpack.c.h.b16 %v2501
    %v2905 = vunpack.c.l.b16 %v2502
    %v2906 = vunpack.c.h.b16 %v2502
    %v2907 = vunpack.c.l.b16 %v2503
    %v2908 = vunpack.c.h.b16 %v2503
    %v2909 = vunpack.c.l.b16 %v2504
    %v2910 = vunpack.c.h.b16 %v2504
    %v2911 = vpack.c.b16 %v2659, %v2655
    %v2912 = vpack.c.b16 %v2660, %v2656
    %v2913 = vpack.c.b16 %v2661, %v2657
    %v2914 = vpack.c.b16 %v2662, %v2658
    %v2915 = vpack.c.b16 %v2667, %v2663
    %v2916 = vpack.c.b16 %v2668, %v2664
    %v2917 = vpack.c.b16 %v2669, %v2665
    %v2918 = vpack.c.b16 %v2670, %v2666
    %v2919 = vpack.c.b16 %v2675, %v2671
    %v2920 = vpack.c.b16 %v2676, %v2672
    %v2921 = vpack.c.b16 %v2677, %v2673
    %v2922 = vpack.c.b16 %v2678, %v2674
    %v2923 = vpack.c.b16 %v2683, %v2679
    %v2924 = vpack.c.b16 %v2684, %v2680
    %v2925 = vpack.c.b16 %v2685, %v2681
    %v2926 = vpack.c.b16 %v2686, %v2682
    %v2927 = vpack.c.b16 %v2691, %v2687
    %v2928 = vpack.c.b16 %v2692, %v2688
    %v2929 = vpack.c.b16 %v2693, %v2689
    %v2930 = vpack.c.b16 %v2694, %v2690
    %v2931 = vpack.c.b16 %v2699, %v2695
    %v2932 = vpack.c.b16 %v2700, %v2696
    %v2933 = vpack.c.b16 %v2701, %v2697
    %v2934 = vpack.c.b16 %v2702, %v2698
    %v2935 = vpack.c.b16 %v2707, %v2703
    %v2936 = vpack.c.b16 %v2708, %v2704
    %v2937 = vpack.c.b16 %v2709, %v2705
    %v2938 = vpack.c.b16 %v2710, %v2706
    %v2939 = vpack.c.b16 %v2715, %v2711
    %v2940 = vpack.c.b16 %v2716, %v2712
    %v2941 = vpack.c.b16 %v2717, %v2713
    %v2942 = vpack.c.b16 %v2718, %v2714
    %v2943 = vpack.c.b16 %v2723, %v2719
    %v2944 = vpack.c.b16 %v2724, %v2720
    %v2945 = vpack.c.b16 %v2725, %v2721
    %v2946 = vpack.c.b16 %v2726, %v2722
    %v2947 = vpack.c.b16 %v2731, %v2727
    %v2948 = vpack.c.b16 %v2732, %v2728
    %v2949 = vpack.c.b16 %v2733, %v2729
    %v2950 = vpack.c.b16 %v2734, %v2730
    %v2951 = vpack.c.b16 %v2739, %v2735
    %v2952 = vpack.c.b16 %v2740, %v2736
    %v2953 = vpack.c.b16 %v2741, %v2737
    %v2954 = vpack.c.b16 %v2742, %v2738
    %v2955 = vpack.c.b16 %v2747, %v2743
    %v2956 = vpack.c.b16 %v2748, %v2744
    %v2957 = vpack.c.b16 %v2749, %v2745
    %v2958 = vpack.c.b16 %v2750, %v2746
    %v2959 = vpack.c.b16 %v2755, %v2751
    %v2960 = vpack.c.b16 %v2756, %v2752
    %v2961 = vpack.c.b16 %v2757, %v2753
    %v2962 = vpack.c.b16 %v2758, %v2754
    %v2963 = vpack.c.b16 %v2763, %v2759
    %v2964 = vpack.c.b16 %v2764, %v2760
    %v2965 = vpack.c.b16 %v2765, %v2761
    %v2966 = vpack.c.b16 %v2766, %v2762
    %v2967 = vpack.c.b16 %v2771, %v2767
    %v2968 = vpack.c.b16 %v2772, %v2768
    %v2969 = vpack.c.b16 %v2773, %v2769
    %v2970 = vpack.c.b16 %v2774, %v2770
    %v2971 = vpack.c.b16 %v2779, %v2775
    %v2972 = vpack.c.b16 %v2780, %v2776
    %v2973 = vpack.c.b16 %v2781, %v2777
    %v2974 = vpack.c.b16 %v2782, %v2778
    %v2975 = vpack.c.b16 %v2787, %v2783
    %v2976 = vpack.c.b16 %v2788, %v2784
    %v2977 = vpack.c.b16 %v2789, %v2785
    %v2978 = vpack.c.b16 %v2790, %v2786
    %v2979 = vpack.c.b16 %v2795, %v2791
    %v2980 = vpack.c.b16 %v2796, %v2792
    %v2981 = vpack.c.b16 %v2797, %v2793
    %v2982 = vpack.c.b16 %v2798, %v2794
    %v2983 = vpack.c.b16 %v2803, %v2799
    %v2984 = vpack.c.b16 %v2804, %v2800
    %v2985 = vpack.c.b16 %v2805, %v2801
    %v2986 = vpack.c.b16 %v2806, %v2802
    %v2987 = vpack.c.b16 %v2811, %v2807
    %v2988 = vpack.c.b16 %v2812, %v2808
    %v2989 = vpack.c.b16 %v2813, %v2809
    %v2990 = vpack.c.b16 %v2814, %v2810
    %v2991 = vpack.c.b16 %v2819, %v2815
    %v2992 = vpack.c.b16 %v2820, %v2816
    %v2993 = vpack.c.b16 %v2821, %v2817
    %v2994 = vpack.c.b16 %v2822, %v2818
    %v2995 = vpack.c.b16 %v2827, %v2823
    %v2996 = vpack.c.b16 %v2828, %v2824
    %v2997 = vpack.c.b16 %v2829, %v2825
    %v2998 = vpack.c.b16 %v2830, %v2826
    %v2999 = vpack.c.b16 %v2835, %v2831
    %v3000 = vpack.c.b16 %v2836, %v2832
    %v3001 = vpack.c.b16 %v2837, %v2833
    %v3002 = vpack.c.b16 %v2838, %v2834
    %v3003 = vpack.c.b16 %v2843, %v2839
    %v3004 = vpack.c.b16 %v2844, %v2840
    %v3005 = vpack.c.b16 %v2845, %v2841
    %v3006 = vpack.c.b16 %v2846, %v2842
    %v3007 = vpack.c.b16 %v2851, %v2847
    %v3008 = vpack.c.b16 %v2852, %v2848
    %v3009 = vpack.c.b16 %v2853, %v2849
    %v3010 = vpack.c.b16 %v2854, %v2850
    %v3011 = vpack.c.b16 %v2859, %v2855
    %v3012 = vpack.c.b16 %v2860, %v2856
    %v3013 = vpack.c.b16 %v2861, %v2857
    %v3014 = vpack.c.b16 %v2862, %v2858
    %v3015 = vpack.c.b16 %v2867, %v2863
    %v3016 = vpack.c.b16 %v2868, %v2864
    %v3017 = vpack.c.b16 %v2869, %v2865
    %v3018 = vpack.c.b16 %v2870, %v2866
    %v3019 = vpack.c.b16 %v2875, %v2871
    %v3020 = vpack.c.b16 %v2876, %v2872
    %v3021 = vpack.c.b16 %v2877, %v2873
    %v3022 = vpack.c.b16 %v2878, %v2874
    %v3023 = vpack.c.b16 %v2883, %v2879
    %v3024 = vpack.c.b16 %v2884, %v2880
    %v3025 = vpack.c.b16 %v2885, %v2881
    %v3026 = vpack.c.b16 %v2886, %v2882
    %v3027 = vpack.c.b16 %v2891, %v2887
    %v3028 = vpack.c.b16 %v2892, %v2888
    %v3029 = vpack.c.b16 %v2893, %v2889
    %v3030 = vpack.c.b16 %v2894, %v2890
    %v3031 = vpack.c.b16 %v2899, %v2895
    %v3032 = vpack.c.b16 %v2900, %v2896
    %v3033 = vpack.c.b16 %v2901, %v2897
    %v3034 = vpack.c.b16 %v2902, %v2898
    %v3035 = vpack.c.b16 %v2907, %v2903
    %v3036 = vpack.c.b16 %v2908, %v2904
    %v3037 = vpack.c.b16 %v2909, %v2905
    %v3038 = vpack.c.b16 %v2910, %v2906
    %3167 = vmatprep.subr.bf16.mxu0 %v2940
    %3168 = vmatpush1.bf16.msra.mxu0 %v2939
    %3169 = vmatprep.subr.bf16.mxu0 %v2936
    %3170 = vmatpush1.bf16.msra.mxu0 %v2935
    %3171 = vmatprep.subr.bf16.mxu0 %v2932
    %3172 = vmatpush1.bf16.msra.mxu0 %v2931
    %3173 = vmatprep.subr.bf16.mxu0 %v2928
    %3174 = vmatpush1.bf16.msra.mxu0 %v2927
    %3175 = vmatprep.subr.bf16.mxu0 %v2924
    %3176 = vmatpush1.bf16.msra.mxu0 %v2923
    %3177 = vmatprep.subr.bf16.mxu0 %v2920
    %3178 = vmatpush1.bf16.msra.mxu0 %v2919
    %3179 = vmatprep.subr.bf16.mxu0 %v2916
    %3180 = vmatpush1.bf16.msra.mxu0 %v2915
    %3181 = vmatprep.subr.bf16.mxu0 %v2912
    %3182 = vmatpush1.bf16.msra.mxu0 %v2911
    %3183 = vmatprep.subr.bf16.mxu0 %v2972
    %3184 = vmatpush2.bf16.msra.mxu0 %v2971
    %3185 = vmatprep.subr.bf16.mxu0 %v2968
    %3186 = vmatpush2.bf16.msra.mxu0 %v2967
    %3187 = vmatprep.subr.bf16.mxu0 %v2964
    %3188 = vmatpush2.bf16.msra.mxu0 %v2963
    %3189 = vmatprep.subr.bf16.mxu0 %v2960
    %3190 = vmatpush2.bf16.msra.mxu0 %v2959
    %3191 = vmatprep.subr.bf16.mxu0 %v2956
    %3192 = vmatpush2.bf16.msra.mxu0 %v2955
    %3193 = vmatprep.subr.bf16.mxu0 %v2952
    %3194 = vmatpush2.bf16.msra.mxu0 %v2951
    %3195 = vmatprep.subr.bf16.mxu0 %v2948
    %3196 = vmatpush2.bf16.msra.mxu0 %v2947
    %3197 = vmatprep.subr.bf16.mxu0 %v2944
    %3198 = vmatpush2.bf16.msra.mxu0 %v2943
    %3199 = vmatprep.mubr.bf16.mxu0 %v2374
    %3200 = vmatmul.mubr.bf16.gmra.mxu0 %v2373
    %v3201 = vpop.f32.mrf.mxu0
    %v3202 = vadd.f32 %v2510, %v3201
    %v3203 = vpop.f32.mrf.mxu0
    %v3204 = vadd.f32 %v2514, %v3203
    %v3205 = vpop.f32.mrf.mxu0
    %v3206 = vpop.f32.mrf.mxu0
    %3207 = vdwg.mxu0
    %3208 = vmatprep.subr.bf16.mxu0 %v3004
    %3209 = vmatpush1.bf16.msra.mxu0 %v3003
    %3210 = vmatprep.subr.bf16.mxu0 %v3000
    %3211 = vmatpush1.bf16.msra.mxu0 %v2999
    %3212 = vmatprep.subr.bf16.mxu0 %v2996
    %3213 = vmatpush1.bf16.msra.mxu0 %v2995
    %3214 = vmatprep.subr.bf16.mxu0 %v2992
    %3215 = vmatpush1.bf16.msra.mxu0 %v2991
    %3216 = vmatprep.subr.bf16.mxu0 %v2988
    %3217 = vmatpush1.bf16.msra.mxu0 %v2987
    %3218 = vmatprep.subr.bf16.mxu0 %v2984
    %3219 = vmatpush1.bf16.msra.mxu0 %v2983
    %3220 = vmatprep.subr.bf16.mxu0 %v2980
    %3221 = vmatpush1.bf16.msra.mxu0 %v2979
    %3222 = vmatprep.subr.bf16.mxu0 %v2976
    %3223 = vmatpush1.bf16.msra.mxu0 %v2975
    %3224 = vmatprep.subr.bf16.mxu0 %v3036
    %3225 = vmatpush2.bf16.msra.mxu0 %v3035
    %3226 = vmatprep.subr.bf16.mxu0 %v3032
    %3227 = vmatpush2.bf16.msra.mxu0 %v3031
    %3228 = vmatprep.subr.bf16.mxu0 %v3028
    %3229 = vmatpush2.bf16.msra.mxu0 %v3027
    %3230 = vmatprep.subr.bf16.mxu0 %v3024
    %3231 = vmatpush2.bf16.msra.mxu0 %v3023
    %3232 = vmatprep.subr.bf16.mxu0 %v3020
    %3233 = vmatpush2.bf16.msra.mxu0 %v3019
    %3234 = vmatprep.subr.bf16.mxu0 %v3016
    %3235 = vmatpush2.bf16.msra.mxu0 %v3015
    %3236 = vmatprep.subr.bf16.mxu0 %v3012
    %3237 = vmatpush2.bf16.msra.mxu0 %v3011
    %3238 = vmatprep.subr.bf16.mxu0 %v3008
    %3239 = vmatpush2.bf16.msra.mxu0 %v3007
    %3240 = vmatprep.mubr.bf16.mxu0 %v2376
    %3241 = vmatmul.mubr.bf16.gmra.mxu0 %v2375
    %v3242 = vpop.f32.mrf.mxu0
    %v3243 = vadd.f32 %v3202, %v3242
    %v3244 = vpop.f32.mrf.mxu0
    %v3245 = vadd.f32 %v3204, %v3244
    %v3246 = vpop.f32.mrf.mxu0
    %v3247 = vpop.f32.mrf.mxu0
    %3248 = vdwg.mxu0
    %3249 = vmatprep.subr.bf16.mxu0 %v2942
    %3250 = vmatpush1.bf16.msra.mxu0 %v2941
    %3251 = vmatprep.subr.bf16.mxu0 %v2938
    %3252 = vmatpush1.bf16.msra.mxu0 %v2937
    %3253 = vmatprep.subr.bf16.mxu0 %v2934
    %3254 = vmatpush1.bf16.msra.mxu0 %v2933
    %3255 = vmatprep.subr.bf16.mxu0 %v2930
    %3256 = vmatpush1.bf16.msra.mxu0 %v2929
    %3257 = vmatprep.subr.bf16.mxu0 %v2926
    %3258 = vmatpush1.bf16.msra.mxu0 %v2925
    %3259 = vmatprep.subr.bf16.mxu0 %v2922
    %3260 = vmatpush1.bf16.msra.mxu0 %v2921
    %3261 = vmatprep.subr.bf16.mxu0 %v2918
    %3262 = vmatpush1.bf16.msra.mxu0 %v2917
    %3263 = vmatprep.subr.bf16.mxu0 %v2914
    %3264 = vmatpush1.bf16.msra.mxu0 %v2913
    %3265 = vmatprep.subr.bf16.mxu0 %v2974
    %3266 = vmatpush2.bf16.msra.mxu0 %v2973
    %3267 = vmatprep.subr.bf16.mxu0 %v2970
    %3268 = vmatpush2.bf16.msra.mxu0 %v2969
    %3269 = vmatprep.subr.bf16.mxu0 %v2966
    %3270 = vmatpush2.bf16.msra.mxu0 %v2965
    %3271 = vmatprep.subr.bf16.mxu0 %v2962
    %3272 = vmatpush2.bf16.msra.mxu0 %v2961
    %3273 = vmatprep.subr.bf16.mxu0 %v2958
    %3274 = vmatpush2.bf16.msra.mxu0 %v2957
    %3275 = vmatprep.subr.bf16.mxu0 %v2954
    %3276 = vmatpush2.bf16.msra.mxu0 %v2953
    %3277 = vmatprep.subr.bf16.mxu0 %v2950
    %3278 = vmatpush2.bf16.msra.mxu0 %v2949
    %3279 = vmatprep.subr.bf16.mxu0 %v2946
    %3280 = vmatpush2.bf16.msra.mxu0 %v2945
    %3281 = vmatprep.mubr.bf16.mxu0 %v2374
    %3282 = vmatmul.mubr.bf16.gmra.mxu0 %v2373
    %v3283 = vpop.f32.mrf.mxu0
    %v3284 = vadd.f32 %v2518, %v3283
    %v3285 = vpop.f32.mrf.mxu0
    %v3286 = vadd.f32 %v2522, %v3285
    %v3287 = vpop.f32.mrf.mxu0
    %v3288 = vpop.f32.mrf.mxu0
    %3289 = vdwg.mxu0
    %3290 = vmatprep.subr.bf16.mxu0 %v3006
    %3291 = vmatpush1.bf16.msra.mxu0 %v3005
    %3292 = vmatprep.subr.bf16.mxu0 %v3002
    %3293 = vmatpush1.bf16.msra.mxu0 %v3001
    %3294 = vmatprep.subr.bf16.mxu0 %v2998
    %3295 = vmatpush1.bf16.msra.mxu0 %v2997
    %3296 = vmatprep.subr.bf16.mxu0 %v2994
    %3297 = vmatpush1.bf16.msra.mxu0 %v2993
    %3298 = vmatprep.subr.bf16.mxu0 %v2990
    %3299 = vmatpush1.bf16.msra.mxu0 %v2989
    %3300 = vmatprep.subr.bf16.mxu0 %v2986
    %3301 = vmatpush1.bf16.msra.mxu0 %v2985
    %3302 = vmatprep.subr.bf16.mxu0 %v2982
    %3303 = vmatpush1.bf16.msra.mxu0 %v2981
    %3304 = vmatprep.subr.bf16.mxu0 %v2978
    %3305 = vmatpush1.bf16.msra.mxu0 %v2977
    %3306 = vmatprep.subr.bf16.mxu0 %v3038
    %3307 = vmatpush2.bf16.msra.mxu0 %v3037
    %3308 = vmatprep.subr.bf16.mxu0 %v3034
    %3309 = vmatpush2.bf16.msra.mxu0 %v3033
    %3310 = vmatprep.subr.bf16.mxu0 %v3030
    %3311 = vmatpush2.bf16.msra.mxu0 %v3029
    %3312 = vmatprep.subr.bf16.mxu0 %v3026
    %3313 = vmatpush2.bf16.msra.mxu0 %v3025
    %3314 = vmatprep.subr.bf16.mxu0 %v3022
    %3315 = vmatpush2.bf16.msra.mxu0 %v3021
    %3316 = vmatprep.subr.bf16.mxu0 %v3018
    %3317 = vmatpush2.bf16.msra.mxu0 %v3017
    %3318 = vmatprep.subr.bf16.mxu0 %v3014
    %3319 = vmatpush2.bf16.msra.mxu0 %v3013
    %3320 = vmatprep.subr.bf16.mxu0 %v3010
    %3321 = vmatpush2.bf16.msra.mxu0 %v3009
    %3322 = vmatprep.mubr.bf16.mxu0 %v2376
    %3323 = vmatmul.mubr.bf16.gmra.mxu0 %v2375
    %v3324 = vpop.f32.mrf.mxu0
    %v3325 = vadd.f32 %v3284, %v3324
    %v3326 = vpop.f32.mrf.mxu0
    %v3327 = vadd.f32 %v3286, %v3326
    %v3328 = vpop.f32.mrf.mxu0
    %v3329 = vpop.f32.mrf.mxu0
    %3330 = vdwg.mxu0
    %v3331 = vadd.f32 %v3243, %v3245
    %v3332 = vadd.f32 %v3331, %v3325
    %v3333 = vadd.f32 %v3332, %v3327
    %3334 = vadd.xlane.f32.xlu0 %v3333
    %v3335 = vpop.xlane.xlu0 %3334
    %v3336 = vmul.f32 %v3335, %v273
    %v3337 = vsub.f32 %v3243, %v3336
    %v3338 = vsub.f32 %v3245, %v3336
    %v3339 = vsub.f32 %v3325, %v3336
    %v3340 = vsub.f32 %v3327, %v3336
    %v3341 = vmul.f32 %v3337, %v3337
    %v3342 = vmul.f32 %v3338, %v3338
    %v3343 = vmul.f32 %v3339, %v3339
    %v3344 = vmul.f32 %v3340, %v3340
    %v3345 = vadd.f32 %v3341, %v3342
    %v3346 = vadd.f32 %v3345, %v3343
    %v3347 = vadd.f32 %v3346, %v3344
    %3348 = vadd.xlane.f32.xlu0 %v3347
    %v3349 = vpop.xlane.xlu0 %3348
    %v3350 = vmul.f32 %v3349, %v273
    %v3351 = vadd.f32 %v3350, 1e-05
    %v3352 = vrsqrt.pop %v3351
    %v3353 = vmul.f32 %v3337, %v3352
    %v3354 = vmul.f32 %v3338, %v3352
    %v3355 = vmul.f32 %v3339, %v3352
    %v3356 = vmul.f32 %v3340, %v3352
    %v3357 = vld [vmem:[%s14] sm:$0xf]
    %v3359 = vlaneseq
    %v3360 = vshrl.u32 %v3359, 7
    %v3361 = vsub.s32 0, %v3360
    %v3362 = vrot.slane %v3357, %v3361
    %v3363 = vlaneseq
    %v3364 = vshrl.u32 %v3363, 7
    %v3365 = vsub.s32 1, %v3364
    %v3366 = vrot.slane %v3357, %v3365
    %v3367 = vlaneseq
    %v3368 = vshrl.u32 %v3367, 7
    %v3369 = vsub.s32 2, %v3368
    %v3370 = vrot.slane %v3357, %v3369
    %v3371 = vlaneseq
    %v3372 = vshrl.u32 %v3371, 7
    %v3373 = vsub.s32 3, %v3372
    %v3374 = vrot.slane %v3357, %v3373
    %v3379 = vmul.f32 %v3353, %v3362
    %v3380 = vmul.f32 %v3354, %v3366
    %v3381 = vmul.f32 %v3355, %v3370
    %v3382 = vmul.f32 %v3356, %v3374
    %v3383 = vld [vmem:[%s15] sm:$0xf]
    %v3385 = vlaneseq
    %v3386 = vshrl.u32 %v3385, 7
    %v3387 = vsub.s32 0, %v3386
    %v3388 = vrot.slane %v3383, %v3387
    %v3389 = vlaneseq
    %v3390 = vshrl.u32 %v3389, 7
    %v3391 = vsub.s32 1, %v3390
    %v3392 = vrot.slane %v3383, %v3391
    %v3393 = vlaneseq
    %v3394 = vshrl.u32 %v3393, 7
    %v3395 = vsub.s32 2, %v3394
    %v3396 = vrot.slane %v3383, %v3395
    %v3397 = vlaneseq
    %v3398 = vshrl.u32 %v3397, 7
    %v3399 = vsub.s32 3, %v3398
    %v3400 = vrot.slane %v3383, %v3399
    %v3405 = vadd.f32 %v3379, %v3388
    %v3406 = vadd.f32 %v3380, %v3392
    %v3407 = vadd.f32 %v3381, %v3396
    %v3408 = vadd.f32 %v3382, %v3400
    %v3409 = vxor.u32 %v3405, 2147483648
    %v3410 = vxor.u32 %v3406, 2147483648
    %v3411 = vxor.u32 %v3407, 2147483648
    %v3412 = vxor.u32 %v3408, 2147483648
    %v3413 = vmul.f32 %v3409, 1.442695
    %v3414 = vpow.pop %v3413
    %v3415 = vmul.f32 %v3410, 1.442695
    %v3416 = vpow.pop %v3415
    %v3417 = vmul.f32 %v3411, 1.442695
    %v3418 = vpow.pop %v3417
    %v3419 = vmul.f32 %v3412, 1.442695
    %v3420 = vpow.pop %v3419
    %v3421 = vadd.f32 %v3414, 1.0
    %v3422 = vadd.f32 %v3416, 1.0
    %v3423 = vadd.f32 %v3418, 1.0
    %v3424 = vadd.f32 %v3420, 1.0
    %v3425 = vrcp.pop %v3421
    %v3426 = vmul.f32 1.0, %v3425
    %v3427 = vrcp.pop %v3422
    %v3428 = vmul.f32 1.0, %v3427
    %v3429 = vrcp.pop %v3423
    %v3430 = vmul.f32 1.0, %v3429
    %v3431 = vrcp.pop %v3424
    %v3432 = vmul.f32 1.0, %v3431
    %v3433 = vmul.f32 %v3405, %v3426
    %v3434 = vmul.f32 %v3406, %v3428
    %v3435 = vmul.f32 %v3407, %v3430
    %v3436 = vmul.f32 %v3408, %v3432
    %v3437 = vpack.c.bf16 %v3433, %v3433
    %v3438 = vpack.c.bf16 %v3434, %v3434
    %v3439 = vpack.c.bf16 %v3435, %v3435
    %v3440 = vpack.c.bf16 %v3436, %v3436
    %v3441 = vld [vmem:[#allocation6] sm:$0xff]
    %v3442 = vld [vmem:[#allocation6 + $0x8] sm:$0xff]
    %v3443 = vld [vmem:[#allocation6 + $0x10] sm:$0xff]
    %v3444 = vld [vmem:[#allocation6 + $0x18] sm:$0xff]
    %v3445 = vld [vmem:[#allocation6 + $0x20] sm:$0xff]
    %v3446 = vld [vmem:[#allocation6 + $0x28] sm:$0xff]
    %v3447 = vld [vmem:[#allocation6 + $0x30] sm:$0xff]
    %v3448 = vld [vmem:[#allocation6 + $0x38] sm:$0xff]
    %v3449 = vld [vmem:[#allocation6 + $0x40] sm:$0xff]
    %v3450 = vld [vmem:[#allocation6 + $0x48] sm:$0xff]
    %v3451 = vld [vmem:[#allocation6 + $0x50] sm:$0xff]
    %v3452 = vld [vmem:[#allocation6 + $0x58] sm:$0xff]
    %v3453 = vld [vmem:[#allocation6 + $0x60] sm:$0xff]
    %v3454 = vld [vmem:[#allocation6 + $0x68] sm:$0xff]
    %v3455 = vld [vmem:[#allocation6 + $0x70] sm:$0xff]
    %v3456 = vld [vmem:[#allocation6 + $0x78] sm:$0xff]
    %v3457 = vld [vmem:[#allocation6 + $0x80] sm:$0xff]
    %v3458 = vld [vmem:[#allocation6 + $0x88] sm:$0xff]
    %v3459 = vld [vmem:[#allocation6 + $0x90] sm:$0xff]
    %v3460 = vld [vmem:[#allocation6 + $0x98] sm:$0xff]
    %v3461 = vld [vmem:[#allocation6 + $0xa0] sm:$0xff]
    %v3462 = vld [vmem:[#allocation6 + $0xa8] sm:$0xff]
    %v3463 = vld [vmem:[#allocation6 + $0xb0] sm:$0xff]
    %v3464 = vld [vmem:[#allocation6 + $0xb8] sm:$0xff]
    %v3465 = vld [vmem:[#allocation6 + $0xc0] sm:$0xff]
    %v3466 = vld [vmem:[#allocation6 + $0xc8] sm:$0xff]
    %v3467 = vld [vmem:[#allocation6 + $0xd0] sm:$0xff]
    %v3468 = vld [vmem:[#allocation6 + $0xd8] sm:$0xff]
    %v3469 = vld [vmem:[#allocation6 + $0xe0] sm:$0xff]
    %v3470 = vld [vmem:[#allocation6 + $0xe8] sm:$0xff]
    %v3471 = vld [vmem:[#allocation6 + $0xf0] sm:$0xff]
    %v3472 = vld [vmem:[#allocation6 + $0xf8] sm:$0xff]
    %v3473 = vld [vmem:[#allocation6 + $0x100] sm:$0xff]
    %v3474 = vld [vmem:[#allocation6 + $0x108] sm:$0xff]
    %v3475 = vld [vmem:[#allocation6 + $0x110] sm:$0xff]
    %v3476 = vld [vmem:[#allocation6 + $0x118] sm:$0xff]
    %v3477 = vld [vmem:[#allocation6 + $0x120] sm:$0xff]
    %v3478 = vld [vmem:[#allocation6 + $0x128] sm:$0xff]
    %v3479 = vld [vmem:[#allocation6 + $0x130] sm:$0xff]
    %v3480 = vld [vmem:[#allocation6 + $0x138] sm:$0xff]
    %v3481 = vld [vmem:[#allocation6 + $0x140] sm:$0xff]
    %v3482 = vld [vmem:[#allocation6 + $0x148] sm:$0xff]
    %v3483 = vld [vmem:[#allocation6 + $0x150] sm:$0xff]
    %v3484 = vld [vmem:[#allocation6 + $0x158] sm:$0xff]
    %v3485 = vld [vmem:[#allocation6 + $0x160] sm:$0xff]
    %v3486 = vld [vmem:[#allocation6 + $0x168] sm:$0xff]
    %v3487 = vld [vmem:[#allocation6 + $0x170] sm:$0xff]
    %v3488 = vld [vmem:[#allocation6 + $0x178] sm:$0xff]
    %v3489 = vld [vmem:[#allocation6 + $0x180] sm:$0xff]
    %v3490 = vld [vmem:[#allocation6 + $0x188] sm:$0xff]
    %v3491 = vld [vmem:[#allocation6 + $0x190] sm:$0xff]
    %v3492 = vld [vmem:[#allocation6 + $0x198] sm:$0xff]
    %v3493 = vld [vmem:[#allocation6 + $0x1a0] sm:$0xff]
    %v3494 = vld [vmem:[#allocation6 + $0x1a8] sm:$0xff]
    %v3495 = vld [vmem:[#allocation6 + $0x1b0] sm:$0xff]
    %v3496 = vld [vmem:[#allocation6 + $0x1b8] sm:$0xff]
    %v3497 = vld [vmem:[#allocation6 + $0x1c0] sm:$0xff]
    %v3498 = vld [vmem:[#allocation6 + $0x1c8] sm:$0xff]
    %v3499 = vld [vmem:[#allocation6 + $0x1d0] sm:$0xff]
    %v3500 = vld [vmem:[#allocation6 + $0x1d8] sm:$0xff]
    %v3501 = vld [vmem:[#allocation6 + $0x1e0] sm:$0xff]
    %v3502 = vld [vmem:[#allocation6 + $0x1e8] sm:$0xff]
    %v3503 = vld [vmem:[#allocation6 + $0x1f0] sm:$0xff]
    %v3504 = vld [vmem:[#allocation6 + $0x1f8] sm:$0xff]
    %v3505 = vld [vmem:[#allocation6 + $0x200] sm:$0xff]
    %v3506 = vld [vmem:[#allocation6 + $0x208] sm:$0xff]
    %v3507 = vld [vmem:[#allocation6 + $0x210] sm:$0xff]
    %v3508 = vld [vmem:[#allocation6 + $0x218] sm:$0xff]
    %v3509 = vld [vmem:[#allocation6 + $0x220] sm:$0xff]
    %v3510 = vld [vmem:[#allocation6 + $0x228] sm:$0xff]
    %v3511 = vld [vmem:[#allocation6 + $0x230] sm:$0xff]
    %v3512 = vld [vmem:[#allocation6 + $0x238] sm:$0xff]
    %v3513 = vld [vmem:[#allocation6 + $0x240] sm:$0xff]
    %v3514 = vld [vmem:[#allocation6 + $0x248] sm:$0xff]
    %v3515 = vld [vmem:[#allocation6 + $0x250] sm:$0xff]
    %v3516 = vld [vmem:[#allocation6 + $0x258] sm:$0xff]
    %v3517 = vld [vmem:[#allocation6 + $0x260] sm:$0xff]
    %v3518 = vld [vmem:[#allocation6 + $0x268] sm:$0xff]
    %v3519 = vld [vmem:[#allocation6 + $0x270] sm:$0xff]
    %v3520 = vld [vmem:[#allocation6 + $0x278] sm:$0xff]
    %v3521 = vld [vmem:[#allocation6 + $0x280] sm:$0xff]
    %v3522 = vld [vmem:[#allocation6 + $0x288] sm:$0xff]
    %v3523 = vld [vmem:[#allocation6 + $0x290] sm:$0xff]
    %v3524 = vld [vmem:[#allocation6 + $0x298] sm:$0xff]
    %v3525 = vld [vmem:[#allocation6 + $0x2a0] sm:$0xff]
    %v3526 = vld [vmem:[#allocation6 + $0x2a8] sm:$0xff]
    %v3527 = vld [vmem:[#allocation6 + $0x2b0] sm:$0xff]
    %v3528 = vld [vmem:[#allocation6 + $0x2b8] sm:$0xff]
    %v3529 = vld [vmem:[#allocation6 + $0x2c0] sm:$0xff]
    %v3530 = vld [vmem:[#allocation6 + $0x2c8] sm:$0xff]
    %v3531 = vld [vmem:[#allocation6 + $0x2d0] sm:$0xff]
    %v3532 = vld [vmem:[#allocation6 + $0x2d8] sm:$0xff]
    %v3533 = vld [vmem:[#allocation6 + $0x2e0] sm:$0xff]
    %v3534 = vld [vmem:[#allocation6 + $0x2e8] sm:$0xff]
    %v3535 = vld [vmem:[#allocation6 + $0x2f0] sm:$0xff]
    %v3536 = vld [vmem:[#allocation6 + $0x2f8] sm:$0xff]
    %v3537 = vld [vmem:[#allocation6 + $0x300] sm:$0xff]
    %v3538 = vld [vmem:[#allocation6 + $0x308] sm:$0xff]
    %v3539 = vld [vmem:[#allocation6 + $0x310] sm:$0xff]
    %v3540 = vld [vmem:[#allocation6 + $0x318] sm:$0xff]
    %v3541 = vld [vmem:[#allocation6 + $0x320] sm:$0xff]
    %v3542 = vld [vmem:[#allocation6 + $0x328] sm:$0xff]
    %v3543 = vld [vmem:[#allocation6 + $0x330] sm:$0xff]
    %v3544 = vld [vmem:[#allocation6 + $0x338] sm:$0xff]
    %v3545 = vld [vmem:[#allocation6 + $0x340] sm:$0xff]
    %v3546 = vld [vmem:[#allocation6 + $0x348] sm:$0xff]
    %v3547 = vld [vmem:[#allocation6 + $0x350] sm:$0xff]
    %v3548 = vld [vmem:[#allocation6 + $0x358] sm:$0xff]
    %v3549 = vld [vmem:[#allocation6 + $0x360] sm:$0xff]
    %v3550 = vld [vmem:[#allocation6 + $0x368] sm:$0xff]
    %v3551 = vld [vmem:[#allocation6 + $0x370] sm:$0xff]
    %v3552 = vld [vmem:[#allocation6 + $0x378] sm:$0xff]
    %v3553 = vld [vmem:[#allocation6 + $0x380] sm:$0xff]
    %v3554 = vld [vmem:[#allocation6 + $0x388] sm:$0xff]
    %v3555 = vld [vmem:[#allocation6 + $0x390] sm:$0xff]
    %v3556 = vld [vmem:[#allocation6 + $0x398] sm:$0xff]
    %v3557 = vld [vmem:[#allocation6 + $0x3a0] sm:$0xff]
    %v3558 = vld [vmem:[#allocation6 + $0x3a8] sm:$0xff]
    %v3559 = vld [vmem:[#allocation6 + $0x3b0] sm:$0xff]
    %v3560 = vld [vmem:[#allocation6 + $0x3b8] sm:$0xff]
    %v3561 = vld [vmem:[#allocation6 + $0x3c0] sm:$0xff]
    %v3562 = vld [vmem:[#allocation6 + $0x3c8] sm:$0xff]
    %v3563 = vld [vmem:[#allocation6 + $0x3d0] sm:$0xff]
    %v3564 = vld [vmem:[#allocation6 + $0x3d8] sm:$0xff]
    %v3565 = vld [vmem:[#allocation6 + $0x3e0] sm:$0xff]
    %v3566 = vld [vmem:[#allocation6 + $0x3e8] sm:$0xff]
    %v3567 = vld [vmem:[#allocation6 + $0x3f0] sm:$0xff]
    %v3568 = vld [vmem:[#allocation6 + $0x3f8] sm:$0xff]
    %v3569 = vld [vmem:[%s17] sm:$0xf]
    %v3571 = vlaneseq
    %v3572 = vshrl.u32 %v3571, 7
    %v3573 = vsub.s32 0, %v3572
    %v3574 = vrot.slane %v3569, %v3573
    %v3575 = vlaneseq
    %v3576 = vshrl.u32 %v3575, 7
    %v3577 = vsub.s32 1, %v3576
    %v3578 = vrot.slane %v3569, %v3577
    %v3579 = vlaneseq
    %v3580 = vshrl.u32 %v3579, 7
    %v3581 = vsub.s32 2, %v3580
    %v3582 = vrot.slane %v3569, %v3581
    %v3583 = vlaneseq
    %v3584 = vshrl.u32 %v3583, 7
    %v3585 = vsub.s32 3, %v3584
    %v3586 = vrot.slane %v3569, %v3585
    %v3719 = vunpack.c.l.b16 %v3441
    %v3720 = vunpack.c.h.b16 %v3441
    %v3721 = vunpack.c.l.b16 %v3442
    %v3722 = vunpack.c.h.b16 %v3442
    %v3723 = vunpack.c.l.b16 %v3443
    %v3724 = vunpack.c.h.b16 %v3443
    %v3725 = vunpack.c.l.b16 %v3444
    %v3726 = vunpack.c.h.b16 %v3444
    %v3727 = vunpack.c.l.b16 %v3445
    %v3728 = vunpack.c.h.b16 %v3445
    %v3729 = vunpack.c.l.b16 %v3446
    %v3730 = vunpack.c.h.b16 %v3446
    %v3731 = vunpack.c.l.b16 %v3447
    %v3732 = vunpack.c.h.b16 %v3447
    %v3733 = vunpack.c.l.b16 %v3448
    %v3734 = vunpack.c.h.b16 %v3448
    %v3735 = vunpack.c.l.b16 %v3449
    %v3736 = vunpack.c.h.b16 %v3449
    %v3737 = vunpack.c.l.b16 %v3450
    %v3738 = vunpack.c.h.b16 %v3450
    %v3739 = vunpack.c.l.b16 %v3451
    %v3740 = vunpack.c.h.b16 %v3451
    %v3741 = vunpack.c.l.b16 %v3452
    %v3742 = vunpack.c.h.b16 %v3452
    %v3743 = vunpack.c.l.b16 %v3453
    %v3744 = vunpack.c.h.b16 %v3453
    %v3745 = vunpack.c.l.b16 %v3454
    %v3746 = vunpack.c.h.b16 %v3454
    %v3747 = vunpack.c.l.b16 %v3455
    %v3748 = vunpack.c.h.b16 %v3455
    %v3749 = vunpack.c.l.b16 %v3456
    %v3750 = vunpack.c.h.b16 %v3456
    %v3751 = vunpack.c.l.b16 %v3457
    %v3752 = vunpack.c.h.b16 %v3457
    %v3753 = vunpack.c.l.b16 %v3458
    %v3754 = vunpack.c.h.b16 %v3458
    %v3755 = vunpack.c.l.b16 %v3459
    %v3756 = vunpack.c.h.b16 %v3459
    %v3757 = vunpack.c.l.b16 %v3460
    %v3758 = vunpack.c.h.b16 %v3460
    %v3759 = vunpack.c.l.b16 %v3461
    %v3760 = vunpack.c.h.b16 %v3461
    %v3761 = vunpack.c.l.b16 %v3462
    %v3762 = vunpack.c.h.b16 %v3462
    %v3763 = vunpack.c.l.b16 %v3463
    %v3764 = vunpack.c.h.b16 %v3463
    %v3765 = vunpack.c.l.b16 %v3464
    %v3766 = vunpack.c.h.b16 %v3464
    %v3767 = vunpack.c.l.b16 %v3465
    %v3768 = vunpack.c.h.b16 %v3465
    %v3769 = vunpack.c.l.b16 %v3466
    %v3770 = vunpack.c.h.b16 %v3466
    %v3771 = vunpack.c.l.b16 %v3467
    %v3772 = vunpack.c.h.b16 %v3467
    %v3773 = vunpack.c.l.b16 %v3468
    %v3774 = vunpack.c.h.b16 %v3468
    %v3775 = vunpack.c.l.b16 %v3469
    %v3776 = vunpack.c.h.b16 %v3469
    %v3777 = vunpack.c.l.b16 %v3470
    %v3778 = vunpack.c.h.b16 %v3470
    %v3779 = vunpack.c.l.b16 %v3471
    %v3780 = vunpack.c.h.b16 %v3471
    %v3781 = vunpack.c.l.b16 %v3472
    %v3782 = vunpack.c.h.b16 %v3472
    %v3783 = vunpack.c.l.b16 %v3473
    %v3784 = vunpack.c.h.b16 %v3473
    %v3785 = vunpack.c.l.b16 %v3474
    %v3786 = vunpack.c.h.b16 %v3474
    %v3787 = vunpack.c.l.b16 %v3475
    %v3788 = vunpack.c.h.b16 %v3475
    %v3789 = vunpack.c.l.b16 %v3476
    %v3790 = vunpack.c.h.b16 %v3476
    %v3791 = vunpack.c.l.b16 %v3477
    %v3792 = vunpack.c.h.b16 %v3477
    %v3793 = vunpack.c.l.b16 %v3478
    %v3794 = vunpack.c.h.b16 %v3478
    %v3795 = vunpack.c.l.b16 %v3479
    %v3796 = vunpack.c.h.b16 %v3479
    %v3797 = vunpack.c.l.b16 %v3480
    %v3798 = vunpack.c.h.b16 %v3480
    %v3799 = vunpack.c.l.b16 %v3481
    %v3800 = vunpack.c.h.b16 %v3481
    %v3801 = vunpack.c.l.b16 %v3482
    %v3802 = vunpack.c.h.b16 %v3482
    %v3803 = vunpack.c.l.b16 %v3483
    %v3804 = vunpack.c.h.b16 %v3483
    %v3805 = vunpack.c.l.b16 %v3484
    %v3806 = vunpack.c.h.b16 %v3484
    %v3807 = vunpack.c.l.b16 %v3485
    %v3808 = vunpack.c.h.b16 %v3485
    %v3809 = vunpack.c.l.b16 %v3486
    %v3810 = vunpack.c.h.b16 %v3486
    %v3811 = vunpack.c.l.b16 %v3487
    %v3812 = vunpack.c.h.b16 %v3487
    %v3813 = vunpack.c.l.b16 %v3488
    %v3814 = vunpack.c.h.b16 %v3488
    %v3815 = vunpack.c.l.b16 %v3489
    %v3816 = vunpack.c.h.b16 %v3489
    %v3817 = vunpack.c.l.b16 %v3490
    %v3818 = vunpack.c.h.b16 %v3490
    %v3819 = vunpack.c.l.b16 %v3491
    %v3820 = vunpack.c.h.b16 %v3491
    %v3821 = vunpack.c.l.b16 %v3492
    %v3822 = vunpack.c.h.b16 %v3492
    %v3823 = vunpack.c.l.b16 %v3493
    %v3824 = vunpack.c.h.b16 %v3493
    %v3825 = vunpack.c.l.b16 %v3494
    %v3826 = vunpack.c.h.b16 %v3494
    %v3827 = vunpack.c.l.b16 %v3495
    %v3828 = vunpack.c.h.b16 %v3495
    %v3829 = vunpack.c.l.b16 %v3496
    %v3830 = vunpack.c.h.b16 %v3496
    %v3831 = vunpack.c.l.b16 %v3497
    %v3832 = vunpack.c.h.b16 %v3497
    %v3833 = vunpack.c.l.b16 %v3498
    %v3834 = vunpack.c.h.b16 %v3498
    %v3835 = vunpack.c.l.b16 %v3499
    %v3836 = vunpack.c.h.b16 %v3499
    %v3837 = vunpack.c.l.b16 %v3500
    %v3838 = vunpack.c.h.b16 %v3500
    %v3839 = vunpack.c.l.b16 %v3501
    %v3840 = vunpack.c.h.b16 %v3501
    %v3841 = vunpack.c.l.b16 %v3502
    %v3842 = vunpack.c.h.b16 %v3502
    %v3843 = vunpack.c.l.b16 %v3503
    %v3844 = vunpack.c.h.b16 %v3503
    %v3845 = vunpack.c.l.b16 %v3504
    %v3846 = vunpack.c.h.b16 %v3504
    %v3847 = vunpack.c.l.b16 %v3505
    %v3848 = vunpack.c.h.b16 %v3505
    %v3849 = vunpack.c.l.b16 %v3506
    %v3850 = vunpack.c.h.b16 %v3506
    %v3851 = vunpack.c.l.b16 %v3507
    %v3852 = vunpack.c.h.b16 %v3507
    %v3853 = vunpack.c.l.b16 %v3508
    %v3854 = vunpack.c.h.b16 %v3508
    %v3855 = vunpack.c.l.b16 %v3509
    %v3856 = vunpack.c.h.b16 %v3509
    %v3857 = vunpack.c.l.b16 %v3510
    %v3858 = vunpack.c.h.b16 %v3510
    %v3859 = vunpack.c.l.b16 %v3511
    %v3860 = vunpack.c.h.b16 %v3511
    %v3861 = vunpack.c.l.b16 %v3512
    %v3862 = vunpack.c.h.b16 %v3512
    %v3863 = vunpack.c.l.b16 %v3513
    %v3864 = vunpack.c.h.b16 %v3513
    %v3865 = vunpack.c.l.b16 %v3514
    %v3866 = vunpack.c.h.b16 %v3514
    %v3867 = vunpack.c.l.b16 %v3515
    %v3868 = vunpack.c.h.b16 %v3515
    %v3869 = vunpack.c.l.b16 %v3516
    %v3870 = vunpack.c.h.b16 %v3516
    %v3871 = vunpack.c.l.b16 %v3517
    %v3872 = vunpack.c.h.b16 %v3517
    %v3873 = vunpack.c.l.b16 %v3518
    %v3874 = vunpack.c.h.b16 %v3518
    %v3875 = vunpack.c.l.b16 %v3519
    %v3876 = vunpack.c.h.b16 %v3519
    %v3877 = vunpack.c.l.b16 %v3520
    %v3878 = vunpack.c.h.b16 %v3520
    %v3879 = vunpack.c.l.b16 %v3521
    %v3880 = vunpack.c.h.b16 %v3521
    %v3881 = vunpack.c.l.b16 %v3522
    %v3882 = vunpack.c.h.b16 %v3522
    %v3883 = vunpack.c.l.b16 %v3523
    %v3884 = vunpack.c.h.b16 %v3523
    %v3885 = vunpack.c.l.b16 %v3524
    %v3886 = vunpack.c.h.b16 %v3524
    %v3887 = vunpack.c.l.b16 %v3525
    %v3888 = vunpack.c.h.b16 %v3525
    %v3889 = vunpack.c.l.b16 %v3526
    %v3890 = vunpack.c.h.b16 %v3526
    %v3891 = vunpack.c.l.b16 %v3527
    %v3892 = vunpack.c.h.b16 %v3527
    %v3893 = vunpack.c.l.b16 %v3528
    %v3894 = vunpack.c.h.b16 %v3528
    %v3895 = vunpack.c.l.b16 %v3529
    %v3896 = vunpack.c.h.b16 %v3529
    %v3897 = vunpack.c.l.b16 %v3530
    %v3898 = vunpack.c.h.b16 %v3530
    %v3899 = vunpack.c.l.b16 %v3531
    %v3900 = vunpack.c.h.b16 %v3531
    %v3901 = vunpack.c.l.b16 %v3532
    %v3902 = vunpack.c.h.b16 %v3532
    %v3903 = vunpack.c.l.b16 %v3533
    %v3904 = vunpack.c.h.b16 %v3533
    %v3905 = vunpack.c.l.b16 %v3534
    %v3906 = vunpack.c.h.b16 %v3534
    %v3907 = vunpack.c.l.b16 %v3535
    %v3908 = vunpack.c.h.b16 %v3535
    %v3909 = vunpack.c.l.b16 %v3536
    %v3910 = vunpack.c.h.b16 %v3536
    %v3911 = vunpack.c.l.b16 %v3537
    %v3912 = vunpack.c.h.b16 %v3537
    %v3913 = vunpack.c.l.b16 %v3538
    %v3914 = vunpack.c.h.b16 %v3538
    %v3915 = vunpack.c.l.b16 %v3539
    %v3916 = vunpack.c.h.b16 %v3539
    %v3917 = vunpack.c.l.b16 %v3540
    %v3918 = vunpack.c.h.b16 %v3540
    %v3919 = vunpack.c.l.b16 %v3541
    %v3920 = vunpack.c.h.b16 %v3541
    %v3921 = vunpack.c.l.b16 %v3542
    %v3922 = vunpack.c.h.b16 %v3542
    %v3923 = vunpack.c.l.b16 %v3543
    %v3924 = vunpack.c.h.b16 %v3543
    %v3925 = vunpack.c.l.b16 %v3544
    %v3926 = vunpack.c.h.b16 %v3544
    %v3927 = vunpack.c.l.b16 %v3545
    %v3928 = vunpack.c.h.b16 %v3545
    %v3929 = vunpack.c.l.b16 %v3546
    %v3930 = vunpack.c.h.b16 %v3546
    %v3931 = vunpack.c.l.b16 %v3547
    %v3932 = vunpack.c.h.b16 %v3547
    %v3933 = vunpack.c.l.b16 %v3548
    %v3934 = vunpack.c.h.b16 %v3548
    %v3935 = vunpack.c.l.b16 %v3549
    %v3936 = vunpack.c.h.b16 %v3549
    %v3937 = vunpack.c.l.b16 %v3550
    %v3938 = vunpack.c.h.b16 %v3550
    %v3939 = vunpack.c.l.b16 %v3551
    %v3940 = vunpack.c.h.b16 %v3551
    %v3941 = vunpack.c.l.b16 %v3552
    %v3942 = vunpack.c.h.b16 %v3552
    %v3943 = vunpack.c.l.b16 %v3553
    %v3944 = vunpack.c.h.b16 %v3553
    %v3945 = vunpack.c.l.b16 %v3554
    %v3946 = vunpack.c.h.b16 %v3554
    %v3947 = vunpack.c.l.b16 %v3555
    %v3948 = vunpack.c.h.b16 %v3555
    %v3949 = vunpack.c.l.b16 %v3556
    %v3950 = vunpack.c.h.b16 %v3556
    %v3951 = vunpack.c.l.b16 %v3557
    %v3952 = vunpack.c.h.b16 %v3557
    %v3953 = vunpack.c.l.b16 %v3558
    %v3954 = vunpack.c.h.b16 %v3558
    %v3955 = vunpack.c.l.b16 %v3559
    %v3956 = vunpack.c.h.b16 %v3559
    %v3957 = vunpack.c.l.b16 %v3560
    %v3958 = vunpack.c.h.b16 %v3560
    %v3959 = vunpack.c.l.b16 %v3561
    %v3960 = vunpack.c.h.b16 %v3561
    %v3961 = vunpack.c.l.b16 %v3562
    %v3962 = vunpack.c.h.b16 %v3562
    %v3963 = vunpack.c.l.b16 %v3563
    %v3964 = vunpack.c.h.b16 %v3563
    %v3965 = vunpack.c.l.b16 %v3564
    %v3966 = vunpack.c.h.b16 %v3564
    %v3967 = vunpack.c.l.b16 %v3565
    %v3968 = vunpack.c.h.b16 %v3565
    %v3969 = vunpack.c.l.b16 %v3566
    %v3970 = vunpack.c.h.b16 %v3566
    %v3971 = vunpack.c.l.b16 %v3567
    %v3972 = vunpack.c.h.b16 %v3567
    %v3973 = vunpack.c.l.b16 %v3568
    %v3974 = vunpack.c.h.b16 %v3568
    %v3975 = vpack.c.b16 %v3723, %v3719
    %v3976 = vpack.c.b16 %v3724, %v3720
    %v3977 = vpack.c.b16 %v3725, %v3721
    %v3978 = vpack.c.b16 %v3726, %v3722
    %v3979 = vpack.c.b16 %v3731, %v3727
    %v3980 = vpack.c.b16 %v3732, %v3728
    %v3981 = vpack.c.b16 %v3733, %v3729
    %v3982 = vpack.c.b16 %v3734, %v3730
    %v3983 = vpack.c.b16 %v3739, %v3735
    %v3984 = vpack.c.b16 %v3740, %v3736
    %v3985 = vpack.c.b16 %v3741, %v3737
    %v3986 = vpack.c.b16 %v3742, %v3738
    %v3987 = vpack.c.b16 %v3747, %v3743
    %v3988 = vpack.c.b16 %v3748, %v3744
    %v3989 = vpack.c.b16 %v3749, %v3745
    %v3990 = vpack.c.b16 %v3750, %v3746
    %v3991 = vpack.c.b16 %v3755, %v3751
    %v3992 = vpack.c.b16 %v3756, %v3752
    %v3993 = vpack.c.b16 %v3757, %v3753
    %v3994 = vpack.c.b16 %v3758, %v3754
    %v3995 = vpack.c.b16 %v3763, %v3759
    %v3996 = vpack.c.b16 %v3764, %v3760
    %v3997 = vpack.c.b16 %v3765, %v3761
    %v3998 = vpack.c.b16 %v3766, %v3762
    %v3999 = vpack.c.b16 %v3771, %v3767
    %v4000 = vpack.c.b16 %v3772, %v3768
    %v4001 = vpack.c.b16 %v3773, %v3769
    %v4002 = vpack.c.b16 %v3774, %v3770
    %v4003 = vpack.c.b16 %v3779, %v3775
    %v4004 = vpack.c.b16 %v3780, %v3776
    %v4005 = vpack.c.b16 %v3781, %v3777
    %v4006 = vpack.c.b16 %v3782, %v3778
    %v4007 = vpack.c.b16 %v3787, %v3783
    %v4008 = vpack.c.b16 %v3788, %v3784
    %v4009 = vpack.c.b16 %v3789, %v3785
    %v4010 = vpack.c.b16 %v3790, %v3786
    %v4011 = vpack.c.b16 %v3795, %v3791
    %v4012 = vpack.c.b16 %v3796, %v3792
    %v4013 = vpack.c.b16 %v3797, %v3793
    %v4014 = vpack.c.b16 %v3798, %v3794
    %v4015 = vpack.c.b16 %v3803, %v3799
    %v4016 = vpack.c.b16 %v3804, %v3800
    %v4017 = vpack.c.b16 %v3805, %v3801
    %v4018 = vpack.c.b16 %v3806, %v3802
    %v4019 = vpack.c.b16 %v3811, %v3807
    %v4020 = vpack.c.b16 %v3812, %v3808
    %v4021 = vpack.c.b16 %v3813, %v3809
    %v4022 = vpack.c.b16 %v3814, %v3810
    %v4023 = vpack.c.b16 %v3819, %v3815
    %v4024 = vpack.c.b16 %v3820, %v3816
    %v4025 = vpack.c.b16 %v3821, %v3817
    %v4026 = vpack.c.b16 %v3822, %v3818
    %v4027 = vpack.c.b16 %v3827, %v3823
    %v4028 = vpack.c.b16 %v3828, %v3824
    %v4029 = vpack.c.b16 %v3829, %v3825
    %v4030 = vpack.c.b16 %v3830, %v3826
    %v4031 = vpack.c.b16 %v3835, %v3831
    %v4032 = vpack.c.b16 %v3836, %v3832
    %v4033 = vpack.c.b16 %v3837, %v3833
    %v4034 = vpack.c.b16 %v3838, %v3834
    %v4035 = vpack.c.b16 %v3843, %v3839
    %v4036 = vpack.c.b16 %v3844, %v3840
    %v4037 = vpack.c.b16 %v3845, %v3841
    %v4038 = vpack.c.b16 %v3846, %v3842
    %v4039 = vpack.c.b16 %v3851, %v3847
    %v4040 = vpack.c.b16 %v3852, %v3848
    %v4041 = vpack.c.b16 %v3853, %v3849
    %v4042 = vpack.c.b16 %v3854, %v3850
    %v4043 = vpack.c.b16 %v3859, %v3855
    %v4044 = vpack.c.b16 %v3860, %v3856
    %v4045 = vpack.c.b16 %v3861, %v3857
    %v4046 = vpack.c.b16 %v3862, %v3858
    %v4047 = vpack.c.b16 %v3867, %v3863
    %v4048 = vpack.c.b16 %v3868, %v3864
    %v4049 = vpack.c.b16 %v3869, %v3865
    %v4050 = vpack.c.b16 %v3870, %v3866
    %v4051 = vpack.c.b16 %v3875, %v3871
    %v4052 = vpack.c.b16 %v3876, %v3872
    %v4053 = vpack.c.b16 %v3877, %v3873
    %v4054 = vpack.c.b16 %v3878, %v3874
    %v4055 = vpack.c.b16 %v3883, %v3879
    %v4056 = vpack.c.b16 %v3884, %v3880
    %v4057 = vpack.c.b16 %v3885, %v3881
    %v4058 = vpack.c.b16 %v3886, %v3882
    %v4059 = vpack.c.b16 %v3891, %v3887
    %v4060 = vpack.c.b16 %v3892, %v3888
    %v4061 = vpack.c.b16 %v3893, %v3889
    %v4062 = vpack.c.b16 %v3894, %v3890
    %v4063 = vpack.c.b16 %v3899, %v3895
    %v4064 = vpack.c.b16 %v3900, %v3896
    %v4065 = vpack.c.b16 %v3901, %v3897
    %v4066 = vpack.c.b16 %v3902, %v3898
    %v4067 = vpack.c.b16 %v3907, %v3903
    %v4068 = vpack.c.b16 %v3908, %v3904
    %v4069 = vpack.c.b16 %v3909, %v3905
    %v4070 = vpack.c.b16 %v3910, %v3906
    %v4071 = vpack.c.b16 %v3915, %v3911
    %v4072 = vpack.c.b16 %v3916, %v3912
    %v4073 = vpack.c.b16 %v3917, %v3913
    %v4074 = vpack.c.b16 %v3918, %v3914
    %v4075 = vpack.c.b16 %v3923, %v3919
    %v4076 = vpack.c.b16 %v3924, %v3920
    %v4077 = vpack.c.b16 %v3925, %v3921
    %v4078 = vpack.c.b16 %v3926, %v3922
    %v4079 = vpack.c.b16 %v3931, %v3927
    %v4080 = vpack.c.b16 %v3932, %v3928
    %v4081 = vpack.c.b16 %v3933, %v3929
    %v4082 = vpack.c.b16 %v3934, %v3930
    %v4083 = vpack.c.b16 %v3939, %v3935
    %v4084 = vpack.c.b16 %v3940, %v3936
    %v4085 = vpack.c.b16 %v3941, %v3937
    %v4086 = vpack.c.b16 %v3942, %v3938
    %v4087 = vpack.c.b16 %v3947, %v3943
    %v4088 = vpack.c.b16 %v3948, %v3944
    %v4089 = vpack.c.b16 %v3949, %v3945
    %v4090 = vpack.c.b16 %v3950, %v3946
    %v4091 = vpack.c.b16 %v3955, %v3951
    %v4092 = vpack.c.b16 %v3956, %v3952
    %v4093 = vpack.c.b16 %v3957, %v3953
    %v4094 = vpack.c.b16 %v3958, %v3954
    %v4095 = vpack.c.b16 %v3963, %v3959
    %v4096 = vpack.c.b16 %v3964, %v3960
    %v4097 = vpack.c.b16 %v3965, %v3961
    %v4098 = vpack.c.b16 %v3966, %v3962
    %v4099 = vpack.c.b16 %v3971, %v3967
    %v4100 = vpack.c.b16 %v3972, %v3968
    %v4101 = vpack.c.b16 %v3973, %v3969
    %v4102 = vpack.c.b16 %v3974, %v3970
    %4231 = vmatprep.subr.bf16.mxu0 %v4004
    %4232 = vmatpush1.bf16.msra.mxu0 %v4003
    %4233 = vmatprep.subr.bf16.mxu0 %v4000
    %4234 = vmatpush1.bf16.msra.mxu0 %v3999
    %4235 = vmatprep.subr.bf16.mxu0 %v3996
    %4236 = vmatpush1.bf16.msra.mxu0 %v3995
    %4237 = vmatprep.subr.bf16.mxu0 %v3992
    %4238 = vmatpush1.bf16.msra.mxu0 %v3991
    %4239 = vmatprep.subr.bf16.mxu0 %v3988
    %4240 = vmatpush1.bf16.msra.mxu0 %v3987
    %4241 = vmatprep.subr.bf16.mxu0 %v3984
    %4242 = vmatpush1.bf16.msra.mxu0 %v3983
    %4243 = vmatprep.subr.bf16.mxu0 %v3980
    %4244 = vmatpush1.bf16.msra.mxu0 %v3979
    %4245 = vmatprep.subr.bf16.mxu0 %v3976
    %4246 = vmatpush1.bf16.msra.mxu0 %v3975
    %4247 = vmatprep.subr.bf16.mxu0 %v4036
    %4248 = vmatpush2.bf16.msra.mxu0 %v4035
    %4249 = vmatprep.subr.bf16.mxu0 %v4032
    %4250 = vmatpush2.bf16.msra.mxu0 %v4031
    %4251 = vmatprep.subr.bf16.mxu0 %v4028
    %4252 = vmatpush2.bf16.msra.mxu0 %v4027
    %4253 = vmatprep.subr.bf16.mxu0 %v4024
    %4254 = vmatpush2.bf16.msra.mxu0 %v4023
    %4255 = vmatprep.subr.bf16.mxu0 %v4020
    %4256 = vmatpush2.bf16.msra.mxu0 %v4019
    %4257 = vmatprep.subr.bf16.mxu0 %v4016
    %4258 = vmatpush2.bf16.msra.mxu0 %v4015
    %4259 = vmatprep.subr.bf16.mxu0 %v4012
    %4260 = vmatpush2.bf16.msra.mxu0 %v4011
    %4261 = vmatprep.subr.bf16.mxu0 %v4008
    %4262 = vmatpush2.bf16.msra.mxu0 %v4007
    %4263 = vmatprep.mubr.bf16.mxu0 %v3438
    %4264 = vmatmul.mubr.bf16.gmra.mxu0 %v3437
    %v4265 = vpop.f32.mrf.mxu0
    %v4266 = vadd.f32 %v3574, %v4265
    %v4267 = vpop.f32.mrf.mxu0
    %v4268 = vadd.f32 %v3578, %v4267
    %v4269 = vpop.f32.mrf.mxu0
    %v4270 = vpop.f32.mrf.mxu0
    %4271 = vdwg.mxu0
    %4272 = vmatprep.subr.bf16.mxu0 %v4068
    %4273 = vmatpush1.bf16.msra.mxu0 %v4067
    %4274 = vmatprep.subr.bf16.mxu0 %v4064
    %4275 = vmatpush1.bf16.msra.mxu0 %v4063
    %4276 = vmatprep.subr.bf16.mxu0 %v4060
    %4277 = vmatpush1.bf16.msra.mxu0 %v4059
    %4278 = vmatprep.subr.bf16.mxu0 %v4056
    %4279 = vmatpush1.bf16.msra.mxu0 %v4055
    %4280 = vmatprep.subr.bf16.mxu0 %v4052
    %4281 = vmatpush1.bf16.msra.mxu0 %v4051
    %4282 = vmatprep.subr.bf16.mxu0 %v4048
    %4283 = vmatpush1.bf16.msra.mxu0 %v4047
    %4284 = vmatprep.subr.bf16.mxu0 %v4044
    %4285 = vmatpush1.bf16.msra.mxu0 %v4043
    %4286 = vmatprep.subr.bf16.mxu0 %v4040
    %4287 = vmatpush1.bf16.msra.mxu0 %v4039
    %4288 = vmatprep.subr.bf16.mxu0 %v4100
    %4289 = vmatpush2.bf16.msra.mxu0 %v4099
    %4290 = vmatprep.subr.bf16.mxu0 %v4096
    %4291 = vmatpush2.bf16.msra.mxu0 %v4095
    %4292 = vmatprep.subr.bf16.mxu0 %v4092
    %4293 = vmatpush2.bf16.msra.mxu0 %v4091
    %4294 = vmatprep.subr.bf16.mxu0 %v4088
    %4295 = vmatpush2.bf16.msra.mxu0 %v4087
    %4296 = vmatprep.subr.bf16.mxu0 %v4084
    %4297 = vmatpush2.bf16.msra.mxu0 %v4083
    %4298 = vmatprep.subr.bf16.mxu0 %v4080
    %4299 = vmatpush2.bf16.msra.mxu0 %v4079
    %4300 = vmatprep.subr.bf16.mxu0 %v4076
    %4301 = vmatpush2.bf16.msra.mxu0 %v4075
    %4302 = vmatprep.subr.bf16.mxu0 %v4072
    %4303 = vmatpush2.bf16.msra.mxu0 %v4071
    %4304 = vmatprep.mubr.bf16.mxu0 %v3440
    %4305 = vmatmul.mubr.bf16.gmra.mxu0 %v3439
    %v4306 = vpop.f32.mrf.mxu0
    %v4307 = vadd.f32 %v4266, %v4306
    %v4308 = vpop.f32.mrf.mxu0
    %v4309 = vadd.f32 %v4268, %v4308
    %v4310 = vpop.f32.mrf.mxu0
    %v4311 = vpop.f32.mrf.mxu0
    %4312 = vdwg.mxu0
    %4313 = vmatprep.subr.bf16.mxu0 %v4006
    %4314 = vmatpush1.bf16.msra.mxu0 %v4005
    %4315 = vmatprep.subr.bf16.mxu0 %v4002
    %4316 = vmatpush1.bf16.msra.mxu0 %v4001
    %4317 = vmatprep.subr.bf16.mxu0 %v3998
    %4318 = vmatpush1.bf16.msra.mxu0 %v3997
    %4319 = vmatprep.subr.bf16.mxu0 %v3994
    %4320 = vmatpush1.bf16.msra.mxu0 %v3993
    %4321 = vmatprep.subr.bf16.mxu0 %v3990
    %4322 = vmatpush1.bf16.msra.mxu0 %v3989
    %4323 = vmatprep.subr.bf16.mxu0 %v3986
    %4324 = vmatpush1.bf16.msra.mxu0 %v3985
    %4325 = vmatprep.subr.bf16.mxu0 %v3982
    %4326 = vmatpush1.bf16.msra.mxu0 %v3981
    %4327 = vmatprep.subr.bf16.mxu0 %v3978
    %4328 = vmatpush1.bf16.msra.mxu0 %v3977
    %4329 = vmatprep.subr.bf16.mxu0 %v4038
    %4330 = vmatpush2.bf16.msra.mxu0 %v4037
    %4331 = vmatprep.subr.bf16.mxu0 %v4034
    %4332 = vmatpush2.bf16.msra.mxu0 %v4033
    %4333 = vmatprep.subr.bf16.mxu0 %v4030
    %4334 = vmatpush2.bf16.msra.mxu0 %v4029
    %4335 = vmatprep.subr.bf16.mxu0 %v4026
    %4336 = vmatpush2.bf16.msra.mxu0 %v4025
    %4337 = vmatprep.subr.bf16.mxu0 %v4022
    %4338 = vmatpush2.bf16.msra.mxu0 %v4021
    %4339 = vmatprep.subr.bf16.mxu0 %v4018
    %4340 = vmatpush2.bf16.msra.mxu0 %v4017
    %4341 = vmatprep.subr.bf16.mxu0 %v4014
    %4342 = vmatpush2.bf16.msra.mxu0 %v4013
    %4343 = vmatprep.subr.bf16.mxu0 %v4010
    %4344 = vmatpush2.bf16.msra.mxu0 %v4009
    %4345 = vmatprep.mubr.bf16.mxu0 %v3438
    %4346 = vmatmul.mubr.bf16.gmra.mxu0 %v3437
    %v4347 = vpop.f32.mrf.mxu0
    %v4348 = vadd.f32 %v3582, %v4347
    %v4349 = vpop.f32.mrf.mxu0
    %v4350 = vadd.f32 %v3586, %v4349
    %v4351 = vpop.f32.mrf.mxu0
    %v4352 = vpop.f32.mrf.mxu0
    %4353 = vdwg.mxu0
    %4354 = vmatprep.subr.bf16.mxu0 %v4070
    %4355 = vmatpush1.bf16.msra.mxu0 %v4069
    %4356 = vmatprep.subr.bf16.mxu0 %v4066
    %4357 = vmatpush1.bf16.msra.mxu0 %v4065
    %4358 = vmatprep.subr.bf16.mxu0 %v4062
    %4359 = vmatpush1.bf16.msra.mxu0 %v4061
    %4360 = vmatprep.subr.bf16.mxu0 %v4058
    %4361 = vmatpush1.bf16.msra.mxu0 %v4057
    %4362 = vmatprep.subr.bf16.mxu0 %v4054
    %4363 = vmatpush1.bf16.msra.mxu0 %v4053
    %4364 = vmatprep.subr.bf16.mxu0 %v4050
    %4365 = vmatpush1.bf16.msra.mxu0 %v4049
    %4366 = vmatprep.subr.bf16.mxu0 %v4046
    %4367 = vmatpush1.bf16.msra.mxu0 %v4045
    %4368 = vmatprep.subr.bf16.mxu0 %v4042
    %4369 = vmatpush1.bf16.msra.mxu0 %v4041
    %4370 = vmatprep.subr.bf16.mxu0 %v4102
    %4371 = vmatpush2.bf16.msra.mxu0 %v4101
    %4372 = vmatprep.subr.bf16.mxu0 %v4098
    %4373 = vmatpush2.bf16.msra.mxu0 %v4097
    %4374 = vmatprep.subr.bf16.mxu0 %v4094
    %4375 = vmatpush2.bf16.msra.mxu0 %v4093
    %4376 = vmatprep.subr.bf16.mxu0 %v4090
    %4377 = vmatpush2.bf16.msra.mxu0 %v4089
    %4378 = vmatprep.subr.bf16.mxu0 %v4086
    %4379 = vmatpush2.bf16.msra.mxu0 %v4085
    %4380 = vmatprep.subr.bf16.mxu0 %v4082
    %4381 = vmatpush2.bf16.msra.mxu0 %v4081
    %4382 = vmatprep.subr.bf16.mxu0 %v4078
    %4383 = vmatpush2.bf16.msra.mxu0 %v4077
    %4384 = vmatprep.subr.bf16.mxu0 %v4074
    %4385 = vmatpush2.bf16.msra.mxu0 %v4073
    %4386 = vmatprep.mubr.bf16.mxu0 %v3440
    %4387 = vmatmul.mubr.bf16.gmra.mxu0 %v3439
    %v4388 = vpop.f32.mrf.mxu0
    %v4389 = vadd.f32 %v4348, %v4388
    %v4390 = vpop.f32.mrf.mxu0
    %v4391 = vadd.f32 %v4350, %v4390
    %v4392 = vpop.f32.mrf.mxu0
    %v4393 = vpop.f32.mrf.mxu0
    %4394 = vdwg.mxu0
    %v4395 = vadd.f32 %v2369, %v4307
    %v4396 = vadd.f32 %v2370, %v4309
    %v4397 = vadd.f32 %v2371, %v4389
    %v4398 = vadd.f32 %v2372, %v4391
    %v4399 = vld [vmem:[%s18] sm:$0xff]
    %v4400 = vld [vmem:[%s18 + $0x8] sm:$0xff]
    %v4401 = vld [vmem:[%s18 + $0x10] sm:$0xff]
    %v4402 = vld [vmem:[%s18 + $0x18] sm:$0xff]
    %v4403 = vld [vmem:[%s18 + $0x20] sm:$0xff]
    %v4404 = vld [vmem:[%s18 + $0x28] sm:$0xff]
    %v4405 = vld [vmem:[%s18 + $0x30] sm:$0xff]
    %v4406 = vld [vmem:[%s18 + $0x38] sm:$0xff]
    %v4407 = vld [vmem:[%s18 + $0x40] sm:$0xff]
    %v4408 = vld [vmem:[%s18 + $0x48] sm:$0xff]
    %v4409 = vld [vmem:[%s18 + $0x50] sm:$0xff]
    %v4410 = vld [vmem:[%s18 + $0x58] sm:$0xff]
    %v4411 = vld [vmem:[%s18 + $0x60] sm:$0xff]
    %v4412 = vld [vmem:[%s18 + $0x68] sm:$0xff]
    %v4413 = vld [vmem:[%s18 + $0x70] sm:$0xff]
    %v4414 = vld [vmem:[%s18 + $0x78] sm:$0xff]
    %v4415 = vld [vmem:[%s18 + $0x80] sm:$0xff]
    %v4416 = vld [vmem:[%s18 + $0x88] sm:$0xff]
    %v4417 = vld [vmem:[%s18 + $0x90] sm:$0xff]
    %v4418 = vld [vmem:[%s18 + $0x98] sm:$0xff]
    %v4419 = vld [vmem:[%s18 + $0xa0] sm:$0xff]
    %v4420 = vld [vmem:[%s18 + $0xa8] sm:$0xff]
    %v4421 = vld [vmem:[%s18 + $0xb0] sm:$0xff]
    %v4422 = vld [vmem:[%s18 + $0xb8] sm:$0xff]
    %v4423 = vld [vmem:[%s18 + $0xc0] sm:$0xff]
    %v4424 = vld [vmem:[%s18 + $0xc8] sm:$0xff]
    %v4425 = vld [vmem:[%s18 + $0xd0] sm:$0xff]
    %v4426 = vld [vmem:[%s18 + $0xd8] sm:$0xff]
    %v4427 = vld [vmem:[%s18 + $0xe0] sm:$0xff]
    %v4428 = vld [vmem:[%s18 + $0xe8] sm:$0xff]
    %v4429 = vld [vmem:[%s18 + $0xf0] sm:$0xff]
    %v4430 = vld [vmem:[%s18 + $0xf8] sm:$0xff]
    %v4431 = vld [vmem:[%s18 + $0x100] sm:$0xff]
    %v4432 = vld [vmem:[%s18 + $0x108] sm:$0xff]
    %v4433 = vld [vmem:[%s18 + $0x110] sm:$0xff]
    %v4434 = vld [vmem:[%s18 + $0x118] sm:$0xff]
    %v4435 = vld [vmem:[%s18 + $0x120] sm:$0xff]
    %v4436 = vld [vmem:[%s18 + $0x128] sm:$0xff]
    %v4437 = vld [vmem:[%s18 + $0x130] sm:$0xff]
    %v4438 = vld [vmem:[%s18 + $0x138] sm:$0xff]
    %v4439 = vld [vmem:[%s18 + $0x140] sm:$0xff]
    %v4440 = vld [vmem:[%s18 + $0x148] sm:$0xff]
    %v4441 = vld [vmem:[%s18 + $0x150] sm:$0xff]
    %v4442 = vld [vmem:[%s18 + $0x158] sm:$0xff]
    %v4443 = vld [vmem:[%s18 + $0x160] sm:$0xff]
    %v4444 = vld [vmem:[%s18 + $0x168] sm:$0xff]
    %v4445 = vld [vmem:[%s18 + $0x170] sm:$0xff]
    %v4446 = vld [vmem:[%s18 + $0x178] sm:$0xff]
    %v4447 = vld [vmem:[%s18 + $0x180] sm:$0xff]
    %v4448 = vld [vmem:[%s18 + $0x188] sm:$0xff]
    %v4449 = vld [vmem:[%s18 + $0x190] sm:$0xff]
    %v4450 = vld [vmem:[%s18 + $0x198] sm:$0xff]
    %v4451 = vld [vmem:[%s18 + $0x1a0] sm:$0xff]
    %v4452 = vld [vmem:[%s18 + $0x1a8] sm:$0xff]
    %v4453 = vld [vmem:[%s18 + $0x1b0] sm:$0xff]
    %v4454 = vld [vmem:[%s18 + $0x1b8] sm:$0xff]
    %v4455 = vld [vmem:[%s18 + $0x1c0] sm:$0xff]
    %v4456 = vld [vmem:[%s18 + $0x1c8] sm:$0xff]
    %v4457 = vld [vmem:[%s18 + $0x1d0] sm:$0xff]
    %v4458 = vld [vmem:[%s18 + $0x1d8] sm:$0xff]
    %v4459 = vld [vmem:[%s18 + $0x1e0] sm:$0xff]
    %v4460 = vld [vmem:[%s18 + $0x1e8] sm:$0xff]
    %v4461 = vld [vmem:[%s18 + $0x1f0] sm:$0xff]
    %v4462 = vld [vmem:[%s18 + $0x1f8] sm:$0xff]
    %v4463 = vld [vmem:[%s19] sm:$0x1]
    %v4465 = vlaneseq
    %v4466 = vshrl.u32 %v4465, 7
    %v4467 = vsub.s32 0, %v4466
    %v4468 = vrot.slane %v4463, %v4467
    %4470 = vmatprep.subr.mxu0 0.0
    %4471 = vmatpush1.msra.mxu0 %v4414
    %4472 = vmatprep.subr.mxu0 0.0
    %4473 = vmatpush1.msra.mxu0 %v4413
    %4474 = vmatprep.subr.mxu0 0.0
    %4475 = vmatpush1.msra.mxu0 %v4412
    %4476 = vmatprep.subr.mxu0 0.0
    %4477 = vmatpush1.msra.mxu0 %v4411
    %4478 = vmatprep.subr.mxu0 0.0
    %4479 = vmatpush1.msra.mxu0 %v4410
    %4480 = vmatprep.subr.mxu0 0.0
    %4481 = vmatpush1.msra.mxu0 %v4409
    %4482 = vmatprep.subr.mxu0 0.0
    %4483 = vmatpush1.msra.mxu0 %v4408
    %4484 = vmatprep.subr.mxu0 0.0
    %4485 = vmatpush1.msra.mxu0 %v4407
    %4486 = vmatprep.subr.mxu0 0.0
    %4487 = vmatpush1.msra.mxu0 %v4406
    %4488 = vmatprep.subr.mxu0 0.0
    %4489 = vmatpush1.msra.mxu0 %v4405
    %4490 = vmatprep.subr.mxu0 0.0
    %4491 = vmatpush1.msra.mxu0 %v4404
    %4492 = vmatprep.subr.mxu0 0.0
    %4493 = vmatpush1.msra.mxu0 %v4403
    %4494 = vmatprep.subr.mxu0 0.0
    %4495 = vmatpush1.msra.mxu0 %v4402
    %4496 = vmatprep.subr.mxu0 0.0
    %4497 = vmatpush1.msra.mxu0 %v4401
    %4498 = vmatprep.subr.mxu0 0.0
    %4499 = vmatpush1.msra.mxu0 %v4400
    %4500 = vmatprep.subr.mxu0 0.0
    %4501 = vmatpush1.msra.mxu0 %v4399
    %4502 = vmatprep.subr.mxu0 0.0
    %4503 = vmatpush2.msra.mxu0 %v4430
    %4504 = vmatprep.subr.mxu0 0.0
    %4505 = vmatpush2.msra.mxu0 %v4429
    %4506 = vmatprep.subr.mxu0 0.0
    %4507 = vmatpush2.msra.mxu0 %v4428
    %4508 = vmatprep.subr.mxu0 0.0
    %4509 = vmatpush2.msra.mxu0 %v4427
    %4510 = vmatprep.subr.mxu0 0.0
    %4511 = vmatpush2.msra.mxu0 %v4426
    %4512 = vmatprep.subr.mxu0 0.0
    %4513 = vmatpush2.msra.mxu0 %v4425
    %4514 = vmatprep.subr.mxu0 0.0
    %4515 = vmatpush2.msra.mxu0 %v4424
    %4516 = vmatprep.subr.mxu0 0.0
    %4517 = vmatpush2.msra.mxu0 %v4423
    %4518 = vmatprep.subr.mxu0 0.0
    %4519 = vmatpush2.msra.mxu0 %v4422
    %4520 = vmatprep.subr.mxu0 0.0
    %4521 = vmatpush2.msra.mxu0 %v4421
    %4522 = vmatprep.subr.mxu0 0.0
    %4523 = vmatpush2.msra.mxu0 %v4420
    %4524 = vmatprep.subr.mxu0 0.0
    %4525 = vmatpush2.msra.mxu0 %v4419
    %4526 = vmatprep.subr.mxu0 0.0
    %4527 = vmatpush2.msra.mxu0 %v4418
    %4528 = vmatprep.subr.mxu0 0.0
    %4529 = vmatpush2.msra.mxu0 %v4417
    %4530 = vmatprep.subr.mxu0 0.0
    %4531 = vmatpush2.msra.mxu0 %v4416
    %4532 = vmatprep.subr.mxu0 0.0
    %4533 = vmatpush2.msra.mxu0 %v4415
    %4534 = vmatprep.mubr.f32.mxu0 %v4396
    %4535 = vmatmul.mubr.f32.gmra.mxu0 %v4395
    %v4536 = vpop.f32.mrf.mxu0
    %v4537 = vadd.f32 %v4468, %v4536
    %v4538 = vpop.f32.mrf.mxu0
    %4539 = vdwg.mxu0
    %4540 = vmatprep.subr.mxu0 0.0
    %4541 = vmatpush1.msra.mxu0 %v4446
    %4542 = vmatprep.subr.mxu0 0.0
    %4543 = vmatpush1.msra.mxu0 %v4445
    %4544 = vmatprep.subr.mxu0 0.0
    %4545 = vmatpush1.msra.mxu0 %v4444
    %4546 = vmatprep.subr.mxu0 0.0
    %4547 = vmatpush1.msra.mxu0 %v4443
    %4548 = vmatprep.subr.mxu0 0.0
    %4549 = vmatpush1.msra.mxu0 %v4442
    %4550 = vmatprep.subr.mxu0 0.0
    %4551 = vmatpush1.msra.mxu0 %v4441
    %4552 = vmatprep.subr.mxu0 0.0
    %4553 = vmatpush1.msra.mxu0 %v4440
    %4554 = vmatprep.subr.mxu0 0.0
    %4555 = vmatpush1.msra.mxu0 %v4439
    %4556 = vmatprep.subr.mxu0 0.0
    %4557 = vmatpush1.msra.mxu0 %v4438
    %4558 = vmatprep.subr.mxu0 0.0
    %4559 = vmatpush1.msra.mxu0 %v4437
    %4560 = vmatprep.subr.mxu0 0.0
    %4561 = vmatpush1.msra.mxu0 %v4436
    %4562 = vmatprep.subr.mxu0 0.0
    %4563 = vmatpush1.msra.mxu0 %v4435
    %4564 = vmatprep.subr.mxu0 0.0
    %4565 = vmatpush1.msra.mxu0 %v4434
    %4566 = vmatprep.subr.mxu0 0.0
    %4567 = vmatpush1.msra.mxu0 %v4433
    %4568 = vmatprep.subr.mxu0 0.0
    %4569 = vmatpush1.msra.mxu0 %v4432
    %4570 = vmatprep.subr.mxu0 0.0
    %4571 = vmatpush1.msra.mxu0 %v4431
    %4572 = vmatprep.subr.mxu0 0.0
    %4573 = vmatpush2.msra.mxu0 %v4462
    %4574 = vmatprep.subr.mxu0 0.0
    %4575 = vmatpush2.msra.mxu0 %v4461
    %4576 = vmatprep.subr.mxu0 0.0
    %4577 = vmatpush2.msra.mxu0 %v4460
    %4578 = vmatprep.subr.mxu0 0.0
    %4579 = vmatpush2.msra.mxu0 %v4459
    %4580 = vmatprep.subr.mxu0 0.0
    %4581 = vmatpush2.msra.mxu0 %v4458
    %4582 = vmatprep.subr.mxu0 0.0
    %4583 = vmatpush2.msra.mxu0 %v4457
    %4584 = vmatprep.subr.mxu0 0.0
    %4585 = vmatpush2.msra.mxu0 %v4456
    %4586 = vmatprep.subr.mxu0 0.0
    %4587 = vmatpush2.msra.mxu0 %v4455
    %4588 = vmatprep.subr.mxu0 0.0
    %4589 = vmatpush2.msra.mxu0 %v4454
    %4590 = vmatprep.subr.mxu0 0.0
    %4591 = vmatpush2.msra.mxu0 %v4453
    %4592 = vmatprep.subr.mxu0 0.0
    %4593 = vmatpush2.msra.mxu0 %v4452
    %4594 = vmatprep.subr.mxu0 0.0
    %4595 = vmatpush2.msra.mxu0 %v4451
    %4596 = vmatprep.subr.mxu0 0.0
    %4597 = vmatpush2.msra.mxu0 %v4450
    %4598 = vmatprep.subr.mxu0 0.0
    %4599 = vmatpush2.msra.mxu0 %v4449
    %4600 = vmatprep.subr.mxu0 0.0
    %4601 = vmatpush2.msra.mxu0 %v4448
    %4602 = vmatprep.subr.mxu0 0.0
    %4603 = vmatpush2.msra.mxu0 %v4447
    %4604 = vmatprep.mubr.f32.mxu0 %v4398
    %4605 = vmatmul.mubr.f32.gmra.mxu0 %v4397
    %v4606 = vpop.f32.mrf.mxu0
    %v4607 = vadd.f32 %v4537, %v4606
    %v4608 = vpop.f32.mrf.mxu0
    %4609 = vdwg.mxu0
    %vm4610 = vcmask 23552
    %4611 = vst.msk [vmem:[%s20] sm:$0xff] %vm4610, %v4607
    // Predicated region
    $region94: #{conditional_ddpm_forward.1} parent=1 // pred_check
      _
    $region95: #{conditional_ddpm_forward.1} parent=1 // pred_check_branch
      %4613 = sbr.rel (0) target = $region97
    $region96: #{conditional_ddpm_forward.1} parent=1 // pred_region
      _
    $region97: #{conditional_ddpm_forward.1} parent=1 // pred_fallthru
      _
    // Predicated region
    $region98: #{conditional_ddpm_forward.1} parent=1 // pred_check
      _
    $region99: #{conditional_ddpm_forward.1} parent=1 // pred_check_branch
      %4615 = sbr.rel (0) target = $region101
    $region100: #{conditional_ddpm_forward.1} parent=1 // pred_region
      _
    $region101: #{conditional_ddpm_forward.1} parent=1 // pred_fallthru
      _
    %4616 = vsyncpa [#allocation3], 1
    %4617 = vsyncpa [#allocation5], 1

</llo_original>
